<compile_context>
chip_gen: v6e
topology: v6e:2x2x1
jax: 0.10.0
libtpu: 0.0.40
codegen_flags: <defaults>
</compile_context>

<pallas_src>
import functools

import jax
import jax.numpy as jnp
from jax import lax
from jax.experimental import pallas as pl
from jax.experimental.pallas import tpu as pltpu


def _round_up(x, m):
    return ((x + m - 1) // m) * m


def qnetwork_kernel(obs_ref,          # (tb, obs_size)   f32 (native layout)
                    w1_ref, b1_ref,   # (64, obs_size), (64, 1)
                    wc_ref, bc_ref,   # (64, 64),       (64, 1)   ad1 || va1
                    w2_ref, b2_ref,   # (A+1, 64),      (A+1, 1)  block-diag ad2 || va2
                    out_ref,          # (tb, A)
                    *, action_size, sub_tb):
    # Weights / bias columns loaded once per grid step (they are VMEM-resident
    # across the whole grid thanks to constant index_maps).
    w1 = w1_ref[...]
    wc = wc_ref[...]
    w2 = w2_ref[...]
    b1 = b1_ref[...]
    bc = bc_ref[...]
    b2 = b2_ref[...]
    # NOTE: bias columns stay (out, 1); the lane-broadcast fuses into the VPU
    # add.  Pre-broadcasting to (out, sub_tb) would pin ~35 f32 vregs across the
    # inner loop and cause spills, so we deliberately keep the column form.

    # f32 weights -> exact multi-pass MXU matmul; bf16 weights -> native MXU.
    prec = (jax.lax.Precision.HIGHEST if w1.dtype == jnp.float32
            else jax.lax.Precision.DEFAULT)

    n_sub = obs_ref.shape[0] // sub_tb
    contract_last = (((1,), (1,)), ((), ()))   # A @ B^T : contract obs_size

    def body(j, carry):
        start = j * sub_tb
        # (sub_tb, obs_size) batch sub-slice, cast to compute dtype in-kernel.
        x = obs_ref[pl.ds(start, sub_tb), :].astype(w1.dtype)

        # fc1 + relu : (64, obs) x (sub_tb, obs)^T -> (64, sub_tb), batch on lanes.
        h = lax.dot_general(w1, x, contract_last,
                            precision=prec,
                            preferred_element_type=jnp.float32) + b1
        h = jnp.maximum(h, 0.0).astype(wc.dtype)

        # fused ad1 / va1 + relu : rows [0:32] advantage hidden, [32:64] value hidden.
        g = jnp.dot(wc, h, precision=prec,
                    preferred_element_type=jnp.float32) + bc
        g = jnp.maximum(g, 0.0).astype(w2.dtype)

        # fused block-diagonal ad2 / va2 : rows [0:A] advantage, row [A] value.
        av = jnp.dot(w2, g, precision=prec,
                     preferred_element_type=jnp.float32) + b2
        adv = av[:action_size, :]                        # (A, sub_tb)
        val = av[action_size:action_size + 1, :]         # (1, sub_tb)

        # dueling combine (matches torch.max(dim=1)): Q = V + A - max_a A.
        q = val + adv - jnp.max(adv, axis=0, keepdims=True)   # (A, sub_tb)

        # On-chip transpose back to batch-major rows; masked vst (A < 128 lanes)
        # is on-chip cost only and removes the post-kernel HBM transpose pass.
        out_ref[pl.ds(start, sub_tb), :] = q.T.astype(out_ref.dtype)
        return carry

    lax.fori_loop(0, n_sub, body, 0, unroll=True)


def qnetwork_forward(obs, params, *, tb=2048, sub_tb=256):
    """obs: (B, obs_size) float32 (native layout).  params: from pack_params()."""
    B, obs_size = obs.shape
    action_size = params["w2"].shape[0] - 1

    # Inner sub-tile: multiple of 128 lanes; 256 fills the v6e/v7x MXU N dim.
    sub_tb = max(128, (int(sub_tb) // 128) * 128)
    # Outer tile: multiple of sub_tb, large enough to amortize grid overhead,
    # but capped so mid-size batches still produce >= 2 tiles (v7x megacore).
    tb = max(sub_tb, (int(tb) // sub_tb) * sub_tb)
    tb = min(tb, max(sub_tb, _round_up(pl.cdiv(B, 2), sub_tb)))
    grid = (pl.cdiv(B, tb),)

    def const_spec(p):
        # Whole array, same block every grid step -> stays resident in VMEM.
        return pl.BlockSpec(p.shape, lambda i: (0, 0))

    in_specs = [
        pl.BlockSpec((tb, obs_size), lambda i: (i, 0)),   # contiguous row-slab DMA
        const_spec(params["w1"]), const_spec(params["b1"]),
        const_spec(params["wc"]), const_spec(params["bc"]),
        const_spec(params["w2"]), const_spec(params["b2"]),
    ]
    out_spec = pl.BlockSpec((tb, action_size), lambda i: (i, 0))

    param_bytes = sum(int(p.size) * p.dtype.itemsize for p in params.values())
    cost = pl.CostEstimate(
        flops=2 * B * (obs_size * 64 + 64 * 64 + 64 * (action_size + 1)),
        transcendentals=0,
        bytes_accessed=int(B * obs_size * obs.dtype.itemsize
                           + B * action_size * 4 + param_bytes),
    )

    return pl.pallas_call(
        functools.partial(qnetwork_kernel,
                          action_size=action_size, sub_tb=sub_tb),
        grid=grid,
        in_specs=in_specs,
        out_specs=out_spec,
        out_shape=jax.ShapeDtypeStruct((B, action_size), jnp.float32),
        compiler_params=pltpu.CompilerParams(
            dimension_semantics=("parallel",)),   # shard batch tiles over v7x's 2 TCs
        cost_estimate=cost,
    )(obs, params["w1"], params["b1"], params["wc"], params["bc"],
      params["w2"], params["b2"])


def init_params(key, obs_size, action_size):
    """PyTorch nn.Linear-style init: W (out,in), b (out,), U(-1/sqrt(fan_in), +)."""
    def linear(k, fan_out, fan_in):
        kw, kb = jax.random.split(k)
        bound = 1.0 / jnp.sqrt(float(fan_in))
        w = jax.random.uniform(kw, (fan_out, fan_in), jnp.float32, -bound, bound)
        b = jax.random.uniform(kb, (fan_out,), jnp.float32, -bound, bound)
        return w, b

    k1, k2, k3, k4, k5 = jax.random.split(key, 5)
    w1, b1 = linear(k1, 64, obs_size)        # fc1
    wa1, ba1 = linear(k2, 32, 64)            # ad1
    wa2, ba2 = linear(k3, action_size, 32)   # ad2
    wv1, bv1 = linear(k4, 32, 64)            # va1
    wv2, bv2 = linear(k5, 1, 32)             # va2
    return dict(w1=w1, b1=b1, wa1=wa1, ba1=ba1, wa2=wa2, ba2=ba2,
                wv1=wv1, bv1=bv1, wv2=wv2, bv2=bv2)


def pack_params(raw, dtype=jnp.float32):
    """Pack PyTorch-layout params into the fused kernel layout.

    wc/bc : ad1 || va1 stacked on the output dim -> one (64, 64) matmul.
    w2/b2 : block-diagonal ad2 || va2 -> one (A+1, 64) matmul; row A is the value.
    Weights cast to `dtype` (f32 or bf16); biases kept f32 (added to f32 accum).
    """
    A = raw["wa2"].shape[0]
    wc = jnp.concatenate([raw["wa1"], raw["wv1"]], axis=0)            # (64, 64)
    bc = jnp.concatenate([raw["ba1"], raw["bv1"]], axis=0)[:, None]   # (64, 1)
    w2 = jnp.zeros((A + 1, 64), jnp.float32)
    w2 = w2.at[:A, :32].set(raw["wa2"])
    w2 = w2.at[A:, 32:].set(raw["wv2"])
    b2 = jnp.concatenate([raw["ba2"], raw["bv2"]], axis=0)[:, None]   # (A+1, 1)
    return dict(
        w1=raw["w1"].astype(dtype), b1=raw["b1"][:, None].astype(jnp.float32),
        wc=wc.astype(dtype),        bc=bc.astype(jnp.float32),
        w2=w2.astype(dtype),        b2=b2.astype(jnp.float32),
    )


def reference_forward(obs, raw):
    """Pure-JAX reference using the unfused PyTorch-layout params (f32)."""
    h = jax.nn.relu(obs @ raw["w1"].T + raw["b1"])
    a1 = jax.nn.relu(h @ raw["wa1"].T + raw["ba1"])
    adv = a1 @ raw["wa2"].T + raw["ba2"]
    v1 = jax.nn.relu(h @ raw["wv1"].T + raw["bv1"])
    val = v1 @ raw["wv2"].T + raw["bv2"]
    return val + adv - jnp.max(adv, axis=1, keepdims=True)


if __name__ == "__main__":
    key = jax.random.PRNGKey(0)
    k_obs, k_params, k_big = jax.random.split(key, 3)

    obs_size, action_size = 16, 8
    raw = init_params(k_params, obs_size, action_size)
    params_f32 = pack_params(raw, jnp.float32)

    # --- tiny batch (single padded tile, masked edge block) ---
    obs = jax.random.normal(k_obs, (2, obs_size), jnp.float32)
    ref = reference_forward(obs, raw)
    out = jax.block_until_ready(qnetwork_forward(obs, params_f32))
    assert out.shape == (2, action_size)
    assert jnp.allclose(out, ref, atol=5e-4, rtol=5e-4), "f32 mismatch (tiny batch)"

    # --- bfloat16 weights/activations (f32 accumulation), looser tolerance ---
    params_bf16 = pack_params(raw, jnp.bfloat16)
    out_bf16 = jax.block_until_ready(qnetwork_forward(obs, params_bf16))
    assert jnp.allclose(out_bf16, ref, atol=5e-2, rtol=5e-2), "bf16 mismatch"

    # --- non-multiple-of-tile batch: exercises >=2 grid tiles (v7x split),
    #     the inner sub-tile loop (n_sub=2) and the masked last block ---
    obs_big = jax.random.normal(k_big, (700, obs_size), jnp.float32)
    ref_big = reference_forward(obs_big, raw)
    out_big = jax.block_until_ready(
        qnetwork_forward(obs_big, params_f32, tb=2048, sub_tb=256))
    assert out_big.shape == (700, action_size)
    assert jnp.allclose(out_big, ref_big, atol=5e-4, rtol=5e-4), \
        "f32 mismatch (tiled batch)"

    print("KERNEL_OK")
</pallas_src>

<mosaic_0001>
module attributes {stable_mosaic.version = 11 : i64} {
  func.func @qnetwork_kernel(%arg0: i32, %arg1: memref<256x16xf32, #tpu.memory_space<vmem>>, %arg2: memref<64x16xf32, #tpu.memory_space<vmem>>, %arg3: memref<64x1xf32, #tpu.memory_space<vmem>>, %arg4: memref<64x64xf32, #tpu.memory_space<vmem>>, %arg5: memref<64x1xf32, #tpu.memory_space<vmem>>, %arg6: memref<9x64xf32, #tpu.memory_space<vmem>>, %arg7: memref<9x1xf32, #tpu.memory_space<vmem>>, %arg8: memref<256x8xf32, #tpu.memory_space<vmem>>) attributes {dimension_semantics = [#tpu.dimension_semantics<parallel>], iteration_bounds = array<i64: 1>, scalar_prefetch = 0 : i64, scratch_operands = 0 : i64, tpu.core_type = #tpu.core_type<tc>, window_params = [{transform_indices = @transform_0, window_bounds = array<i64: 256, 16>}, {pipeline_mode = #tpu.pipeline_mode<synchronous>, transform_indices = @transform_1, window_bounds = array<i64: 64, 16>}, {pipeline_mode = #tpu.pipeline_mode<synchronous>, transform_indices = @transform_2, window_bounds = array<i64: 64, 1>}, {pipeline_mode = #tpu.pipeline_mode<synchronous>, transform_indices = @transform_3, window_bounds = array<i64: 64, 64>}, {pipeline_mode = #tpu.pipeline_mode<synchronous>, transform_indices = @transform_4, window_bounds = array<i64: 64, 1>}, {pipeline_mode = #tpu.pipeline_mode<synchronous>, transform_indices = @transform_5, window_bounds = array<i64: 9, 64>}, {pipeline_mode = #tpu.pipeline_mode<synchronous>, transform_indices = @transform_6, window_bounds = array<i64: 9, 1>}, {transform_indices = @transform_7, window_bounds = array<i64: 256, 8>}]} {
    %c0 = arith.constant 0 : index
    %c0_0 = arith.constant 0 : index
    %0 = vector.load %arg2[%c0, %c0_0] : memref<64x16xf32, #tpu.memory_space<vmem>>, vector<64x16xf32>
    %c0_1 = arith.constant 0 : index
    %c0_2 = arith.constant 0 : index
    %1 = vector.load %arg4[%c0_1, %c0_2] : memref<64x64xf32, #tpu.memory_space<vmem>>, vector<64x64xf32>
    %c0_3 = arith.constant 0 : index
    %c0_4 = arith.constant 0 : index
    %2 = vector.load %arg6[%c0_3, %c0_4] : memref<9x64xf32, #tpu.memory_space<vmem>>, vector<9x64xf32>
    %c0_5 = arith.constant 0 : index
    %c0_6 = arith.constant 0 : index
    %3 = vector.load %arg3[%c0_5, %c0_6] : memref<64x1xf32, #tpu.memory_space<vmem>>, vector<64x1xf32>
    %c0_7 = arith.constant 0 : index
    %c0_8 = arith.constant 0 : index
    %4 = vector.load %arg5[%c0_7, %c0_8] : memref<64x1xf32, #tpu.memory_space<vmem>>, vector<64x1xf32>
    %c0_9 = arith.constant 0 : index
    %c0_10 = arith.constant 0 : index
    %5 = vector.load %arg7[%c0_9, %c0_10] : memref<9x1xf32, #tpu.memory_space<vmem>>, vector<9x1xf32>
    %c0_i32 = arith.constant 0 : i32
    %c256_i32 = arith.constant 256 : i32
    %6 = arith.muli %c0_i32, %c256_i32 : i32
    %7 = arith.index_cast %6 : i32 to index
    %c0_11 = arith.constant 0 : index
    %8 = vector.load %arg1[%7, %c0_11] : memref<256x16xf32, #tpu.memory_space<vmem>>, vector<256x16xf32>
    %cst = arith.constant dense<0.000000e+00> : vector<64x256xf32>
    %9 = tpu.matmul %0, %8, %cst {dimension_numbers = #tpu.dot_dimension_numbers<[1], [1], [0], [0], [0, 0, 1, 0], [], []>, precision = #tpu.contract_precision<fp32>} : vector<64x16xf32>, vector<256x16xf32>, vector<64x256xf32> -> vector<64x256xf32>
    %10 = vector.broadcast %3 : vector<64x1xf32> to vector<64x256xf32>
    %11 = arith.addf %9, %10 : vector<64x256xf32>
    %cst_12 = arith.constant 0.000000e+00 : f32
    %12 = vector.broadcast %cst_12 : f32 to vector<64x256xf32>
    %13 = arith.maximumf %11, %12 : vector<64x256xf32>
    %cst_13 = arith.constant dense<0.000000e+00> : vector<64x256xf32>
    %14 = tpu.matmul %1, %13, %cst_13 {dimension_numbers = #tpu.dot_dimension_numbers<[1], [0], [0], [1], [0, 0, 1, 1], [], []>, precision = #tpu.contract_precision<fp32>} : vector<64x64xf32>, vector<64x256xf32>, vector<64x256xf32> -> vector<64x256xf32>
    %15 = vector.broadcast %4 : vector<64x1xf32> to vector<64x256xf32>
    %16 = arith.addf %14, %15 : vector<64x256xf32>
    %cst_14 = arith.constant 0.000000e+00 : f32
    %17 = vector.broadcast %cst_14 : f32 to vector<64x256xf32>
    %18 = arith.maximumf %16, %17 : vector<64x256xf32>
    %cst_15 = arith.constant dense<0.000000e+00> : vector<9x256xf32>
    %19 = tpu.matmul %2, %18, %cst_15 {dimension_numbers = #tpu.dot_dimension_numbers<[1], [0], [0], [1], [0, 0, 1, 1], [], []>, precision = #tpu.contract_precision<fp32>} : vector<9x64xf32>, vector<64x256xf32>, vector<9x256xf32> -> vector<9x256xf32>
    %20 = vector.broadcast %5 : vector<9x1xf32> to vector<9x256xf32>
    %21 = arith.addf %19, %20 : vector<9x256xf32>
    %22 = vector.extract_strided_slice %21 {offsets = [0, 0], sizes = [8, 256], strides = [1, 1]} : vector<9x256xf32> to vector<8x256xf32>
    %23 = vector.extract_strided_slice %21 {offsets = [8, 0], sizes = [1, 256], strides = [1, 1]} : vector<9x256xf32> to vector<1x256xf32>
    %24 = vector.broadcast %23 : vector<1x256xf32> to vector<8x256xf32>
    %25 = arith.addf %24, %22 : vector<8x256xf32>
    %cst_16 = arith.constant dense<0xFF800000> : vector<256xf32>
    %26 = vector.multi_reduction <maximumf>, %22, %cst_16 [0] : vector<8x256xf32> to vector<256xf32>
    %27 = vector.shape_cast %26 : vector<256xf32> to vector<1x256xf32>
    %28 = vector.broadcast %27 : vector<1x256xf32> to vector<8x256xf32>
    %29 = arith.subf %25, %28 : vector<8x256xf32>
    %30 = tpu.transpose %29, [1, 0] : vector<8x256xf32> -> vector<256x8xf32>
    %31 = arith.index_cast %6 : i32 to index
    %c0_17 = arith.constant 0 : index
    %32 = vector.load %arg8[%31, %c0_17] : memref<256x8xf32, #tpu.memory_space<vmem>>, vector<256x8xf32>
    tpu.vector_store %arg8[%31, %c0_17], %30 {strides = array<i32>} : memref<256x8xf32, #tpu.memory_space<vmem>>, vector<256x8xf32>,
    %c1_i32 = arith.constant 1 : i32
    return
  }
  func.func @transform_0(%arg0: i32) -> (i32, i32) {
    %c0_i32 = arith.constant 0 : i32
    %c0_i32_0 = arith.constant 0 : i32
    return %arg0, %c0_i32 : i32, i32
  }
  func.func @transform_1(%arg0: i32) -> (i32, i32) {
    %c0_i32 = arith.constant 0 : i32
    %c0_i32_0 = arith.constant 0 : i32
    %c0_i32_1 = arith.constant 0 : i32
    return %c0_i32, %c0_i32_0 : i32, i32
  }
  func.func @transform_2(%arg0: i32) -> (i32, i32) {
    %c0_i32 = arith.constant 0 : i32
    %c0_i32_0 = arith.constant 0 : i32
    %c0_i32_1 = arith.constant 0 : i32
    return %c0_i32, %c0_i32_0 : i32, i32
  }
  func.func @transform_3(%arg0: i32) -> (i32, i32) {
    %c0_i32 = arith.constant 0 : i32
    %c0_i32_0 = arith.constant 0 : i32
    %c0_i32_1 = arith.constant 0 : i32
    return %c0_i32, %c0_i32_0 : i32, i32
  }
  func.func @transform_4(%arg0: i32) -> (i32, i32) {
    %c0_i32 = arith.constant 0 : i32
    %c0_i32_0 = arith.constant 0 : i32
    %c0_i32_1 = arith.constant 0 : i32
    return %c0_i32, %c0_i32_0 : i32, i32
  }
  func.func @transform_5(%arg0: i32) -> (i32, i32) {
    %c0_i32 = arith.constant 0 : i32
    %c0_i32_0 = arith.constant 0 : i32
    %c0_i32_1 = arith.constant 0 : i32
    return %c0_i32, %c0_i32_0 : i32, i32
  }
  func.func @transform_6(%arg0: i32) -> (i32, i32) {
    %c0_i32 = arith.constant 0 : i32
    %c0_i32_0 = arith.constant 0 : i32
    %c0_i32_1 = arith.constant 0 : i32
    return %c0_i32, %c0_i32_0 : i32, i32
  }
  func.func @transform_7(%arg0: i32) -> (i32, i32) {
    %c0_i32 = arith.constant 0 : i32
    %c0_i32_0 = arith.constant 0 : i32
    return %arg0, %c0_i32 : i32, i32
  }
}

</mosaic_0001>

<llo_original>
// kernel: tpu_custom_call.1
$region0: #{tpu_custom_call.1}
  #allocation0 [shape = 'u32[]', space=smem, size = 0x4, offset = 0x4, fixed_abs, tag = 'smem constant byte address 0x4 - core index']
  #allocation1 [shape = 'u32[144,128]{1,0:T(1,128)}', space=vmem, size = 0x12000, scoped, tag = 'internal scratch']
  %s0 = inlined_call_operand.vmem [shape: f32[2,16], index: 0, kind: input, shape index: {}]
  %s1 = inlined_call_operand.vmem [shape: f32[64,16], index: 1, kind: input, shape index: {}]
  %s2 = inlined_call_operand.vmem [shape: f32[64,1], index: 2, kind: input, shape index: {}]
  %s3 = inlined_call_operand.vmem [shape: f32[64,64], index: 3, kind: input, shape index: {}]
  %s4 = inlined_call_operand.vmem [shape: f32[64,1], index: 4, kind: input, shape index: {}]
  %s5 = inlined_call_operand.vmem [shape: f32[9,64], index: 5, kind: input, shape index: {}]
  %s6 = inlined_call_operand.vmem [shape: f32[9,1], index: 6, kind: input, shape index: {}]
  %s7 = inlined_call_operand.hbm [shape: f32[2,8], index: 7, kind: output, shape index: {}]
  %s8 = sld [smem:[#allocation0]]
  $region38: #{tpu_custom_call.1} parent=0
    _
  %s10 = ssub.s32 1, %s8
  %s11 = scalar_select 0, %s10, %s8
  $region1: #{tpu_custom_call.1} parent=0
    #allocation2 [shape = 'u8[131072]{0}', space=vmem, size = 0x20000, scoped, tag = 'output window, operand 0, single buffered']
    #allocation3 [shape = 's32[1]{0}', space=sflag, size = 0x4, scoped, tag = 'scoped memory for tpu_custom_call.1']
    %12 = vsyncpa [#allocation3], 0
    // Predicated region
    $region2: #{tpu_custom_call.1} parent=1 // pred_check
      _
    $region3: #{tpu_custom_call.1} parent=1 // pred_check_branch
      %14 = sbr.rel (0) target = $region5
    $region4: #{tpu_custom_call.1} parent=1 // pred_region
      _
    $region5: #{tpu_custom_call.1} parent=1 // pred_fallthru
      _
    // Predicated region
    $region6: #{tpu_custom_call.1} parent=1 // pred_check
      _
    $region7: #{tpu_custom_call.1} parent=1 // pred_check_branch
      %16 = sbr.rel (0) target = $region9
    $region8: #{tpu_custom_call.1} parent=1 // pred_region
      _
    $region9: #{tpu_custom_call.1} parent=1 // pred_fallthru
      _
    // Predicated region
    $region10: #{tpu_custom_call.1} parent=1 // pred_check
      _
    $region11: #{tpu_custom_call.1} parent=1 // pred_check_branch
      %18 = sbr.rel (0) target = $region13
    $region12: #{tpu_custom_call.1} parent=1 // pred_region
      _
    $region13: #{tpu_custom_call.1} parent=1 // pred_fallthru
      _
    // Predicated region
    $region14: #{tpu_custom_call.1} parent=1 // pred_check
      _
    $region15: #{tpu_custom_call.1} parent=1 // pred_check_branch
      %20 = sbr.rel (0) target = $region17
    $region16: #{tpu_custom_call.1} parent=1 // pred_region
      _
    $region17: #{tpu_custom_call.1} parent=1 // pred_fallthru
      _
    // Predicated region
    $region18: #{tpu_custom_call.1} parent=1 // pred_check
      _
    $region19: #{tpu_custom_call.1} parent=1 // pred_check_branch
      %22 = sbr.rel (0) target = $region21
    $region20: #{tpu_custom_call.1} parent=1 // pred_region
      _
    $region21: #{tpu_custom_call.1} parent=1 // pred_fallthru
      _
    // Predicated region
    $region22: #{tpu_custom_call.1} parent=1 // pred_check
      _
    $region23: #{tpu_custom_call.1} parent=1 // pred_check_branch
      %24 = sbr.rel (0) target = $region25
    $region24: #{tpu_custom_call.1} parent=1 // pred_region
      _
    $region25: #{tpu_custom_call.1} parent=1 // pred_fallthru
      _
    // Predicated region
    $region26: #{tpu_custom_call.1} parent=1 // pred_check
      _
    $region27: #{tpu_custom_call.1} parent=1 // pred_check_branch
      %26 = sbr.rel (0) target = $region29
    $region28: #{tpu_custom_call.1} parent=1 // pred_region
      _
    $region29: #{tpu_custom_call.1} parent=1 // pred_fallthru
      _
    %v27 = vld [vmem:[%s1] sm:$0xff]
    %v28 = vld [vmem:[%s1 + $0x8] sm:$0xff]
    %v29 = vld [vmem:[%s1 + $0x10] sm:$0xff]
    %v30 = vld [vmem:[%s1 + $0x18] sm:$0xff]
    %v31 = vld [vmem:[%s1 + $0x20] sm:$0xff]
    %v32 = vld [vmem:[%s1 + $0x28] sm:$0xff]
    %v33 = vld [vmem:[%s1 + $0x30] sm:$0xff]
    %v34 = vld [vmem:[%s1 + $0x38] sm:$0xff]
    %v35 = vld [vmem:[%s3] sm:$0xff]
    %v36 = vld [vmem:[%s3 + $0x8] sm:$0xff]
    %v37 = vld [vmem:[%s3 + $0x10] sm:$0xff]
    %v38 = vld [vmem:[%s3 + $0x18] sm:$0xff]
    %v39 = vld [vmem:[%s3 + $0x20] sm:$0xff]
    %v40 = vld [vmem:[%s3 + $0x28] sm:$0xff]
    %v41 = vld [vmem:[%s3 + $0x30] sm:$0xff]
    %v42 = vld [vmem:[%s3 + $0x38] sm:$0xff]
    %v43 = vld [vmem:[%s5] sm:$0xff]
    %v44 = vld [vmem:[%s5 + $0x8] sm:$0x1]
    %v45 = vld [vmem:[%s2] sm:$0xff]
    %v46 = vld [vmem:[%s2 + $0x8] sm:$0xff]
    %v47 = vld [vmem:[%s2 + $0x10] sm:$0xff]
    %v48 = vld [vmem:[%s2 + $0x18] sm:$0xff]
    %v49 = vld [vmem:[%s2 + $0x20] sm:$0xff]
    %v50 = vld [vmem:[%s2 + $0x28] sm:$0xff]
    %v51 = vld [vmem:[%s2 + $0x30] sm:$0xff]
    %v52 = vld [vmem:[%s2 + $0x38] sm:$0xff]
    %v53 = vld [vmem:[%s4] sm:$0xff]
    %v54 = vld [vmem:[%s4 + $0x8] sm:$0xff]
    %v55 = vld [vmem:[%s4 + $0x10] sm:$0xff]
    %v56 = vld [vmem:[%s4 + $0x18] sm:$0xff]
    %v57 = vld [vmem:[%s4 + $0x20] sm:$0xff]
    %v58 = vld [vmem:[%s4 + $0x28] sm:$0xff]
    %v59 = vld [vmem:[%s4 + $0x30] sm:$0xff]
    %v60 = vld [vmem:[%s4 + $0x38] sm:$0xff]
    %v61 = vld [vmem:[%s6] sm:$0xff]
    %v62 = vld [vmem:[%s6 + $0x8] sm:$0x1]
    %v63 = vld [vmem:[%s0] sm:$0xff]
    %v64 = vld [vmem:[%s0 + $0x8] sm:$0xff]
    %v65 = vld [vmem:[%s0 + $0x10] sm:$0xff]
    %v66 = vld [vmem:[%s0 + $0x18] sm:$0xff]
    %v67 = vld [vmem:[%s0 + $0x20] sm:$0xff]
    %v68 = vld [vmem:[%s0 + $0x28] sm:$0xff]
    %v69 = vld [vmem:[%s0 + $0x30] sm:$0xff]
    %v70 = vld [vmem:[%s0 + $0x38] sm:$0xff]
    %v71 = vld [vmem:[%s0 + $0x40] sm:$0xff]
    %v72 = vld [vmem:[%s0 + $0x48] sm:$0xff]
    %v73 = vld [vmem:[%s0 + $0x50] sm:$0xff]
    %v74 = vld [vmem:[%s0 + $0x58] sm:$0xff]
    %v75 = vld [vmem:[%s0 + $0x60] sm:$0xff]
    %v76 = vld [vmem:[%s0 + $0x68] sm:$0xff]
    %v77 = vld [vmem:[%s0 + $0x70] sm:$0xff]
    %v78 = vld [vmem:[%s0 + $0x78] sm:$0xff]
    %v79 = vld [vmem:[%s0 + $0x80] sm:$0xff]
    %v80 = vld [vmem:[%s0 + $0x88] sm:$0xff]
    %v81 = vld [vmem:[%s0 + $0x90] sm:$0xff]
    %v82 = vld [vmem:[%s0 + $0x98] sm:$0xff]
    %v83 = vld [vmem:[%s0 + $0xa0] sm:$0xff]
    %v84 = vld [vmem:[%s0 + $0xa8] sm:$0xff]
    %v85 = vld [vmem:[%s0 + $0xb0] sm:$0xff]
    %v86 = vld [vmem:[%s0 + $0xb8] sm:$0xff]
    %v87 = vld [vmem:[%s0 + $0xc0] sm:$0xff]
    %v88 = vld [vmem:[%s0 + $0xc8] sm:$0xff]
    %v89 = vld [vmem:[%s0 + $0xd0] sm:$0xff]
    %v90 = vld [vmem:[%s0 + $0xd8] sm:$0xff]
    %v91 = vld [vmem:[%s0 + $0xe0] sm:$0xff]
    %v92 = vld [vmem:[%s0 + $0xe8] sm:$0xff]
    %v93 = vld [vmem:[%s0 + $0xf0] sm:$0xff]
    %v94 = vld [vmem:[%s0 + $0xf8] sm:$0xff]
    %96 = vset.pattern.permute.xlu0 0
    %97 = vperm.xlu0 %96, %v45
    %v98 = vpop.permute.xlu0 %97
    %101 = vset.pattern.permute.xlu0 0
    %102 = vperm.xlu0 %101, %v46
    %v103 = vpop.permute.xlu0 %102
    %106 = vset.pattern.permute.xlu0 0
    %107 = vperm.xlu0 %106, %v47
    %v108 = vpop.permute.xlu0 %107
    %111 = vset.pattern.permute.xlu0 0
    %112 = vperm.xlu0 %111, %v48
    %v113 = vpop.permute.xlu0 %112
    %116 = vset.pattern.permute.xlu0 0
    %117 = vperm.xlu0 %116, %v49
    %v118 = vpop.permute.xlu0 %117
    %121 = vset.pattern.permute.xlu0 0
    %122 = vperm.xlu0 %121, %v50
    %v123 = vpop.permute.xlu0 %122
    %126 = vset.pattern.permute.xlu0 0
    %127 = vperm.xlu0 %126, %v51
    %v128 = vpop.permute.xlu0 %127
    %131 = vset.pattern.permute.xlu0 0
    %132 = vperm.xlu0 %131, %v52
    %v133 = vpop.permute.xlu0 %132
    %vm135 = vcmask 130048
    %v137 = vsel %vm135, %v27, 0
    %v140 = vsel %vm135, %v28, 0
    %v143 = vsel %vm135, %v29, 0
    %v146 = vsel %vm135, %v30, 0
    %v149 = vsel %vm135, %v31, 0
    %v152 = vsel %vm135, %v32, 0
    %v155 = vsel %vm135, %v33, 0
    %v158 = vsel %vm135, %v34, 0
    %v161 = vsel %vm135, %v63, 0
    %v164 = vsel %vm135, %v64, 0
    %v167 = vsel %vm135, %v65, 0
    %v170 = vsel %vm135, %v66, 0
    %v173 = vsel %vm135, %v67, 0
    %v176 = vsel %vm135, %v68, 0
    %v179 = vsel %vm135, %v69, 0
    %v182 = vsel %vm135, %v70, 0
    %v185 = vsel %vm135, %v71, 0
    %v188 = vsel %vm135, %v72, 0
    %v191 = vsel %vm135, %v73, 0
    %v194 = vsel %vm135, %v74, 0
    %v197 = vsel %vm135, %v75, 0
    %v200 = vsel %vm135, %v76, 0
    %v203 = vsel %vm135, %v77, 0
    %v206 = vsel %vm135, %v78, 0
    %v209 = vsel %vm135, %v79, 0
    %v212 = vsel %vm135, %v80, 0
    %v215 = vsel %vm135, %v81, 0
    %v218 = vsel %vm135, %v82, 0
    %v221 = vsel %vm135, %v83, 0
    %v224 = vsel %vm135, %v84, 0
    %v227 = vsel %vm135, %v85, 0
    %v230 = vsel %vm135, %v86, 0
    %v233 = vsel %vm135, %v87, 0
    %v236 = vsel %vm135, %v88, 0
    %v239 = vsel %vm135, %v89, 0
    %v242 = vsel %vm135, %v90, 0
    %v245 = vsel %vm135, %v91, 0
    %v248 = vsel %vm135, %v92, 0
    %v251 = vsel %vm135, %v93, 0
    %v254 = vsel %vm135, %v94, 0
    %256 = vmatprep.subr.mxu0 0.0
    %v257 = vand.u32 %v206, 4294901760
    %258 = vmatpush1.xpose.msra.mxu0 %v257
    %259 = vmatprep.subr.mxu0 0.0
    %v260 = vand.u32 %v203, 4294901760
    %261 = vmatpush1.xpose.msra.mxu0 %v260
    %262 = vmatprep.subr.mxu0 0.0
    %v263 = vand.u32 %v200, 4294901760
    %264 = vmatpush1.xpose.msra.mxu0 %v263
    %265 = vmatprep.subr.mxu0 0.0
    %v266 = vand.u32 %v197, 4294901760
    %267 = vmatpush1.xpose.msra.mxu0 %v266
    %268 = vmatprep.subr.mxu0 0.0
    %v269 = vand.u32 %v194, 4294901760
    %270 = vmatpush1.xpose.msra.mxu0 %v269
    %271 = vmatprep.subr.mxu0 0.0
    %v272 = vand.u32 %v191, 4294901760
    %273 = vmatpush1.xpose.msra.mxu0 %v272
    %274 = vmatprep.subr.mxu0 0.0
    %v275 = vand.u32 %v188, 4294901760
    %276 = vmatpush1.xpose.msra.mxu0 %v275
    %277 = vmatprep.subr.mxu0 0.0
    %v278 = vand.u32 %v185, 4294901760
    %279 = vmatpush1.xpose.msra.mxu0 %v278
    %280 = vmatprep.subr.mxu0 0.0
    %v281 = vand.u32 %v182, 4294901760
    %282 = vmatpush1.xpose.msra.mxu0 %v281
    %283 = vmatprep.subr.mxu0 0.0
    %v284 = vand.u32 %v179, 4294901760
    %285 = vmatpush1.xpose.msra.mxu0 %v284
    %286 = vmatprep.subr.mxu0 0.0
    %v287 = vand.u32 %v176, 4294901760
    %288 = vmatpush1.xpose.msra.mxu0 %v287
    %289 = vmatprep.subr.mxu0 0.0
    %v290 = vand.u32 %v173, 4294901760
    %291 = vmatpush1.xpose.msra.mxu0 %v290
    %292 = vmatprep.subr.mxu0 0.0
    %v293 = vand.u32 %v170, 4294901760
    %294 = vmatpush1.xpose.msra.mxu0 %v293
    %295 = vmatprep.subr.mxu0 0.0
    %v296 = vand.u32 %v167, 4294901760
    %297 = vmatpush1.xpose.msra.mxu0 %v296
    %298 = vmatprep.subr.mxu0 0.0
    %v299 = vand.u32 %v164, 4294901760
    %300 = vmatpush1.xpose.msra.mxu0 %v299
    %301 = vmatprep.subr.mxu0 0.0
    %v302 = vand.u32 %v161, 4294901760
    %303 = vmatpush1.xpose.msra.mxu0 %v302
    %304 = vmatprep.subr.mxu0 0.0
    %v305 = vand.u32 %v254, 4294901760
    %306 = vmatpush2.xpose.msra.mxu0 %v305
    %307 = vmatprep.subr.mxu0 0.0
    %v308 = vand.u32 %v251, 4294901760
    %309 = vmatpush2.xpose.msra.mxu0 %v308
    %310 = vmatprep.subr.mxu0 0.0
    %v311 = vand.u32 %v248, 4294901760
    %312 = vmatpush2.xpose.msra.mxu0 %v311
    %313 = vmatprep.subr.mxu0 0.0
    %v314 = vand.u32 %v245, 4294901760
    %315 = vmatpush2.xpose.msra.mxu0 %v314
    %316 = vmatprep.subr.mxu0 0.0
    %v317 = vand.u32 %v242, 4294901760
    %318 = vmatpush2.xpose.msra.mxu0 %v317
    %319 = vmatprep.subr.mxu0 0.0
    %v320 = vand.u32 %v239, 4294901760
    %321 = vmatpush2.xpose.msra.mxu0 %v320
    %322 = vmatprep.subr.mxu0 0.0
    %v323 = vand.u32 %v236, 4294901760
    %324 = vmatpush2.xpose.msra.mxu0 %v323
    %325 = vmatprep.subr.mxu0 0.0
    %v326 = vand.u32 %v233, 4294901760
    %327 = vmatpush2.xpose.msra.mxu0 %v326
    %328 = vmatprep.subr.mxu0 0.0
    %v329 = vand.u32 %v230, 4294901760
    %330 = vmatpush2.xpose.msra.mxu0 %v329
    %331 = vmatprep.subr.mxu0 0.0
    %v332 = vand.u32 %v227, 4294901760
    %333 = vmatpush2.xpose.msra.mxu0 %v332
    %334 = vmatprep.subr.mxu0 0.0
    %v335 = vand.u32 %v224, 4294901760
    %336 = vmatpush2.xpose.msra.mxu0 %v335
    %337 = vmatprep.subr.mxu0 0.0
    %v338 = vand.u32 %v221, 4294901760
    %339 = vmatpush2.xpose.msra.mxu0 %v338
    %340 = vmatprep.subr.mxu0 0.0
    %v341 = vand.u32 %v218, 4294901760
    %342 = vmatpush2.xpose.msra.mxu0 %v341
    %343 = vmatprep.subr.mxu0 0.0
    %v344 = vand.u32 %v215, 4294901760
    %345 = vmatpush2.xpose.msra.mxu0 %v344
    %346 = vmatprep.subr.mxu0 0.0
    %v347 = vand.u32 %v212, 4294901760
    %348 = vmatpush2.xpose.msra.mxu0 %v347
    %349 = vmatprep.subr.mxu0 0.0
    %v350 = vand.u32 %v209, 4294901760
    %351 = vmatpush2.xpose.msra.mxu0 %v350
    %352 = vmatprep.mubr.f32.mxu0 0.0
    %v353 = vand.u32 %v137, 4294901760
    %v354 = vsub.f32 %v137, %v353
    %v355 = vand.u32 %v354, 4294901760
    %v356 = vsub.f32 %v354, %v355
    %v357 = vand.u32 %v356, 4294901760
    %358 = vmatmul.mubr.f32.gmra.mxu0 %v357
    %v359 = vpop.f32.mrf.mxu0
    %v360 = vadd.f32 %v98, %v359
    %v361 = vpop.f32.mrf.mxu0
    %v362 = vadd.f32 %v98, %v361
    %363 = vmatprep.mubr.f32.mxu0 0.0
    %v364 = vand.u32 %v140, 4294901760
    %v365 = vsub.f32 %v140, %v364
    %v366 = vand.u32 %v365, 4294901760
    %v367 = vsub.f32 %v365, %v366
    %v368 = vand.u32 %v367, 4294901760
    %369 = vmatmul.mubr.f32.gmra.mxu0 %v368
    %v370 = vpop.f32.mrf.mxu0
    %v371 = vadd.f32 %v103, %v370
    %v372 = vpop.f32.mrf.mxu0
    %v373 = vadd.f32 %v103, %v372
    %374 = vmatprep.mubr.f32.mxu0 0.0
    %v375 = vand.u32 %v143, 4294901760
    %v376 = vsub.f32 %v143, %v375
    %v377 = vand.u32 %v376, 4294901760
    %v378 = vsub.f32 %v376, %v377
    %v379 = vand.u32 %v378, 4294901760
    %380 = vmatmul.mubr.f32.gmra.mxu0 %v379
    %v381 = vpop.f32.mrf.mxu0
    %v382 = vadd.f32 %v108, %v381
    %v383 = vpop.f32.mrf.mxu0
    %v384 = vadd.f32 %v108, %v383
    %385 = vmatprep.mubr.f32.mxu0 0.0
    %v386 = vand.u32 %v146, 4294901760
    %v387 = vsub.f32 %v146, %v386
    %v388 = vand.u32 %v387, 4294901760
    %v389 = vsub.f32 %v387, %v388
    %v390 = vand.u32 %v389, 4294901760
    %391 = vmatmul.mubr.f32.gmra.mxu0 %v390
    %v392 = vpop.f32.mrf.mxu0
    %v393 = vadd.f32 %v113, %v392
    %v394 = vpop.f32.mrf.mxu0
    %v395 = vadd.f32 %v113, %v394
    %396 = vmatprep.mubr.f32.mxu0 0.0
    %v397 = vand.u32 %v149, 4294901760
    %v398 = vsub.f32 %v149, %v397
    %v399 = vand.u32 %v398, 4294901760
    %v400 = vsub.f32 %v398, %v399
    %v401 = vand.u32 %v400, 4294901760
    %402 = vmatmul.mubr.f32.gmra.mxu0 %v401
    %v403 = vpop.f32.mrf.mxu0
    %v404 = vadd.f32 %v118, %v403
    %v405 = vpop.f32.mrf.mxu0
    %v406 = vadd.f32 %v118, %v405
    %407 = vmatprep.mubr.f32.mxu0 0.0
    %v408 = vand.u32 %v152, 4294901760
    %v409 = vsub.f32 %v152, %v408
    %v410 = vand.u32 %v409, 4294901760
    %v411 = vsub.f32 %v409, %v410
    %v412 = vand.u32 %v411, 4294901760
    %413 = vmatmul.mubr.f32.gmra.mxu0 %v412
    %v414 = vpop.f32.mrf.mxu0
    %v415 = vadd.f32 %v123, %v414
    %v416 = vpop.f32.mrf.mxu0
    %v417 = vadd.f32 %v123, %v416
    %418 = vmatprep.mubr.f32.mxu0 0.0
    %v419 = vand.u32 %v155, 4294901760
    %v420 = vsub.f32 %v155, %v419
    %v421 = vand.u32 %v420, 4294901760
    %v422 = vsub.f32 %v420, %v421
    %v423 = vand.u32 %v422, 4294901760
    %424 = vmatmul.mubr.f32.gmra.mxu0 %v423
    %v425 = vpop.f32.mrf.mxu0
    %v426 = vadd.f32 %v128, %v425
    %v427 = vpop.f32.mrf.mxu0
    %v428 = vadd.f32 %v128, %v427
    %429 = vmatprep.mubr.f32.mxu0 0.0
    %v430 = vand.u32 %v158, 4294901760
    %v431 = vsub.f32 %v158, %v430
    %v432 = vand.u32 %v431, 4294901760
    %v433 = vsub.f32 %v431, %v432
    %v434 = vand.u32 %v433, 4294901760
    %435 = vmatmul.mubr.f32.gmra.mxu0 %v434
    %v436 = vpop.f32.mrf.mxu0
    %v437 = vadd.f32 %v133, %v436
    %v438 = vpop.f32.mrf.mxu0
    %v439 = vadd.f32 %v133, %v438
    %440 = vdwg.mxu0
    %441 = vmatprep.subr.mxu0 0.0
    %v442 = vand.u32 %v206, 4294901760
    %v443 = vsub.f32 %v206, %v442
    %v444 = vand.u32 %v443, 4294901760
    %v445 = vsub.f32 %v443, %v444
    %v446 = vand.u32 %v445, 4294901760
    %447 = vmatpush1.xpose.msra.mxu0 %v446
    %448 = vmatprep.subr.mxu0 0.0
    %v449 = vand.u32 %v203, 4294901760
    %v450 = vsub.f32 %v203, %v449
    %v451 = vand.u32 %v450, 4294901760
    %v452 = vsub.f32 %v450, %v451
    %v453 = vand.u32 %v452, 4294901760
    %454 = vmatpush1.xpose.msra.mxu0 %v453
    %455 = vmatprep.subr.mxu0 0.0
    %v456 = vand.u32 %v200, 4294901760
    %v457 = vsub.f32 %v200, %v456
    %v458 = vand.u32 %v457, 4294901760
    %v459 = vsub.f32 %v457, %v458
    %v460 = vand.u32 %v459, 4294901760
    %461 = vmatpush1.xpose.msra.mxu0 %v460
    %462 = vmatprep.subr.mxu0 0.0
    %v463 = vand.u32 %v197, 4294901760
    %v464 = vsub.f32 %v197, %v463
    %v465 = vand.u32 %v464, 4294901760
    %v466 = vsub.f32 %v464, %v465
    %v467 = vand.u32 %v466, 4294901760
    %468 = vmatpush1.xpose.msra.mxu0 %v467
    %469 = vmatprep.subr.mxu0 0.0
    %v470 = vand.u32 %v194, 4294901760
    %v471 = vsub.f32 %v194, %v470
    %v472 = vand.u32 %v471, 4294901760
    %v473 = vsub.f32 %v471, %v472
    %v474 = vand.u32 %v473, 4294901760
    %475 = vmatpush1.xpose.msra.mxu0 %v474
    %476 = vmatprep.subr.mxu0 0.0
    %v477 = vand.u32 %v191, 4294901760
    %v478 = vsub.f32 %v191, %v477
    %v479 = vand.u32 %v478, 4294901760
    %v480 = vsub.f32 %v478, %v479
    %v481 = vand.u32 %v480, 4294901760
    %482 = vmatpush1.xpose.msra.mxu0 %v481
    %483 = vmatprep.subr.mxu0 0.0
    %v484 = vand.u32 %v188, 4294901760
    %v485 = vsub.f32 %v188, %v484
    %v486 = vand.u32 %v485, 4294901760
    %v487 = vsub.f32 %v485, %v486
    %v488 = vand.u32 %v487, 4294901760
    %489 = vmatpush1.xpose.msra.mxu0 %v488
    %490 = vmatprep.subr.mxu0 0.0
    %v491 = vand.u32 %v185, 4294901760
    %v492 = vsub.f32 %v185, %v491
    %v493 = vand.u32 %v492, 4294901760
    %v494 = vsub.f32 %v492, %v493
    %v495 = vand.u32 %v494, 4294901760
    %496 = vmatpush1.xpose.msra.mxu0 %v495
    %497 = vmatprep.subr.mxu0 0.0
    %v498 = vand.u32 %v182, 4294901760
    %v499 = vsub.f32 %v182, %v498
    %v500 = vand.u32 %v499, 4294901760
    %v501 = vsub.f32 %v499, %v500
    %v502 = vand.u32 %v501, 4294901760
    %503 = vmatpush1.xpose.msra.mxu0 %v502
    %504 = vmatprep.subr.mxu0 0.0
    %v505 = vand.u32 %v179, 4294901760
    %v506 = vsub.f32 %v179, %v505
    %v507 = vand.u32 %v506, 4294901760
    %v508 = vsub.f32 %v506, %v507
    %v509 = vand.u32 %v508, 4294901760
    %510 = vmatpush1.xpose.msra.mxu0 %v509
    %511 = vmatprep.subr.mxu0 0.0
    %v512 = vand.u32 %v176, 4294901760
    %v513 = vsub.f32 %v176, %v512
    %v514 = vand.u32 %v513, 4294901760
    %v515 = vsub.f32 %v513, %v514
    %v516 = vand.u32 %v515, 4294901760
    %517 = vmatpush1.xpose.msra.mxu0 %v516
    %518 = vmatprep.subr.mxu0 0.0
    %v519 = vand.u32 %v173, 4294901760
    %v520 = vsub.f32 %v173, %v519
    %v521 = vand.u32 %v520, 4294901760
    %v522 = vsub.f32 %v520, %v521
    %v523 = vand.u32 %v522, 4294901760
    %524 = vmatpush1.xpose.msra.mxu0 %v523
    %525 = vmatprep.subr.mxu0 0.0
    %v526 = vand.u32 %v170, 4294901760
    %v527 = vsub.f32 %v170, %v526
    %v528 = vand.u32 %v527, 4294901760
    %v529 = vsub.f32 %v527, %v528
    %v530 = vand.u32 %v529, 4294901760
    %531 = vmatpush1.xpose.msra.mxu0 %v530
    %532 = vmatprep.subr.mxu0 0.0
    %v533 = vand.u32 %v167, 4294901760
    %v534 = vsub.f32 %v167, %v533
    %v535 = vand.u32 %v534, 4294901760
    %v536 = vsub.f32 %v534, %v535
    %v537 = vand.u32 %v536, 4294901760
    %538 = vmatpush1.xpose.msra.mxu0 %v537
    %539 = vmatprep.subr.mxu0 0.0
    %v540 = vand.u32 %v164, 4294901760
    %v541 = vsub.f32 %v164, %v540
    %v542 = vand.u32 %v541, 4294901760
    %v543 = vsub.f32 %v541, %v542
    %v544 = vand.u32 %v543, 4294901760
    %545 = vmatpush1.xpose.msra.mxu0 %v544
    %546 = vmatprep.subr.mxu0 0.0
    %v547 = vand.u32 %v161, 4294901760
    %v548 = vsub.f32 %v161, %v547
    %v549 = vand.u32 %v548, 4294901760
    %v550 = vsub.f32 %v548, %v549
    %v551 = vand.u32 %v550, 4294901760
    %552 = vmatpush1.xpose.msra.mxu0 %v551
    %553 = vmatprep.subr.mxu0 0.0
    %v554 = vand.u32 %v254, 4294901760
    %v555 = vsub.f32 %v254, %v554
    %v556 = vand.u32 %v555, 4294901760
    %v557 = vsub.f32 %v555, %v556
    %v558 = vand.u32 %v557, 4294901760
    %559 = vmatpush2.xpose.msra.mxu0 %v558
    %560 = vmatprep.subr.mxu0 0.0
    %v561 = vand.u32 %v251, 4294901760
    %v562 = vsub.f32 %v251, %v561
    %v563 = vand.u32 %v562, 4294901760
    %v564 = vsub.f32 %v562, %v563
    %v565 = vand.u32 %v564, 4294901760
    %566 = vmatpush2.xpose.msra.mxu0 %v565
    %567 = vmatprep.subr.mxu0 0.0
    %v568 = vand.u32 %v248, 4294901760
    %v569 = vsub.f32 %v248, %v568
    %v570 = vand.u32 %v569, 4294901760
    %v571 = vsub.f32 %v569, %v570
    %v572 = vand.u32 %v571, 4294901760
    %573 = vmatpush2.xpose.msra.mxu0 %v572
    %574 = vmatprep.subr.mxu0 0.0
    %v575 = vand.u32 %v245, 4294901760
    %v576 = vsub.f32 %v245, %v575
    %v577 = vand.u32 %v576, 4294901760
    %v578 = vsub.f32 %v576, %v577
    %v579 = vand.u32 %v578, 4294901760
    %580 = vmatpush2.xpose.msra.mxu0 %v579
    %581 = vmatprep.subr.mxu0 0.0
    %v582 = vand.u32 %v242, 4294901760
    %v583 = vsub.f32 %v242, %v582
    %v584 = vand.u32 %v583, 4294901760
    %v585 = vsub.f32 %v583, %v584
    %v586 = vand.u32 %v585, 4294901760
    %587 = vmatpush2.xpose.msra.mxu0 %v586
    %588 = vmatprep.subr.mxu0 0.0
    %v589 = vand.u32 %v239, 4294901760
    %v590 = vsub.f32 %v239, %v589
    %v591 = vand.u32 %v590, 4294901760
    %v592 = vsub.f32 %v590, %v591
    %v593 = vand.u32 %v592, 4294901760
    %594 = vmatpush2.xpose.msra.mxu0 %v593
    %595 = vmatprep.subr.mxu0 0.0
    %v596 = vand.u32 %v236, 4294901760
    %v597 = vsub.f32 %v236, %v596
    %v598 = vand.u32 %v597, 4294901760
    %v599 = vsub.f32 %v597, %v598
    %v600 = vand.u32 %v599, 4294901760
    %601 = vmatpush2.xpose.msra.mxu0 %v600
    %602 = vmatprep.subr.mxu0 0.0
    %v603 = vand.u32 %v233, 4294901760
    %v604 = vsub.f32 %v233, %v603
    %v605 = vand.u32 %v604, 4294901760
    %v606 = vsub.f32 %v604, %v605
    %v607 = vand.u32 %v606, 4294901760
    %608 = vmatpush2.xpose.msra.mxu0 %v607
    %609 = vmatprep.subr.mxu0 0.0
    %v610 = vand.u32 %v230, 4294901760
    %v611 = vsub.f32 %v230, %v610
    %v612 = vand.u32 %v611, 4294901760
    %v613 = vsub.f32 %v611, %v612
    %v614 = vand.u32 %v613, 4294901760
    %615 = vmatpush2.xpose.msra.mxu0 %v614
    %616 = vmatprep.subr.mxu0 0.0
    %v617 = vand.u32 %v227, 4294901760
    %v618 = vsub.f32 %v227, %v617
    %v619 = vand.u32 %v618, 4294901760
    %v620 = vsub.f32 %v618, %v619
    %v621 = vand.u32 %v620, 4294901760
    %622 = vmatpush2.xpose.msra.mxu0 %v621
    %623 = vmatprep.subr.mxu0 0.0
    %v624 = vand.u32 %v224, 4294901760
    %v625 = vsub.f32 %v224, %v624
    %v626 = vand.u32 %v625, 4294901760
    %v627 = vsub.f32 %v625, %v626
    %v628 = vand.u32 %v627, 4294901760
    %629 = vmatpush2.xpose.msra.mxu0 %v628
    %630 = vmatprep.subr.mxu0 0.0
    %v631 = vand.u32 %v221, 4294901760
    %v632 = vsub.f32 %v221, %v631
    %v633 = vand.u32 %v632, 4294901760
    %v634 = vsub.f32 %v632, %v633
    %v635 = vand.u32 %v634, 4294901760
    %636 = vmatpush2.xpose.msra.mxu0 %v635
    %637 = vmatprep.subr.mxu0 0.0
    %v638 = vand.u32 %v218, 4294901760
    %v639 = vsub.f32 %v218, %v638
    %v640 = vand.u32 %v639, 4294901760
    %v641 = vsub.f32 %v639, %v640
    %v642 = vand.u32 %v641, 4294901760
    %643 = vmatpush2.xpose.msra.mxu0 %v642
    %644 = vmatprep.subr.mxu0 0.0
    %v645 = vand.u32 %v215, 4294901760
    %v646 = vsub.f32 %v215, %v645
    %v647 = vand.u32 %v646, 4294901760
    %v648 = vsub.f32 %v646, %v647
    %v649 = vand.u32 %v648, 4294901760
    %650 = vmatpush2.xpose.msra.mxu0 %v649
    %651 = vmatprep.subr.mxu0 0.0
    %v652 = vand.u32 %v212, 4294901760
    %v653 = vsub.f32 %v212, %v652
    %v654 = vand.u32 %v653, 4294901760
    %v655 = vsub.f32 %v653, %v654
    %v656 = vand.u32 %v655, 4294901760
    %657 = vmatpush2.xpose.msra.mxu0 %v656
    %658 = vmatprep.subr.mxu0 0.0
    %v659 = vand.u32 %v209, 4294901760
    %v660 = vsub.f32 %v209, %v659
    %v661 = vand.u32 %v660, 4294901760
    %v662 = vsub.f32 %v660, %v661
    %v663 = vand.u32 %v662, 4294901760
    %664 = vmatpush2.xpose.msra.mxu0 %v663
    %665 = vmatprep.mubr.f32.mxu0 0.0
    %v666 = vand.u32 %v137, 4294901760
    %667 = vmatmul.mubr.f32.gmra.mxu0 %v666
    %v668 = vpop.f32.mrf.mxu0
    %v669 = vadd.f32 %v360, %v668
    %v670 = vpop.f32.mrf.mxu0
    %v671 = vadd.f32 %v362, %v670
    %672 = vmatprep.mubr.f32.mxu0 0.0
    %v673 = vand.u32 %v140, 4294901760
    %674 = vmatmul.mubr.f32.gmra.mxu0 %v673
    %v675 = vpop.f32.mrf.mxu0
    %v676 = vadd.f32 %v371, %v675
    %v677 = vpop.f32.mrf.mxu0
    %v678 = vadd.f32 %v373, %v677
    %679 = vmatprep.mubr.f32.mxu0 0.0
    %v680 = vand.u32 %v143, 4294901760
    %681 = vmatmul.mubr.f32.gmra.mxu0 %v680
    %v682 = vpop.f32.mrf.mxu0
    %v683 = vadd.f32 %v382, %v682
    %v684 = vpop.f32.mrf.mxu0
    %v685 = vadd.f32 %v384, %v684
    %686 = vmatprep.mubr.f32.mxu0 0.0
    %v687 = vand.u32 %v146, 4294901760
    %688 = vmatmul.mubr.f32.gmra.mxu0 %v687
    %v689 = vpop.f32.mrf.mxu0
    %v690 = vadd.f32 %v393, %v689
    %v691 = vpop.f32.mrf.mxu0
    %v692 = vadd.f32 %v395, %v691
    %693 = vmatprep.mubr.f32.mxu0 0.0
    %v694 = vand.u32 %v149, 4294901760
    %695 = vmatmul.mubr.f32.gmra.mxu0 %v694
    %v696 = vpop.f32.mrf.mxu0
    %v697 = vadd.f32 %v404, %v696
    %v698 = vpop.f32.mrf.mxu0
    %v699 = vadd.f32 %v406, %v698
    %700 = vmatprep.mubr.f32.mxu0 0.0
    %v701 = vand.u32 %v152, 4294901760
    %702 = vmatmul.mubr.f32.gmra.mxu0 %v701
    %v703 = vpop.f32.mrf.mxu0
    %v704 = vadd.f32 %v415, %v703
    %v705 = vpop.f32.mrf.mxu0
    %v706 = vadd.f32 %v417, %v705
    %707 = vmatprep.mubr.f32.mxu0 0.0
    %v708 = vand.u32 %v155, 4294901760
    %709 = vmatmul.mubr.f32.gmra.mxu0 %v708
    %v710 = vpop.f32.mrf.mxu0
    %v711 = vadd.f32 %v426, %v710
    %v712 = vpop.f32.mrf.mxu0
    %v713 = vadd.f32 %v428, %v712
    %714 = vmatprep.mubr.f32.mxu0 0.0
    %v715 = vand.u32 %v158, 4294901760
    %716 = vmatmul.mubr.f32.gmra.mxu0 %v715
    %v717 = vpop.f32.mrf.mxu0
    %v718 = vadd.f32 %v437, %v717
    %v719 = vpop.f32.mrf.mxu0
    %v720 = vadd.f32 %v439, %v719
    %721 = vdwg.mxu0
    %722 = vmatprep.subr.mxu0 0.0
    %v723 = vand.u32 %v206, 4294901760
    %v724 = vsub.f32 %v206, %v723
    %725 = vmatpush1.xpose.msra.mxu0 %v724
    %726 = vmatprep.subr.mxu0 0.0
    %v727 = vand.u32 %v203, 4294901760
    %v728 = vsub.f32 %v203, %v727
    %729 = vmatpush1.xpose.msra.mxu0 %v728
    %730 = vmatprep.subr.mxu0 0.0
    %v731 = vand.u32 %v200, 4294901760
    %v732 = vsub.f32 %v200, %v731
    %733 = vmatpush1.xpose.msra.mxu0 %v732
    %734 = vmatprep.subr.mxu0 0.0
    %v735 = vand.u32 %v197, 4294901760
    %v736 = vsub.f32 %v197, %v735
    %737 = vmatpush1.xpose.msra.mxu0 %v736
    %738 = vmatprep.subr.mxu0 0.0
    %v739 = vand.u32 %v194, 4294901760
    %v740 = vsub.f32 %v194, %v739
    %741 = vmatpush1.xpose.msra.mxu0 %v740
    %742 = vmatprep.subr.mxu0 0.0
    %v743 = vand.u32 %v191, 4294901760
    %v744 = vsub.f32 %v191, %v743
    %745 = vmatpush1.xpose.msra.mxu0 %v744
    %746 = vmatprep.subr.mxu0 0.0
    %v747 = vand.u32 %v188, 4294901760
    %v748 = vsub.f32 %v188, %v747
    %749 = vmatpush1.xpose.msra.mxu0 %v748
    %750 = vmatprep.subr.mxu0 0.0
    %v751 = vand.u32 %v185, 4294901760
    %v752 = vsub.f32 %v185, %v751
    %753 = vmatpush1.xpose.msra.mxu0 %v752
    %754 = vmatprep.subr.mxu0 0.0
    %v755 = vand.u32 %v182, 4294901760
    %v756 = vsub.f32 %v182, %v755
    %757 = vmatpush1.xpose.msra.mxu0 %v756
    %758 = vmatprep.subr.mxu0 0.0
    %v759 = vand.u32 %v179, 4294901760
    %v760 = vsub.f32 %v179, %v759
    %761 = vmatpush1.xpose.msra.mxu0 %v760
    %762 = vmatprep.subr.mxu0 0.0
    %v763 = vand.u32 %v176, 4294901760
    %v764 = vsub.f32 %v176, %v763
    %765 = vmatpush1.xpose.msra.mxu0 %v764
    %766 = vmatprep.subr.mxu0 0.0
    %v767 = vand.u32 %v173, 4294901760
    %v768 = vsub.f32 %v173, %v767
    %769 = vmatpush1.xpose.msra.mxu0 %v768
    %770 = vmatprep.subr.mxu0 0.0
    %v771 = vand.u32 %v170, 4294901760
    %v772 = vsub.f32 %v170, %v771
    %773 = vmatpush1.xpose.msra.mxu0 %v772
    %774 = vmatprep.subr.mxu0 0.0
    %v775 = vand.u32 %v167, 4294901760
    %v776 = vsub.f32 %v167, %v775
    %777 = vmatpush1.xpose.msra.mxu0 %v776
    %778 = vmatprep.subr.mxu0 0.0
    %v779 = vand.u32 %v164, 4294901760
    %v780 = vsub.f32 %v164, %v779
    %781 = vmatpush1.xpose.msra.mxu0 %v780
    %782 = vmatprep.subr.mxu0 0.0
    %v783 = vand.u32 %v161, 4294901760
    %v784 = vsub.f32 %v161, %v783
    %785 = vmatpush1.xpose.msra.mxu0 %v784
    %786 = vmatprep.subr.mxu0 0.0
    %v787 = vand.u32 %v254, 4294901760
    %v788 = vsub.f32 %v254, %v787
    %789 = vmatpush2.xpose.msra.mxu0 %v788
    %790 = vmatprep.subr.mxu0 0.0
    %v791 = vand.u32 %v251, 4294901760
    %v792 = vsub.f32 %v251, %v791
    %793 = vmatpush2.xpose.msra.mxu0 %v792
    %794 = vmatprep.subr.mxu0 0.0
    %v795 = vand.u32 %v248, 4294901760
    %v796 = vsub.f32 %v248, %v795
    %797 = vmatpush2.xpose.msra.mxu0 %v796
    %798 = vmatprep.subr.mxu0 0.0
    %v799 = vand.u32 %v245, 4294901760
    %v800 = vsub.f32 %v245, %v799
    %801 = vmatpush2.xpose.msra.mxu0 %v800
    %802 = vmatprep.subr.mxu0 0.0
    %v803 = vand.u32 %v242, 4294901760
    %v804 = vsub.f32 %v242, %v803
    %805 = vmatpush2.xpose.msra.mxu0 %v804
    %806 = vmatprep.subr.mxu0 0.0
    %v807 = vand.u32 %v239, 4294901760
    %v808 = vsub.f32 %v239, %v807
    %809 = vmatpush2.xpose.msra.mxu0 %v808
    %810 = vmatprep.subr.mxu0 0.0
    %v811 = vand.u32 %v236, 4294901760
    %v812 = vsub.f32 %v236, %v811
    %813 = vmatpush2.xpose.msra.mxu0 %v812
    %814 = vmatprep.subr.mxu0 0.0
    %v815 = vand.u32 %v233, 4294901760
    %v816 = vsub.f32 %v233, %v815
    %817 = vmatpush2.xpose.msra.mxu0 %v816
    %818 = vmatprep.subr.mxu0 0.0
    %v819 = vand.u32 %v230, 4294901760
    %v820 = vsub.f32 %v230, %v819
    %821 = vmatpush2.xpose.msra.mxu0 %v820
    %822 = vmatprep.subr.mxu0 0.0
    %v823 = vand.u32 %v227, 4294901760
    %v824 = vsub.f32 %v227, %v823
    %825 = vmatpush2.xpose.msra.mxu0 %v824
    %826 = vmatprep.subr.mxu0 0.0
    %v827 = vand.u32 %v224, 4294901760
    %v828 = vsub.f32 %v224, %v827
    %829 = vmatpush2.xpose.msra.mxu0 %v828
    %830 = vmatprep.subr.mxu0 0.0
    %v831 = vand.u32 %v221, 4294901760
    %v832 = vsub.f32 %v221, %v831
    %833 = vmatpush2.xpose.msra.mxu0 %v832
    %834 = vmatprep.subr.mxu0 0.0
    %v835 = vand.u32 %v218, 4294901760
    %v836 = vsub.f32 %v218, %v835
    %837 = vmatpush2.xpose.msra.mxu0 %v836
    %838 = vmatprep.subr.mxu0 0.0
    %v839 = vand.u32 %v215, 4294901760
    %v840 = vsub.f32 %v215, %v839
    %841 = vmatpush2.xpose.msra.mxu0 %v840
    %842 = vmatprep.subr.mxu0 0.0
    %v843 = vand.u32 %v212, 4294901760
    %v844 = vsub.f32 %v212, %v843
    %845 = vmatpush2.xpose.msra.mxu0 %v844
    %846 = vmatprep.subr.mxu0 0.0
    %v847 = vand.u32 %v209, 4294901760
    %v848 = vsub.f32 %v209, %v847
    %849 = vmatpush2.xpose.msra.mxu0 %v848
    %850 = vmatprep.mubr.f32.mxu0 0.0
    %v851 = vand.u32 %v137, 4294901760
    %v852 = vsub.f32 %v137, %v851
    %853 = vmatmul.mubr.f32.gmra.mxu0 %v852
    %v854 = vpop.f32.mrf.mxu0
    %v855 = vadd.f32 %v669, %v854
    %v856 = vpop.f32.mrf.mxu0
    %v857 = vadd.f32 %v671, %v856
    %858 = vmatprep.mubr.f32.mxu0 0.0
    %v859 = vand.u32 %v140, 4294901760
    %v860 = vsub.f32 %v140, %v859
    %861 = vmatmul.mubr.f32.gmra.mxu0 %v860
    %v862 = vpop.f32.mrf.mxu0
    %v863 = vadd.f32 %v676, %v862
    %v864 = vpop.f32.mrf.mxu0
    %v865 = vadd.f32 %v678, %v864
    %866 = vmatprep.mubr.f32.mxu0 0.0
    %v867 = vand.u32 %v143, 4294901760
    %v868 = vsub.f32 %v143, %v867
    %869 = vmatmul.mubr.f32.gmra.mxu0 %v868
    %v870 = vpop.f32.mrf.mxu0
    %v871 = vadd.f32 %v683, %v870
    %v872 = vpop.f32.mrf.mxu0
    %v873 = vadd.f32 %v685, %v872
    %874 = vmatprep.mubr.f32.mxu0 0.0
    %v875 = vand.u32 %v146, 4294901760
    %v876 = vsub.f32 %v146, %v875
    %877 = vmatmul.mubr.f32.gmra.mxu0 %v876
    %v878 = vpop.f32.mrf.mxu0
    %v879 = vadd.f32 %v690, %v878
    %v880 = vpop.f32.mrf.mxu0
    %v881 = vadd.f32 %v692, %v880
    %882 = vmatprep.mubr.f32.mxu0 0.0
    %v883 = vand.u32 %v149, 4294901760
    %v884 = vsub.f32 %v149, %v883
    %885 = vmatmul.mubr.f32.gmra.mxu0 %v884
    %v886 = vpop.f32.mrf.mxu0
    %v887 = vadd.f32 %v697, %v886
    %v888 = vpop.f32.mrf.mxu0
    %v889 = vadd.f32 %v699, %v888
    %890 = vmatprep.mubr.f32.mxu0 0.0
    %v891 = vand.u32 %v152, 4294901760
    %v892 = vsub.f32 %v152, %v891
    %893 = vmatmul.mubr.f32.gmra.mxu0 %v892
    %v894 = vpop.f32.mrf.mxu0
    %v895 = vadd.f32 %v704, %v894
    %v896 = vpop.f32.mrf.mxu0
    %v897 = vadd.f32 %v706, %v896
    %898 = vmatprep.mubr.f32.mxu0 0.0
    %v899 = vand.u32 %v155, 4294901760
    %v900 = vsub.f32 %v155, %v899
    %901 = vmatmul.mubr.f32.gmra.mxu0 %v900
    %v902 = vpop.f32.mrf.mxu0
    %v903 = vadd.f32 %v711, %v902
    %v904 = vpop.f32.mrf.mxu0
    %v905 = vadd.f32 %v713, %v904
    %906 = vmatprep.mubr.f32.mxu0 0.0
    %v907 = vand.u32 %v158, 4294901760
    %v908 = vsub.f32 %v158, %v907
    %909 = vmatmul.mubr.f32.gmra.mxu0 %v908
    %v910 = vpop.f32.mrf.mxu0
    %v911 = vadd.f32 %v718, %v910
    %v912 = vpop.f32.mrf.mxu0
    %v913 = vadd.f32 %v720, %v912
    %914 = vdwg.mxu0
    %915 = vmatprep.subr.mxu0 0.0
    %v916 = vand.u32 %v206, 4294901760
    %917 = vmatpush1.xpose.msra.mxu0 %v916
    %918 = vmatprep.subr.mxu0 0.0
    %v919 = vand.u32 %v203, 4294901760
    %920 = vmatpush1.xpose.msra.mxu0 %v919
    %921 = vmatprep.subr.mxu0 0.0
    %v922 = vand.u32 %v200, 4294901760
    %923 = vmatpush1.xpose.msra.mxu0 %v922
    %924 = vmatprep.subr.mxu0 0.0
    %v925 = vand.u32 %v197, 4294901760
    %926 = vmatpush1.xpose.msra.mxu0 %v925
    %927 = vmatprep.subr.mxu0 0.0
    %v928 = vand.u32 %v194, 4294901760
    %929 = vmatpush1.xpose.msra.mxu0 %v928
    %930 = vmatprep.subr.mxu0 0.0
    %v931 = vand.u32 %v191, 4294901760
    %932 = vmatpush1.xpose.msra.mxu0 %v931
    %933 = vmatprep.subr.mxu0 0.0
    %v934 = vand.u32 %v188, 4294901760
    %935 = vmatpush1.xpose.msra.mxu0 %v934
    %936 = vmatprep.subr.mxu0 0.0
    %v937 = vand.u32 %v185, 4294901760
    %938 = vmatpush1.xpose.msra.mxu0 %v937
    %939 = vmatprep.subr.mxu0 0.0
    %v940 = vand.u32 %v182, 4294901760
    %941 = vmatpush1.xpose.msra.mxu0 %v940
    %942 = vmatprep.subr.mxu0 0.0
    %v943 = vand.u32 %v179, 4294901760
    %944 = vmatpush1.xpose.msra.mxu0 %v943
    %945 = vmatprep.subr.mxu0 0.0
    %v946 = vand.u32 %v176, 4294901760
    %947 = vmatpush1.xpose.msra.mxu0 %v946
    %948 = vmatprep.subr.mxu0 0.0
    %v949 = vand.u32 %v173, 4294901760
    %950 = vmatpush1.xpose.msra.mxu0 %v949
    %951 = vmatprep.subr.mxu0 0.0
    %v952 = vand.u32 %v170, 4294901760
    %953 = vmatpush1.xpose.msra.mxu0 %v952
    %954 = vmatprep.subr.mxu0 0.0
    %v955 = vand.u32 %v167, 4294901760
    %956 = vmatpush1.xpose.msra.mxu0 %v955
    %957 = vmatprep.subr.mxu0 0.0
    %v958 = vand.u32 %v164, 4294901760
    %959 = vmatpush1.xpose.msra.mxu0 %v958
    %960 = vmatprep.subr.mxu0 0.0
    %v961 = vand.u32 %v161, 4294901760
    %962 = vmatpush1.xpose.msra.mxu0 %v961
    %963 = vmatprep.subr.mxu0 0.0
    %v964 = vand.u32 %v254, 4294901760
    %965 = vmatpush2.xpose.msra.mxu0 %v964
    %966 = vmatprep.subr.mxu0 0.0
    %v967 = vand.u32 %v251, 4294901760
    %968 = vmatpush2.xpose.msra.mxu0 %v967
    %969 = vmatprep.subr.mxu0 0.0
    %v970 = vand.u32 %v248, 4294901760
    %971 = vmatpush2.xpose.msra.mxu0 %v970
    %972 = vmatprep.subr.mxu0 0.0
    %v973 = vand.u32 %v245, 4294901760
    %974 = vmatpush2.xpose.msra.mxu0 %v973
    %975 = vmatprep.subr.mxu0 0.0
    %v976 = vand.u32 %v242, 4294901760
    %977 = vmatpush2.xpose.msra.mxu0 %v976
    %978 = vmatprep.subr.mxu0 0.0
    %v979 = vand.u32 %v239, 4294901760
    %980 = vmatpush2.xpose.msra.mxu0 %v979
    %981 = vmatprep.subr.mxu0 0.0
    %v982 = vand.u32 %v236, 4294901760
    %983 = vmatpush2.xpose.msra.mxu0 %v982
    %984 = vmatprep.subr.mxu0 0.0
    %v985 = vand.u32 %v233, 4294901760
    %986 = vmatpush2.xpose.msra.mxu0 %v985
    %987 = vmatprep.subr.mxu0 0.0
    %v988 = vand.u32 %v230, 4294901760
    %989 = vmatpush2.xpose.msra.mxu0 %v988
    %990 = vmatprep.subr.mxu0 0.0
    %v991 = vand.u32 %v227, 4294901760
    %992 = vmatpush2.xpose.msra.mxu0 %v991
    %993 = vmatprep.subr.mxu0 0.0
    %v994 = vand.u32 %v224, 4294901760
    %995 = vmatpush2.xpose.msra.mxu0 %v994
    %996 = vmatprep.subr.mxu0 0.0
    %v997 = vand.u32 %v221, 4294901760
    %998 = vmatpush2.xpose.msra.mxu0 %v997
    %999 = vmatprep.subr.mxu0 0.0
    %v1000 = vand.u32 %v218, 4294901760
    %1001 = vmatpush2.xpose.msra.mxu0 %v1000
    %1002 = vmatprep.subr.mxu0 0.0
    %v1003 = vand.u32 %v215, 4294901760
    %1004 = vmatpush2.xpose.msra.mxu0 %v1003
    %1005 = vmatprep.subr.mxu0 0.0
    %v1006 = vand.u32 %v212, 4294901760
    %1007 = vmatpush2.xpose.msra.mxu0 %v1006
    %1008 = vmatprep.subr.mxu0 0.0
    %v1009 = vand.u32 %v209, 4294901760
    %1010 = vmatpush2.xpose.msra.mxu0 %v1009
    %1011 = vmatprep.mubr.f32.mxu0 0.0
    %v1012 = vand.u32 %v137, 4294901760
    %v1013 = vsub.f32 %v137, %v1012
    %v1014 = vand.u32 %v1013, 4294901760
    %1015 = vmatmul.mubr.f32.gmra.mxu0 %v1014
    %v1016 = vpop.f32.mrf.mxu0
    %v1017 = vadd.f32 %v855, %v1016
    %v1018 = vpop.f32.mrf.mxu0
    %v1019 = vadd.f32 %v857, %v1018
    %1020 = vmatprep.mubr.f32.mxu0 0.0
    %v1021 = vand.u32 %v140, 4294901760
    %v1022 = vsub.f32 %v140, %v1021
    %v1023 = vand.u32 %v1022, 4294901760
    %1024 = vmatmul.mubr.f32.gmra.mxu0 %v1023
    %v1025 = vpop.f32.mrf.mxu0
    %v1026 = vadd.f32 %v863, %v1025
    %v1027 = vpop.f32.mrf.mxu0
    %v1028 = vadd.f32 %v865, %v1027
    %1029 = vmatprep.mubr.f32.mxu0 0.0
    %v1030 = vand.u32 %v143, 4294901760
    %v1031 = vsub.f32 %v143, %v1030
    %v1032 = vand.u32 %v1031, 4294901760
    %1033 = vmatmul.mubr.f32.gmra.mxu0 %v1032
    %v1034 = vpop.f32.mrf.mxu0
    %v1035 = vadd.f32 %v871, %v1034
    %v1036 = vpop.f32.mrf.mxu0
    %v1037 = vadd.f32 %v873, %v1036
    %1038 = vmatprep.mubr.f32.mxu0 0.0
    %v1039 = vand.u32 %v146, 4294901760
    %v1040 = vsub.f32 %v146, %v1039
    %v1041 = vand.u32 %v1040, 4294901760
    %1042 = vmatmul.mubr.f32.gmra.mxu0 %v1041
    %v1043 = vpop.f32.mrf.mxu0
    %v1044 = vadd.f32 %v879, %v1043
    %v1045 = vpop.f32.mrf.mxu0
    %v1046 = vadd.f32 %v881, %v1045
    %1047 = vmatprep.mubr.f32.mxu0 0.0
    %v1048 = vand.u32 %v149, 4294901760
    %v1049 = vsub.f32 %v149, %v1048
    %v1050 = vand.u32 %v1049, 4294901760
    %1051 = vmatmul.mubr.f32.gmra.mxu0 %v1050
    %v1052 = vpop.f32.mrf.mxu0
    %v1053 = vadd.f32 %v887, %v1052
    %v1054 = vpop.f32.mrf.mxu0
    %v1055 = vadd.f32 %v889, %v1054
    %1056 = vmatprep.mubr.f32.mxu0 0.0
    %v1057 = vand.u32 %v152, 4294901760
    %v1058 = vsub.f32 %v152, %v1057
    %v1059 = vand.u32 %v1058, 4294901760
    %1060 = vmatmul.mubr.f32.gmra.mxu0 %v1059
    %v1061 = vpop.f32.mrf.mxu0
    %v1062 = vadd.f32 %v895, %v1061
    %v1063 = vpop.f32.mrf.mxu0
    %v1064 = vadd.f32 %v897, %v1063
    %1065 = vmatprep.mubr.f32.mxu0 0.0
    %v1066 = vand.u32 %v155, 4294901760
    %v1067 = vsub.f32 %v155, %v1066
    %v1068 = vand.u32 %v1067, 4294901760
    %1069 = vmatmul.mubr.f32.gmra.mxu0 %v1068
    %v1070 = vpop.f32.mrf.mxu0
    %v1071 = vadd.f32 %v903, %v1070
    %v1072 = vpop.f32.mrf.mxu0
    %v1073 = vadd.f32 %v905, %v1072
    %1074 = vmatprep.mubr.f32.mxu0 0.0
    %v1075 = vand.u32 %v158, 4294901760
    %v1076 = vsub.f32 %v158, %v1075
    %v1077 = vand.u32 %v1076, 4294901760
    %1078 = vmatmul.mubr.f32.gmra.mxu0 %v1077
    %v1079 = vpop.f32.mrf.mxu0
    %v1080 = vadd.f32 %v911, %v1079
    %v1081 = vpop.f32.mrf.mxu0
    %v1082 = vadd.f32 %v913, %v1081
    %1083 = vdwg.mxu0
    %1084 = vmatprep.subr.mxu0 0.0
    %v1085 = vand.u32 %v206, 4294901760
    %v1086 = vsub.f32 %v206, %v1085
    %v1087 = vand.u32 %v1086, 4294901760
    %1088 = vmatpush1.xpose.msra.mxu0 %v1087
    %1089 = vmatprep.subr.mxu0 0.0
    %v1090 = vand.u32 %v203, 4294901760
    %v1091 = vsub.f32 %v203, %v1090
    %v1092 = vand.u32 %v1091, 4294901760
    %1093 = vmatpush1.xpose.msra.mxu0 %v1092
    %1094 = vmatprep.subr.mxu0 0.0
    %v1095 = vand.u32 %v200, 4294901760
    %v1096 = vsub.f32 %v200, %v1095
    %v1097 = vand.u32 %v1096, 4294901760
    %1098 = vmatpush1.xpose.msra.mxu0 %v1097
    %1099 = vmatprep.subr.mxu0 0.0
    %v1100 = vand.u32 %v197, 4294901760
    %v1101 = vsub.f32 %v197, %v1100
    %v1102 = vand.u32 %v1101, 4294901760
    %1103 = vmatpush1.xpose.msra.mxu0 %v1102
    %1104 = vmatprep.subr.mxu0 0.0
    %v1105 = vand.u32 %v194, 4294901760
    %v1106 = vsub.f32 %v194, %v1105
    %v1107 = vand.u32 %v1106, 4294901760
    %1108 = vmatpush1.xpose.msra.mxu0 %v1107
    %1109 = vmatprep.subr.mxu0 0.0
    %v1110 = vand.u32 %v191, 4294901760
    %v1111 = vsub.f32 %v191, %v1110
    %v1112 = vand.u32 %v1111, 4294901760
    %1113 = vmatpush1.xpose.msra.mxu0 %v1112
    %1114 = vmatprep.subr.mxu0 0.0
    %v1115 = vand.u32 %v188, 4294901760
    %v1116 = vsub.f32 %v188, %v1115
    %v1117 = vand.u32 %v1116, 4294901760
    %1118 = vmatpush1.xpose.msra.mxu0 %v1117
    %1119 = vmatprep.subr.mxu0 0.0
    %v1120 = vand.u32 %v185, 4294901760
    %v1121 = vsub.f32 %v185, %v1120
    %v1122 = vand.u32 %v1121, 4294901760
    %1123 = vmatpush1.xpose.msra.mxu0 %v1122
    %1124 = vmatprep.subr.mxu0 0.0
    %v1125 = vand.u32 %v182, 4294901760
    %v1126 = vsub.f32 %v182, %v1125
    %v1127 = vand.u32 %v1126, 4294901760
    %1128 = vmatpush1.xpose.msra.mxu0 %v1127
    %1129 = vmatprep.subr.mxu0 0.0
    %v1130 = vand.u32 %v179, 4294901760
    %v1131 = vsub.f32 %v179, %v1130
    %v1132 = vand.u32 %v1131, 4294901760
    %1133 = vmatpush1.xpose.msra.mxu0 %v1132
    %1134 = vmatprep.subr.mxu0 0.0
    %v1135 = vand.u32 %v176, 4294901760
    %v1136 = vsub.f32 %v176, %v1135
    %v1137 = vand.u32 %v1136, 4294901760
    %1138 = vmatpush1.xpose.msra.mxu0 %v1137
    %1139 = vmatprep.subr.mxu0 0.0
    %v1140 = vand.u32 %v173, 4294901760
    %v1141 = vsub.f32 %v173, %v1140
    %v1142 = vand.u32 %v1141, 4294901760
    %1143 = vmatpush1.xpose.msra.mxu0 %v1142
    %1144 = vmatprep.subr.mxu0 0.0
    %v1145 = vand.u32 %v170, 4294901760
    %v1146 = vsub.f32 %v170, %v1145
    %v1147 = vand.u32 %v1146, 4294901760
    %1148 = vmatpush1.xpose.msra.mxu0 %v1147
    %1149 = vmatprep.subr.mxu0 0.0
    %v1150 = vand.u32 %v167, 4294901760
    %v1151 = vsub.f32 %v167, %v1150
    %v1152 = vand.u32 %v1151, 4294901760
    %1153 = vmatpush1.xpose.msra.mxu0 %v1152
    %1154 = vmatprep.subr.mxu0 0.0
    %v1155 = vand.u32 %v164, 4294901760
    %v1156 = vsub.f32 %v164, %v1155
    %v1157 = vand.u32 %v1156, 4294901760
    %1158 = vmatpush1.xpose.msra.mxu0 %v1157
    %1159 = vmatprep.subr.mxu0 0.0
    %v1160 = vand.u32 %v161, 4294901760
    %v1161 = vsub.f32 %v161, %v1160
    %v1162 = vand.u32 %v1161, 4294901760
    %1163 = vmatpush1.xpose.msra.mxu0 %v1162
    %1164 = vmatprep.subr.mxu0 0.0
    %v1165 = vand.u32 %v254, 4294901760
    %v1166 = vsub.f32 %v254, %v1165
    %v1167 = vand.u32 %v1166, 4294901760
    %1168 = vmatpush2.xpose.msra.mxu0 %v1167
    %1169 = vmatprep.subr.mxu0 0.0
    %v1170 = vand.u32 %v251, 4294901760
    %v1171 = vsub.f32 %v251, %v1170
    %v1172 = vand.u32 %v1171, 4294901760
    %1173 = vmatpush2.xpose.msra.mxu0 %v1172
    %1174 = vmatprep.subr.mxu0 0.0
    %v1175 = vand.u32 %v248, 4294901760
    %v1176 = vsub.f32 %v248, %v1175
    %v1177 = vand.u32 %v1176, 4294901760
    %1178 = vmatpush2.xpose.msra.mxu0 %v1177
    %1179 = vmatprep.subr.mxu0 0.0
    %v1180 = vand.u32 %v245, 4294901760
    %v1181 = vsub.f32 %v245, %v1180
    %v1182 = vand.u32 %v1181, 4294901760
    %1183 = vmatpush2.xpose.msra.mxu0 %v1182
    %1184 = vmatprep.subr.mxu0 0.0
    %v1185 = vand.u32 %v242, 4294901760
    %v1186 = vsub.f32 %v242, %v1185
    %v1187 = vand.u32 %v1186, 4294901760
    %1188 = vmatpush2.xpose.msra.mxu0 %v1187
    %1189 = vmatprep.subr.mxu0 0.0
    %v1190 = vand.u32 %v239, 4294901760
    %v1191 = vsub.f32 %v239, %v1190
    %v1192 = vand.u32 %v1191, 4294901760
    %1193 = vmatpush2.xpose.msra.mxu0 %v1192
    %1194 = vmatprep.subr.mxu0 0.0
    %v1195 = vand.u32 %v236, 4294901760
    %v1196 = vsub.f32 %v236, %v1195
    %v1197 = vand.u32 %v1196, 4294901760
    %1198 = vmatpush2.xpose.msra.mxu0 %v1197
    %1199 = vmatprep.subr.mxu0 0.0
    %v1200 = vand.u32 %v233, 4294901760
    %v1201 = vsub.f32 %v233, %v1200
    %v1202 = vand.u32 %v1201, 4294901760
    %1203 = vmatpush2.xpose.msra.mxu0 %v1202
    %1204 = vmatprep.subr.mxu0 0.0
    %v1205 = vand.u32 %v230, 4294901760
    %v1206 = vsub.f32 %v230, %v1205
    %v1207 = vand.u32 %v1206, 4294901760
    %1208 = vmatpush2.xpose.msra.mxu0 %v1207
    %1209 = vmatprep.subr.mxu0 0.0
    %v1210 = vand.u32 %v227, 4294901760
    %v1211 = vsub.f32 %v227, %v1210
    %v1212 = vand.u32 %v1211, 4294901760
    %1213 = vmatpush2.xpose.msra.mxu0 %v1212
    %1214 = vmatprep.subr.mxu0 0.0
    %v1215 = vand.u32 %v224, 4294901760
    %v1216 = vsub.f32 %v224, %v1215
    %v1217 = vand.u32 %v1216, 4294901760
    %1218 = vmatpush2.xpose.msra.mxu0 %v1217
    %1219 = vmatprep.subr.mxu0 0.0
    %v1220 = vand.u32 %v221, 4294901760
    %v1221 = vsub.f32 %v221, %v1220
    %v1222 = vand.u32 %v1221, 4294901760
    %1223 = vmatpush2.xpose.msra.mxu0 %v1222
    %1224 = vmatprep.subr.mxu0 0.0
    %v1225 = vand.u32 %v218, 4294901760
    %v1226 = vsub.f32 %v218, %v1225
    %v1227 = vand.u32 %v1226, 4294901760
    %1228 = vmatpush2.xpose.msra.mxu0 %v1227
    %1229 = vmatprep.subr.mxu0 0.0
    %v1230 = vand.u32 %v215, 4294901760
    %v1231 = vsub.f32 %v215, %v1230
    %v1232 = vand.u32 %v1231, 4294901760
    %1233 = vmatpush2.xpose.msra.mxu0 %v1232
    %1234 = vmatprep.subr.mxu0 0.0
    %v1235 = vand.u32 %v212, 4294901760
    %v1236 = vsub.f32 %v212, %v1235
    %v1237 = vand.u32 %v1236, 4294901760
    %1238 = vmatpush2.xpose.msra.mxu0 %v1237
    %1239 = vmatprep.subr.mxu0 0.0
    %v1240 = vand.u32 %v209, 4294901760
    %v1241 = vsub.f32 %v209, %v1240
    %v1242 = vand.u32 %v1241, 4294901760
    %1243 = vmatpush2.xpose.msra.mxu0 %v1242
    %1244 = vmatprep.mubr.f32.mxu0 0.0
    %v1245 = vand.u32 %v137, 4294901760
    %1246 = vmatmul.mubr.f32.gmra.mxu0 %v1245
    %v1247 = vpop.f32.mrf.mxu0
    %v1248 = vadd.f32 %v1017, %v1247
    %v1249 = vpop.f32.mrf.mxu0
    %v1250 = vadd.f32 %v1019, %v1249
    %1251 = vmatprep.mubr.f32.mxu0 0.0
    %v1252 = vand.u32 %v140, 4294901760
    %1253 = vmatmul.mubr.f32.gmra.mxu0 %v1252
    %v1254 = vpop.f32.mrf.mxu0
    %v1255 = vadd.f32 %v1026, %v1254
    %v1256 = vpop.f32.mrf.mxu0
    %v1257 = vadd.f32 %v1028, %v1256
    %1258 = vmatprep.mubr.f32.mxu0 0.0
    %v1259 = vand.u32 %v143, 4294901760
    %1260 = vmatmul.mubr.f32.gmra.mxu0 %v1259
    %v1261 = vpop.f32.mrf.mxu0
    %v1262 = vadd.f32 %v1035, %v1261
    %v1263 = vpop.f32.mrf.mxu0
    %v1264 = vadd.f32 %v1037, %v1263
    %1265 = vmatprep.mubr.f32.mxu0 0.0
    %v1266 = vand.u32 %v146, 4294901760
    %1267 = vmatmul.mubr.f32.gmra.mxu0 %v1266
    %v1268 = vpop.f32.mrf.mxu0
    %v1269 = vadd.f32 %v1044, %v1268
    %v1270 = vpop.f32.mrf.mxu0
    %v1271 = vadd.f32 %v1046, %v1270
    %1272 = vmatprep.mubr.f32.mxu0 0.0
    %v1273 = vand.u32 %v149, 4294901760
    %1274 = vmatmul.mubr.f32.gmra.mxu0 %v1273
    %v1275 = vpop.f32.mrf.mxu0
    %v1276 = vadd.f32 %v1053, %v1275
    %v1277 = vpop.f32.mrf.mxu0
    %v1278 = vadd.f32 %v1055, %v1277
    %1279 = vmatprep.mubr.f32.mxu0 0.0
    %v1280 = vand.u32 %v152, 4294901760
    %1281 = vmatmul.mubr.f32.gmra.mxu0 %v1280
    %v1282 = vpop.f32.mrf.mxu0
    %v1283 = vadd.f32 %v1062, %v1282
    %v1284 = vpop.f32.mrf.mxu0
    %v1285 = vadd.f32 %v1064, %v1284
    %1286 = vmatprep.mubr.f32.mxu0 0.0
    %v1287 = vand.u32 %v155, 4294901760
    %1288 = vmatmul.mubr.f32.gmra.mxu0 %v1287
    %v1289 = vpop.f32.mrf.mxu0
    %v1290 = vadd.f32 %v1071, %v1289
    %v1291 = vpop.f32.mrf.mxu0
    %v1292 = vadd.f32 %v1073, %v1291
    %1293 = vmatprep.mubr.f32.mxu0 0.0
    %v1294 = vand.u32 %v158, 4294901760
    %1295 = vmatmul.mubr.f32.gmra.mxu0 %v1294
    %v1296 = vpop.f32.mrf.mxu0
    %v1297 = vadd.f32 %v1080, %v1296
    %v1298 = vpop.f32.mrf.mxu0
    %v1299 = vadd.f32 %v1082, %v1298
    %1300 = vdwg.mxu0
    %1301 = vmatprep.subr.mxu0 0.0
    %v1302 = vand.u32 %v206, 4294901760
    %1303 = vmatpush1.xpose.msra.mxu0 %v1302
    %1304 = vmatprep.subr.mxu0 0.0
    %v1305 = vand.u32 %v203, 4294901760
    %1306 = vmatpush1.xpose.msra.mxu0 %v1305
    %1307 = vmatprep.subr.mxu0 0.0
    %v1308 = vand.u32 %v200, 4294901760
    %1309 = vmatpush1.xpose.msra.mxu0 %v1308
    %1310 = vmatprep.subr.mxu0 0.0
    %v1311 = vand.u32 %v197, 4294901760
    %1312 = vmatpush1.xpose.msra.mxu0 %v1311
    %1313 = vmatprep.subr.mxu0 0.0
    %v1314 = vand.u32 %v194, 4294901760
    %1315 = vmatpush1.xpose.msra.mxu0 %v1314
    %1316 = vmatprep.subr.mxu0 0.0
    %v1317 = vand.u32 %v191, 4294901760
    %1318 = vmatpush1.xpose.msra.mxu0 %v1317
    %1319 = vmatprep.subr.mxu0 0.0
    %v1320 = vand.u32 %v188, 4294901760
    %1321 = vmatpush1.xpose.msra.mxu0 %v1320
    %1322 = vmatprep.subr.mxu0 0.0
    %v1323 = vand.u32 %v185, 4294901760
    %1324 = vmatpush1.xpose.msra.mxu0 %v1323
    %1325 = vmatprep.subr.mxu0 0.0
    %v1326 = vand.u32 %v182, 4294901760
    %1327 = vmatpush1.xpose.msra.mxu0 %v1326
    %1328 = vmatprep.subr.mxu0 0.0
    %v1329 = vand.u32 %v179, 4294901760
    %1330 = vmatpush1.xpose.msra.mxu0 %v1329
    %1331 = vmatprep.subr.mxu0 0.0
    %v1332 = vand.u32 %v176, 4294901760
    %1333 = vmatpush1.xpose.msra.mxu0 %v1332
    %1334 = vmatprep.subr.mxu0 0.0
    %v1335 = vand.u32 %v173, 4294901760
    %1336 = vmatpush1.xpose.msra.mxu0 %v1335
    %1337 = vmatprep.subr.mxu0 0.0
    %v1338 = vand.u32 %v170, 4294901760
    %1339 = vmatpush1.xpose.msra.mxu0 %v1338
    %1340 = vmatprep.subr.mxu0 0.0
    %v1341 = vand.u32 %v167, 4294901760
    %1342 = vmatpush1.xpose.msra.mxu0 %v1341
    %1343 = vmatprep.subr.mxu0 0.0
    %v1344 = vand.u32 %v164, 4294901760
    %1345 = vmatpush1.xpose.msra.mxu0 %v1344
    %1346 = vmatprep.subr.mxu0 0.0
    %v1347 = vand.u32 %v161, 4294901760
    %1348 = vmatpush1.xpose.msra.mxu0 %v1347
    %1349 = vmatprep.subr.mxu0 0.0
    %v1350 = vand.u32 %v254, 4294901760
    %1351 = vmatpush2.xpose.msra.mxu0 %v1350
    %1352 = vmatprep.subr.mxu0 0.0
    %v1353 = vand.u32 %v251, 4294901760
    %1354 = vmatpush2.xpose.msra.mxu0 %v1353
    %1355 = vmatprep.subr.mxu0 0.0
    %v1356 = vand.u32 %v248, 4294901760
    %1357 = vmatpush2.xpose.msra.mxu0 %v1356
    %1358 = vmatprep.subr.mxu0 0.0
    %v1359 = vand.u32 %v245, 4294901760
    %1360 = vmatpush2.xpose.msra.mxu0 %v1359
    %1361 = vmatprep.subr.mxu0 0.0
    %v1362 = vand.u32 %v242, 4294901760
    %1363 = vmatpush2.xpose.msra.mxu0 %v1362
    %1364 = vmatprep.subr.mxu0 0.0
    %v1365 = vand.u32 %v239, 4294901760
    %1366 = vmatpush2.xpose.msra.mxu0 %v1365
    %1367 = vmatprep.subr.mxu0 0.0
    %v1368 = vand.u32 %v236, 4294901760
    %1369 = vmatpush2.xpose.msra.mxu0 %v1368
    %1370 = vmatprep.subr.mxu0 0.0
    %v1371 = vand.u32 %v233, 4294901760
    %1372 = vmatpush2.xpose.msra.mxu0 %v1371
    %1373 = vmatprep.subr.mxu0 0.0
    %v1374 = vand.u32 %v230, 4294901760
    %1375 = vmatpush2.xpose.msra.mxu0 %v1374
    %1376 = vmatprep.subr.mxu0 0.0
    %v1377 = vand.u32 %v227, 4294901760
    %1378 = vmatpush2.xpose.msra.mxu0 %v1377
    %1379 = vmatprep.subr.mxu0 0.0
    %v1380 = vand.u32 %v224, 4294901760
    %1381 = vmatpush2.xpose.msra.mxu0 %v1380
    %1382 = vmatprep.subr.mxu0 0.0
    %v1383 = vand.u32 %v221, 4294901760
    %1384 = vmatpush2.xpose.msra.mxu0 %v1383
    %1385 = vmatprep.subr.mxu0 0.0
    %v1386 = vand.u32 %v218, 4294901760
    %1387 = vmatpush2.xpose.msra.mxu0 %v1386
    %1388 = vmatprep.subr.mxu0 0.0
    %v1389 = vand.u32 %v215, 4294901760
    %1390 = vmatpush2.xpose.msra.mxu0 %v1389
    %1391 = vmatprep.subr.mxu0 0.0
    %v1392 = vand.u32 %v212, 4294901760
    %1393 = vmatpush2.xpose.msra.mxu0 %v1392
    %1394 = vmatprep.subr.mxu0 0.0
    %v1395 = vand.u32 %v209, 4294901760
    %1396 = vmatpush2.xpose.msra.mxu0 %v1395
    %1397 = vmatprep.mubr.f32.mxu0 0.0
    %v1398 = vand.u32 %v137, 4294901760
    %1399 = vmatmul.mubr.f32.gmra.mxu0 %v1398
    %v1400 = vpop.f32.mrf.mxu0
    %v1401 = vadd.f32 %v1248, %v1400
    %v1402 = vpop.f32.mrf.mxu0
    %v1403 = vadd.f32 %v1250, %v1402
    %1404 = vmatprep.mubr.f32.mxu0 0.0
    %v1405 = vand.u32 %v140, 4294901760
    %1406 = vmatmul.mubr.f32.gmra.mxu0 %v1405
    %v1407 = vpop.f32.mrf.mxu0
    %v1408 = vadd.f32 %v1255, %v1407
    %v1409 = vpop.f32.mrf.mxu0
    %v1410 = vadd.f32 %v1257, %v1409
    %1411 = vmatprep.mubr.f32.mxu0 0.0
    %v1412 = vand.u32 %v143, 4294901760
    %1413 = vmatmul.mubr.f32.gmra.mxu0 %v1412
    %v1414 = vpop.f32.mrf.mxu0
    %v1415 = vadd.f32 %v1262, %v1414
    %v1416 = vpop.f32.mrf.mxu0
    %v1417 = vadd.f32 %v1264, %v1416
    %1418 = vmatprep.mubr.f32.mxu0 0.0
    %v1419 = vand.u32 %v146, 4294901760
    %1420 = vmatmul.mubr.f32.gmra.mxu0 %v1419
    %v1421 = vpop.f32.mrf.mxu0
    %v1422 = vadd.f32 %v1269, %v1421
    %v1423 = vpop.f32.mrf.mxu0
    %v1424 = vadd.f32 %v1271, %v1423
    %1425 = vmatprep.mubr.f32.mxu0 0.0
    %v1426 = vand.u32 %v149, 4294901760
    %1427 = vmatmul.mubr.f32.gmra.mxu0 %v1426
    %v1428 = vpop.f32.mrf.mxu0
    %v1429 = vadd.f32 %v1276, %v1428
    %v1430 = vpop.f32.mrf.mxu0
    %v1431 = vadd.f32 %v1278, %v1430
    %1432 = vmatprep.mubr.f32.mxu0 0.0
    %v1433 = vand.u32 %v152, 4294901760
    %1434 = vmatmul.mubr.f32.gmra.mxu0 %v1433
    %v1435 = vpop.f32.mrf.mxu0
    %v1436 = vadd.f32 %v1283, %v1435
    %v1437 = vpop.f32.mrf.mxu0
    %v1438 = vadd.f32 %v1285, %v1437
    %1439 = vmatprep.mubr.f32.mxu0 0.0
    %v1440 = vand.u32 %v155, 4294901760
    %1441 = vmatmul.mubr.f32.gmra.mxu0 %v1440
    %v1442 = vpop.f32.mrf.mxu0
    %v1443 = vadd.f32 %v1290, %v1442
    %v1444 = vpop.f32.mrf.mxu0
    %v1445 = vadd.f32 %v1292, %v1444
    %1446 = vmatprep.mubr.f32.mxu0 0.0
    %v1447 = vand.u32 %v158, 4294901760
    %1448 = vmatmul.mubr.f32.gmra.mxu0 %v1447
    %v1449 = vpop.f32.mrf.mxu0
    %v1450 = vadd.f32 %v1297, %v1449
    %v1451 = vpop.f32.mrf.mxu0
    %v1452 = vadd.f32 %v1299, %v1451
    %1453 = vdwg.mxu0
    %v1454 = vmax.f32 %v1401, 0.0
    %v1455 = vmax.f32 %v1403, 0.0
    %v1456 = vmax.f32 %v1408, 0.0
    %v1457 = vmax.f32 %v1410, 0.0
    %v1458 = vmax.f32 %v1415, 0.0
    %v1459 = vmax.f32 %v1417, 0.0
    %v1460 = vmax.f32 %v1422, 0.0
    %v1461 = vmax.f32 %v1424, 0.0
    %v1462 = vmax.f32 %v1429, 0.0
    %v1463 = vmax.f32 %v1431, 0.0
    %v1464 = vmax.f32 %v1436, 0.0
    %v1465 = vmax.f32 %v1438, 0.0
    %v1466 = vmax.f32 %v1443, 0.0
    %v1467 = vmax.f32 %v1445, 0.0
    %v1468 = vmax.f32 %v1450, 0.0
    %v1469 = vmax.f32 %v1452, 0.0
    %1471 = vset.pattern.permute.xlu0 0
    %1472 = vperm.xlu0 %1471, %v53
    %v1473 = vpop.permute.xlu0 %1472
    %1476 = vset.pattern.permute.xlu0 0
    %1477 = vperm.xlu0 %1476, %v54
    %v1478 = vpop.permute.xlu0 %1477
    %1481 = vset.pattern.permute.xlu0 0
    %1482 = vperm.xlu0 %1481, %v55
    %v1483 = vpop.permute.xlu0 %1482
    %1486 = vset.pattern.permute.xlu0 0
    %1487 = vperm.xlu0 %1486, %v56
    %v1488 = vpop.permute.xlu0 %1487
    %1491 = vset.pattern.permute.xlu0 0
    %1492 = vperm.xlu0 %1491, %v57
    %v1493 = vpop.permute.xlu0 %1492
    %1496 = vset.pattern.permute.xlu0 0
    %1497 = vperm.xlu0 %1496, %v58
    %v1498 = vpop.permute.xlu0 %1497
    %1501 = vset.pattern.permute.xlu0 0
    %1502 = vperm.xlu0 %1501, %v59
    %v1503 = vpop.permute.xlu0 %1502
    %1506 = vset.pattern.permute.xlu0 0
    %1507 = vperm.xlu0 %1506, %v60
    %v1508 = vpop.permute.xlu0 %1507
    %vm1510 = vcmask 523264
    %v1512 = vsel %vm1510, %v35, 0
    %v1515 = vsel %vm1510, %v36, 0
    %v1518 = vsel %vm1510, %v37, 0
    %v1521 = vsel %vm1510, %v38, 0
    %v1524 = vsel %vm1510, %v39, 0
    %v1527 = vsel %vm1510, %v40, 0
    %v1530 = vsel %vm1510, %v41, 0
    %v1533 = vsel %vm1510, %v42, 0
    %1535 = vmatprep.subr.mxu0 0.0
    %1536 = vmatpush1.msra.mxu0 0.0
    %1537 = vmatprep.subr.mxu0 0.0
    %1538 = vmatpush1.msra.mxu0 0.0
    %1539 = vmatprep.subr.mxu0 0.0
    %1540 = vmatpush1.msra.mxu0 0.0
    %1541 = vmatprep.subr.mxu0 0.0
    %1542 = vmatpush1.msra.mxu0 0.0
    %1543 = vmatprep.subr.mxu0 0.0
    %1544 = vmatpush1.msra.mxu0 0.0
    %1545 = vmatprep.subr.mxu0 0.0
    %1546 = vmatpush1.msra.mxu0 0.0
    %1547 = vmatprep.subr.mxu0 0.0
    %1548 = vmatpush1.msra.mxu0 0.0
    %1549 = vmatprep.subr.mxu0 0.0
    %1550 = vmatpush1.msra.mxu0 0.0
    %v1551 = vand.u32 %v1469, 4294901760
    %1552 = vmatprep.subr.mxu0 %v1551
    %v1553 = vand.u32 %v1468, 4294901760
    %1554 = vmatpush1.msra.mxu0 %v1553
    %v1555 = vand.u32 %v1467, 4294901760
    %1556 = vmatprep.subr.mxu0 %v1555
    %v1557 = vand.u32 %v1466, 4294901760
    %1558 = vmatpush1.msra.mxu0 %v1557
    %v1559 = vand.u32 %v1465, 4294901760
    %1560 = vmatprep.subr.mxu0 %v1559
    %v1561 = vand.u32 %v1464, 4294901760
    %1562 = vmatpush1.msra.mxu0 %v1561
    %v1563 = vand.u32 %v1463, 4294901760
    %1564 = vmatprep.subr.mxu0 %v1563
    %v1565 = vand.u32 %v1462, 4294901760
    %1566 = vmatpush1.msra.mxu0 %v1565
    %v1567 = vand.u32 %v1461, 4294901760
    %1568 = vmatprep.subr.mxu0 %v1567
    %v1569 = vand.u32 %v1460, 4294901760
    %1570 = vmatpush1.msra.mxu0 %v1569
    %v1571 = vand.u32 %v1459, 4294901760
    %1572 = vmatprep.subr.mxu0 %v1571
    %v1573 = vand.u32 %v1458, 4294901760
    %1574 = vmatpush1.msra.mxu0 %v1573
    %v1575 = vand.u32 %v1457, 4294901760
    %1576 = vmatprep.subr.mxu0 %v1575
    %v1577 = vand.u32 %v1456, 4294901760
    %1578 = vmatpush1.msra.mxu0 %v1577
    %v1579 = vand.u32 %v1455, 4294901760
    %1580 = vmatprep.subr.mxu0 %v1579
    %v1581 = vand.u32 %v1454, 4294901760
    %1582 = vmatpush1.msra.mxu0 %v1581
    %1583 = vmatprep.subr.mxu0 0.0
    %1584 = vmatpush2.msra.mxu0 0.0
    %1585 = vmatprep.subr.mxu0 0.0
    %1586 = vmatpush2.msra.mxu0 0.0
    %1587 = vmatprep.subr.mxu0 0.0
    %1588 = vmatpush2.msra.mxu0 0.0
    %1589 = vmatprep.subr.mxu0 0.0
    %1590 = vmatpush2.msra.mxu0 0.0
    %1591 = vmatprep.subr.mxu0 0.0
    %1592 = vmatpush2.msra.mxu0 0.0
    %1593 = vmatprep.subr.mxu0 0.0
    %1594 = vmatpush2.msra.mxu0 0.0
    %1595 = vmatprep.subr.mxu0 0.0
    %1596 = vmatpush2.msra.mxu0 0.0
    %1597 = vmatprep.subr.mxu0 0.0
    %1598 = vmatpush2.msra.mxu0 0.0
    %1599 = vmatprep.subr.mxu0 0.0
    %1600 = vmatpush2.msra.mxu0 0.0
    %1601 = vmatprep.subr.mxu0 0.0
    %1602 = vmatpush2.msra.mxu0 0.0
    %1603 = vmatprep.subr.mxu0 0.0
    %1604 = vmatpush2.msra.mxu0 0.0
    %1605 = vmatprep.subr.mxu0 0.0
    %1606 = vmatpush2.msra.mxu0 0.0
    %1607 = vmatprep.subr.mxu0 0.0
    %1608 = vmatpush2.msra.mxu0 0.0
    %1609 = vmatprep.subr.mxu0 0.0
    %1610 = vmatpush2.msra.mxu0 0.0
    %1611 = vmatprep.subr.mxu0 0.0
    %1612 = vmatpush2.msra.mxu0 0.0
    %1613 = vmatprep.subr.mxu0 0.0
    %1614 = vmatpush2.msra.mxu0 0.0
    %1615 = vmatprep.mubr.f32.mxu0 0.0
    %v1616 = vand.u32 %v1512, 4294901760
    %v1617 = vsub.f32 %v1512, %v1616
    %v1618 = vand.u32 %v1617, 4294901760
    %v1619 = vsub.f32 %v1617, %v1618
    %v1620 = vand.u32 %v1619, 4294901760
    %1621 = vmatmul.mubr.f32.gmra.mxu0 %v1620
    %v1622 = vpop.f32.mrf.mxu0
    %v1623 = vadd.f32 %v1473, %v1622
    %v1624 = vpop.f32.mrf.mxu0
    %v1625 = vadd.f32 %v1473, %v1624
    %1626 = vmatprep.mubr.f32.mxu0 0.0
    %v1627 = vand.u32 %v1515, 4294901760
    %v1628 = vsub.f32 %v1515, %v1627
    %v1629 = vand.u32 %v1628, 4294901760
    %v1630 = vsub.f32 %v1628, %v1629
    %v1631 = vand.u32 %v1630, 4294901760
    %1632 = vmatmul.mubr.f32.gmra.mxu0 %v1631
    %v1633 = vpop.f32.mrf.mxu0
    %v1634 = vadd.f32 %v1478, %v1633
    %v1635 = vpop.f32.mrf.mxu0
    %v1636 = vadd.f32 %v1478, %v1635
    %1637 = vmatprep.mubr.f32.mxu0 0.0
    %v1638 = vand.u32 %v1518, 4294901760
    %v1639 = vsub.f32 %v1518, %v1638
    %v1640 = vand.u32 %v1639, 4294901760
    %v1641 = vsub.f32 %v1639, %v1640
    %v1642 = vand.u32 %v1641, 4294901760
    %1643 = vmatmul.mubr.f32.gmra.mxu0 %v1642
    %v1644 = vpop.f32.mrf.mxu0
    %v1645 = vadd.f32 %v1483, %v1644
    %v1646 = vpop.f32.mrf.mxu0
    %v1647 = vadd.f32 %v1483, %v1646
    %1648 = vmatprep.mubr.f32.mxu0 0.0
    %v1649 = vand.u32 %v1521, 4294901760
    %v1650 = vsub.f32 %v1521, %v1649
    %v1651 = vand.u32 %v1650, 4294901760
    %v1652 = vsub.f32 %v1650, %v1651
    %v1653 = vand.u32 %v1652, 4294901760
    %1654 = vmatmul.mubr.f32.gmra.mxu0 %v1653
    %v1655 = vpop.f32.mrf.mxu0
    %v1656 = vadd.f32 %v1488, %v1655
    %v1657 = vpop.f32.mrf.mxu0
    %v1658 = vadd.f32 %v1488, %v1657
    %1659 = vmatprep.mubr.f32.mxu0 0.0
    %v1660 = vand.u32 %v1524, 4294901760
    %v1661 = vsub.f32 %v1524, %v1660
    %v1662 = vand.u32 %v1661, 4294901760
    %v1663 = vsub.f32 %v1661, %v1662
    %v1664 = vand.u32 %v1663, 4294901760
    %1665 = vmatmul.mubr.f32.gmra.mxu0 %v1664
    %v1666 = vpop.f32.mrf.mxu0
    %v1667 = vadd.f32 %v1493, %v1666
    %v1668 = vpop.f32.mrf.mxu0
    %v1669 = vadd.f32 %v1493, %v1668
    %1670 = vmatprep.mubr.f32.mxu0 0.0
    %v1671 = vand.u32 %v1527, 4294901760
    %v1672 = vsub.f32 %v1527, %v1671
    %v1673 = vand.u32 %v1672, 4294901760
    %v1674 = vsub.f32 %v1672, %v1673
    %v1675 = vand.u32 %v1674, 4294901760
    %1676 = vmatmul.mubr.f32.gmra.mxu0 %v1675
    %v1677 = vpop.f32.mrf.mxu0
    %v1678 = vadd.f32 %v1498, %v1677
    %v1679 = vpop.f32.mrf.mxu0
    %v1680 = vadd.f32 %v1498, %v1679
    %1681 = vmatprep.mubr.f32.mxu0 0.0
    %v1682 = vand.u32 %v1530, 4294901760
    %v1683 = vsub.f32 %v1530, %v1682
    %v1684 = vand.u32 %v1683, 4294901760
    %v1685 = vsub.f32 %v1683, %v1684
    %v1686 = vand.u32 %v1685, 4294901760
    %1687 = vmatmul.mubr.f32.gmra.mxu0 %v1686
    %v1688 = vpop.f32.mrf.mxu0
    %v1689 = vadd.f32 %v1503, %v1688
    %v1690 = vpop.f32.mrf.mxu0
    %v1691 = vadd.f32 %v1503, %v1690
    %1692 = vmatprep.mubr.f32.mxu0 0.0
    %v1693 = vand.u32 %v1533, 4294901760
    %v1694 = vsub.f32 %v1533, %v1693
    %v1695 = vand.u32 %v1694, 4294901760
    %v1696 = vsub.f32 %v1694, %v1695
    %v1697 = vand.u32 %v1696, 4294901760
    %1698 = vmatmul.mubr.f32.gmra.mxu0 %v1697
    %v1699 = vpop.f32.mrf.mxu0
    %v1700 = vadd.f32 %v1508, %v1699
    %v1701 = vpop.f32.mrf.mxu0
    %v1702 = vadd.f32 %v1508, %v1701
    %1703 = vdwg.mxu0
    %1704 = vmatprep.subr.mxu0 0.0
    %1705 = vmatpush1.msra.mxu0 0.0
    %1706 = vmatprep.subr.mxu0 0.0
    %1707 = vmatpush1.msra.mxu0 0.0
    %1708 = vmatprep.subr.mxu0 0.0
    %1709 = vmatpush1.msra.mxu0 0.0
    %1710 = vmatprep.subr.mxu0 0.0
    %1711 = vmatpush1.msra.mxu0 0.0
    %1712 = vmatprep.subr.mxu0 0.0
    %1713 = vmatpush1.msra.mxu0 0.0
    %1714 = vmatprep.subr.mxu0 0.0
    %1715 = vmatpush1.msra.mxu0 0.0
    %1716 = vmatprep.subr.mxu0 0.0
    %1717 = vmatpush1.msra.mxu0 0.0
    %1718 = vmatprep.subr.mxu0 0.0
    %1719 = vmatpush1.msra.mxu0 0.0
    %v1720 = vand.u32 %v1469, 4294901760
    %v1721 = vsub.f32 %v1469, %v1720
    %v1722 = vand.u32 %v1721, 4294901760
    %v1723 = vsub.f32 %v1721, %v1722
    %v1724 = vand.u32 %v1723, 4294901760
    %1725 = vmatprep.subr.mxu0 %v1724
    %v1726 = vand.u32 %v1468, 4294901760
    %v1727 = vsub.f32 %v1468, %v1726
    %v1728 = vand.u32 %v1727, 4294901760
    %v1729 = vsub.f32 %v1727, %v1728
    %v1730 = vand.u32 %v1729, 4294901760
    %1731 = vmatpush1.msra.mxu0 %v1730
    %v1732 = vand.u32 %v1467, 4294901760
    %v1733 = vsub.f32 %v1467, %v1732
    %v1734 = vand.u32 %v1733, 4294901760
    %v1735 = vsub.f32 %v1733, %v1734
    %v1736 = vand.u32 %v1735, 4294901760
    %1737 = vmatprep.subr.mxu0 %v1736
    %v1738 = vand.u32 %v1466, 4294901760
    %v1739 = vsub.f32 %v1466, %v1738
    %v1740 = vand.u32 %v1739, 4294901760
    %v1741 = vsub.f32 %v1739, %v1740
    %v1742 = vand.u32 %v1741, 4294901760
    %1743 = vmatpush1.msra.mxu0 %v1742
    %v1744 = vand.u32 %v1465, 4294901760
    %v1745 = vsub.f32 %v1465, %v1744
    %v1746 = vand.u32 %v1745, 4294901760
    %v1747 = vsub.f32 %v1745, %v1746
    %v1748 = vand.u32 %v1747, 4294901760
    %1749 = vmatprep.subr.mxu0 %v1748
    %v1750 = vand.u32 %v1464, 4294901760
    %v1751 = vsub.f32 %v1464, %v1750
    %v1752 = vand.u32 %v1751, 4294901760
    %v1753 = vsub.f32 %v1751, %v1752
    %v1754 = vand.u32 %v1753, 4294901760
    %1755 = vmatpush1.msra.mxu0 %v1754
    %v1756 = vand.u32 %v1463, 4294901760
    %v1757 = vsub.f32 %v1463, %v1756
    %v1758 = vand.u32 %v1757, 4294901760
    %v1759 = vsub.f32 %v1757, %v1758
    %v1760 = vand.u32 %v1759, 4294901760
    %1761 = vmatprep.subr.mxu0 %v1760
    %v1762 = vand.u32 %v1462, 4294901760
    %v1763 = vsub.f32 %v1462, %v1762
    %v1764 = vand.u32 %v1763, 4294901760
    %v1765 = vsub.f32 %v1763, %v1764
    %v1766 = vand.u32 %v1765, 4294901760
    %1767 = vmatpush1.msra.mxu0 %v1766
    %v1768 = vand.u32 %v1461, 4294901760
    %v1769 = vsub.f32 %v1461, %v1768
    %v1770 = vand.u32 %v1769, 4294901760
    %v1771 = vsub.f32 %v1769, %v1770
    %v1772 = vand.u32 %v1771, 4294901760
    %1773 = vmatprep.subr.mxu0 %v1772
    %v1774 = vand.u32 %v1460, 4294901760
    %v1775 = vsub.f32 %v1460, %v1774
    %v1776 = vand.u32 %v1775, 4294901760
    %v1777 = vsub.f32 %v1775, %v1776
    %v1778 = vand.u32 %v1777, 4294901760
    %1779 = vmatpush1.msra.mxu0 %v1778
    %v1780 = vand.u32 %v1459, 4294901760
    %v1781 = vsub.f32 %v1459, %v1780
    %v1782 = vand.u32 %v1781, 4294901760
    %v1783 = vsub.f32 %v1781, %v1782
    %v1784 = vand.u32 %v1783, 4294901760
    %1785 = vmatprep.subr.mxu0 %v1784
    %v1786 = vand.u32 %v1458, 4294901760
    %v1787 = vsub.f32 %v1458, %v1786
    %v1788 = vand.u32 %v1787, 4294901760
    %v1789 = vsub.f32 %v1787, %v1788
    %v1790 = vand.u32 %v1789, 4294901760
    %1791 = vmatpush1.msra.mxu0 %v1790
    %v1792 = vand.u32 %v1457, 4294901760
    %v1793 = vsub.f32 %v1457, %v1792
    %v1794 = vand.u32 %v1793, 4294901760
    %v1795 = vsub.f32 %v1793, %v1794
    %v1796 = vand.u32 %v1795, 4294901760
    %1797 = vmatprep.subr.mxu0 %v1796
    %v1798 = vand.u32 %v1456, 4294901760
    %v1799 = vsub.f32 %v1456, %v1798
    %v1800 = vand.u32 %v1799, 4294901760
    %v1801 = vsub.f32 %v1799, %v1800
    %v1802 = vand.u32 %v1801, 4294901760
    %1803 = vmatpush1.msra.mxu0 %v1802
    %v1804 = vand.u32 %v1455, 4294901760
    %v1805 = vsub.f32 %v1455, %v1804
    %v1806 = vand.u32 %v1805, 4294901760
    %v1807 = vsub.f32 %v1805, %v1806
    %v1808 = vand.u32 %v1807, 4294901760
    %1809 = vmatprep.subr.mxu0 %v1808
    %v1810 = vand.u32 %v1454, 4294901760
    %v1811 = vsub.f32 %v1454, %v1810
    %v1812 = vand.u32 %v1811, 4294901760
    %v1813 = vsub.f32 %v1811, %v1812
    %v1814 = vand.u32 %v1813, 4294901760
    %1815 = vmatpush1.msra.mxu0 %v1814
    %1816 = vmatprep.subr.mxu0 0.0
    %1817 = vmatpush2.msra.mxu0 0.0
    %1818 = vmatprep.subr.mxu0 0.0
    %1819 = vmatpush2.msra.mxu0 0.0
    %1820 = vmatprep.subr.mxu0 0.0
    %1821 = vmatpush2.msra.mxu0 0.0
    %1822 = vmatprep.subr.mxu0 0.0
    %1823 = vmatpush2.msra.mxu0 0.0
    %1824 = vmatprep.subr.mxu0 0.0
    %1825 = vmatpush2.msra.mxu0 0.0
    %1826 = vmatprep.subr.mxu0 0.0
    %1827 = vmatpush2.msra.mxu0 0.0
    %1828 = vmatprep.subr.mxu0 0.0
    %1829 = vmatpush2.msra.mxu0 0.0
    %1830 = vmatprep.subr.mxu0 0.0
    %1831 = vmatpush2.msra.mxu0 0.0
    %1832 = vmatprep.subr.mxu0 0.0
    %1833 = vmatpush2.msra.mxu0 0.0
    %1834 = vmatprep.subr.mxu0 0.0
    %1835 = vmatpush2.msra.mxu0 0.0
    %1836 = vmatprep.subr.mxu0 0.0
    %1837 = vmatpush2.msra.mxu0 0.0
    %1838 = vmatprep.subr.mxu0 0.0
    %1839 = vmatpush2.msra.mxu0 0.0
    %1840 = vmatprep.subr.mxu0 0.0
    %1841 = vmatpush2.msra.mxu0 0.0
    %1842 = vmatprep.subr.mxu0 0.0
    %1843 = vmatpush2.msra.mxu0 0.0
    %1844 = vmatprep.subr.mxu0 0.0
    %1845 = vmatpush2.msra.mxu0 0.0
    %1846 = vmatprep.subr.mxu0 0.0
    %1847 = vmatpush2.msra.mxu0 0.0
    %1848 = vmatprep.mubr.f32.mxu0 0.0
    %v1849 = vand.u32 %v1512, 4294901760
    %1850 = vmatmul.mubr.f32.gmra.mxu0 %v1849
    %v1851 = vpop.f32.mrf.mxu0
    %v1852 = vadd.f32 %v1623, %v1851
    %v1853 = vpop.f32.mrf.mxu0
    %v1854 = vadd.f32 %v1625, %v1853
    %1855 = vmatprep.mubr.f32.mxu0 0.0
    %v1856 = vand.u32 %v1515, 4294901760
    %1857 = vmatmul.mubr.f32.gmra.mxu0 %v1856
    %v1858 = vpop.f32.mrf.mxu0
    %v1859 = vadd.f32 %v1634, %v1858
    %v1860 = vpop.f32.mrf.mxu0
    %v1861 = vadd.f32 %v1636, %v1860
    %1862 = vmatprep.mubr.f32.mxu0 0.0
    %v1863 = vand.u32 %v1518, 4294901760
    %1864 = vmatmul.mubr.f32.gmra.mxu0 %v1863
    %v1865 = vpop.f32.mrf.mxu0
    %v1866 = vadd.f32 %v1645, %v1865
    %v1867 = vpop.f32.mrf.mxu0
    %v1868 = vadd.f32 %v1647, %v1867
    %1869 = vmatprep.mubr.f32.mxu0 0.0
    %v1870 = vand.u32 %v1521, 4294901760
    %1871 = vmatmul.mubr.f32.gmra.mxu0 %v1870
    %v1872 = vpop.f32.mrf.mxu0
    %v1873 = vadd.f32 %v1656, %v1872
    %v1874 = vpop.f32.mrf.mxu0
    %v1875 = vadd.f32 %v1658, %v1874
    %1876 = vmatprep.mubr.f32.mxu0 0.0
    %v1877 = vand.u32 %v1524, 4294901760
    %1878 = vmatmul.mubr.f32.gmra.mxu0 %v1877
    %v1879 = vpop.f32.mrf.mxu0
    %v1880 = vadd.f32 %v1667, %v1879
    %v1881 = vpop.f32.mrf.mxu0
    %v1882 = vadd.f32 %v1669, %v1881
    %1883 = vmatprep.mubr.f32.mxu0 0.0
    %v1884 = vand.u32 %v1527, 4294901760
    %1885 = vmatmul.mubr.f32.gmra.mxu0 %v1884
    %v1886 = vpop.f32.mrf.mxu0
    %v1887 = vadd.f32 %v1678, %v1886
    %v1888 = vpop.f32.mrf.mxu0
    %v1889 = vadd.f32 %v1680, %v1888
    %1890 = vmatprep.mubr.f32.mxu0 0.0
    %v1891 = vand.u32 %v1530, 4294901760
    %1892 = vmatmul.mubr.f32.gmra.mxu0 %v1891
    %v1893 = vpop.f32.mrf.mxu0
    %v1894 = vadd.f32 %v1689, %v1893
    %v1895 = vpop.f32.mrf.mxu0
    %v1896 = vadd.f32 %v1691, %v1895
    %1897 = vmatprep.mubr.f32.mxu0 0.0
    %v1898 = vand.u32 %v1533, 4294901760
    %1899 = vmatmul.mubr.f32.gmra.mxu0 %v1898
    %v1900 = vpop.f32.mrf.mxu0
    %v1901 = vadd.f32 %v1700, %v1900
    %v1902 = vpop.f32.mrf.mxu0
    %v1903 = vadd.f32 %v1702, %v1902
    %1904 = vdwg.mxu0
    %1905 = vmatprep.subr.mxu0 0.0
    %1906 = vmatpush1.msra.mxu0 0.0
    %1907 = vmatprep.subr.mxu0 0.0
    %1908 = vmatpush1.msra.mxu0 0.0
    %1909 = vmatprep.subr.mxu0 0.0
    %1910 = vmatpush1.msra.mxu0 0.0
    %1911 = vmatprep.subr.mxu0 0.0
    %1912 = vmatpush1.msra.mxu0 0.0
    %1913 = vmatprep.subr.mxu0 0.0
    %1914 = vmatpush1.msra.mxu0 0.0
    %1915 = vmatprep.subr.mxu0 0.0
    %1916 = vmatpush1.msra.mxu0 0.0
    %1917 = vmatprep.subr.mxu0 0.0
    %1918 = vmatpush1.msra.mxu0 0.0
    %1919 = vmatprep.subr.mxu0 0.0
    %1920 = vmatpush1.msra.mxu0 0.0
    %v1921 = vand.u32 %v1469, 4294901760
    %v1922 = vsub.f32 %v1469, %v1921
    %1923 = vmatprep.subr.mxu0 %v1922
    %v1924 = vand.u32 %v1468, 4294901760
    %v1925 = vsub.f32 %v1468, %v1924
    %1926 = vmatpush1.msra.mxu0 %v1925
    %v1927 = vand.u32 %v1467, 4294901760
    %v1928 = vsub.f32 %v1467, %v1927
    %1929 = vmatprep.subr.mxu0 %v1928
    %v1930 = vand.u32 %v1466, 4294901760
    %v1931 = vsub.f32 %v1466, %v1930
    %1932 = vmatpush1.msra.mxu0 %v1931
    %v1933 = vand.u32 %v1465, 4294901760
    %v1934 = vsub.f32 %v1465, %v1933
    %1935 = vmatprep.subr.mxu0 %v1934
    %v1936 = vand.u32 %v1464, 4294901760
    %v1937 = vsub.f32 %v1464, %v1936
    %1938 = vmatpush1.msra.mxu0 %v1937
    %v1939 = vand.u32 %v1463, 4294901760
    %v1940 = vsub.f32 %v1463, %v1939
    %1941 = vmatprep.subr.mxu0 %v1940
    %v1942 = vand.u32 %v1462, 4294901760
    %v1943 = vsub.f32 %v1462, %v1942
    %1944 = vmatpush1.msra.mxu0 %v1943
    %v1945 = vand.u32 %v1461, 4294901760
    %v1946 = vsub.f32 %v1461, %v1945
    %1947 = vmatprep.subr.mxu0 %v1946
    %v1948 = vand.u32 %v1460, 4294901760
    %v1949 = vsub.f32 %v1460, %v1948
    %1950 = vmatpush1.msra.mxu0 %v1949
    %v1951 = vand.u32 %v1459, 4294901760
    %v1952 = vsub.f32 %v1459, %v1951
    %1953 = vmatprep.subr.mxu0 %v1952
    %v1954 = vand.u32 %v1458, 4294901760
    %v1955 = vsub.f32 %v1458, %v1954
    %1956 = vmatpush1.msra.mxu0 %v1955
    %v1957 = vand.u32 %v1457, 4294901760
    %v1958 = vsub.f32 %v1457, %v1957
    %1959 = vmatprep.subr.mxu0 %v1958
    %v1960 = vand.u32 %v1456, 4294901760
    %v1961 = vsub.f32 %v1456, %v1960
    %1962 = vmatpush1.msra.mxu0 %v1961
    %v1963 = vand.u32 %v1455, 4294901760
    %v1964 = vsub.f32 %v1455, %v1963
    %1965 = vmatprep.subr.mxu0 %v1964
    %v1966 = vand.u32 %v1454, 4294901760
    %v1967 = vsub.f32 %v1454, %v1966
    %1968 = vmatpush1.msra.mxu0 %v1967
    %1969 = vmatprep.subr.mxu0 0.0
    %1970 = vmatpush2.msra.mxu0 0.0
    %1971 = vmatprep.subr.mxu0 0.0
    %1972 = vmatpush2.msra.mxu0 0.0
    %1973 = vmatprep.subr.mxu0 0.0
    %1974 = vmatpush2.msra.mxu0 0.0
    %1975 = vmatprep.subr.mxu0 0.0
    %1976 = vmatpush2.msra.mxu0 0.0
    %1977 = vmatprep.subr.mxu0 0.0
    %1978 = vmatpush2.msra.mxu0 0.0
    %1979 = vmatprep.subr.mxu0 0.0
    %1980 = vmatpush2.msra.mxu0 0.0
    %1981 = vmatprep.subr.mxu0 0.0
    %1982 = vmatpush2.msra.mxu0 0.0
    %1983 = vmatprep.subr.mxu0 0.0
    %1984 = vmatpush2.msra.mxu0 0.0
    %1985 = vmatprep.subr.mxu0 0.0
    %1986 = vmatpush2.msra.mxu0 0.0
    %1987 = vmatprep.subr.mxu0 0.0
    %1988 = vmatpush2.msra.mxu0 0.0
    %1989 = vmatprep.subr.mxu0 0.0
    %1990 = vmatpush2.msra.mxu0 0.0
    %1991 = vmatprep.subr.mxu0 0.0
    %1992 = vmatpush2.msra.mxu0 0.0
    %1993 = vmatprep.subr.mxu0 0.0
    %1994 = vmatpush2.msra.mxu0 0.0
    %1995 = vmatprep.subr.mxu0 0.0
    %1996 = vmatpush2.msra.mxu0 0.0
    %1997 = vmatprep.subr.mxu0 0.0
    %1998 = vmatpush2.msra.mxu0 0.0
    %1999 = vmatprep.subr.mxu0 0.0
    %2000 = vmatpush2.msra.mxu0 0.0
    %2001 = vmatprep.mubr.f32.mxu0 0.0
    %v2002 = vand.u32 %v1512, 4294901760
    %v2003 = vsub.f32 %v1512, %v2002
    %2004 = vmatmul.mubr.f32.gmra.mxu0 %v2003
    %v2005 = vpop.f32.mrf.mxu0
    %v2006 = vadd.f32 %v1852, %v2005
    %v2007 = vpop.f32.mrf.mxu0
    %v2008 = vadd.f32 %v1854, %v2007
    %2009 = vmatprep.mubr.f32.mxu0 0.0
    %v2010 = vand.u32 %v1515, 4294901760
    %v2011 = vsub.f32 %v1515, %v2010
    %2012 = vmatmul.mubr.f32.gmra.mxu0 %v2011
    %v2013 = vpop.f32.mrf.mxu0
    %v2014 = vadd.f32 %v1859, %v2013
    %v2015 = vpop.f32.mrf.mxu0
    %v2016 = vadd.f32 %v1861, %v2015
    %2017 = vmatprep.mubr.f32.mxu0 0.0
    %v2018 = vand.u32 %v1518, 4294901760
    %v2019 = vsub.f32 %v1518, %v2018
    %2020 = vmatmul.mubr.f32.gmra.mxu0 %v2019
    %v2021 = vpop.f32.mrf.mxu0
    %v2022 = vadd.f32 %v1866, %v2021
    %v2023 = vpop.f32.mrf.mxu0
    %v2024 = vadd.f32 %v1868, %v2023
    %2025 = vmatprep.mubr.f32.mxu0 0.0
    %v2026 = vand.u32 %v1521, 4294901760
    %v2027 = vsub.f32 %v1521, %v2026
    %2028 = vmatmul.mubr.f32.gmra.mxu0 %v2027
    %v2029 = vpop.f32.mrf.mxu0
    %v2030 = vadd.f32 %v1873, %v2029
    %v2031 = vpop.f32.mrf.mxu0
    %v2032 = vadd.f32 %v1875, %v2031
    %2033 = vmatprep.mubr.f32.mxu0 0.0
    %v2034 = vand.u32 %v1524, 4294901760
    %v2035 = vsub.f32 %v1524, %v2034
    %2036 = vmatmul.mubr.f32.gmra.mxu0 %v2035
    %v2037 = vpop.f32.mrf.mxu0
    %v2038 = vadd.f32 %v1880, %v2037
    %v2039 = vpop.f32.mrf.mxu0
    %v2040 = vadd.f32 %v1882, %v2039
    %2041 = vmatprep.mubr.f32.mxu0 0.0
    %v2042 = vand.u32 %v1527, 4294901760
    %v2043 = vsub.f32 %v1527, %v2042
    %2044 = vmatmul.mubr.f32.gmra.mxu0 %v2043
    %v2045 = vpop.f32.mrf.mxu0
    %v2046 = vadd.f32 %v1887, %v2045
    %v2047 = vpop.f32.mrf.mxu0
    %v2048 = vadd.f32 %v1889, %v2047
    %2049 = vmatprep.mubr.f32.mxu0 0.0
    %v2050 = vand.u32 %v1530, 4294901760
    %v2051 = vsub.f32 %v1530, %v2050
    %2052 = vmatmul.mubr.f32.gmra.mxu0 %v2051
    %v2053 = vpop.f32.mrf.mxu0
    %v2054 = vadd.f32 %v1894, %v2053
    %v2055 = vpop.f32.mrf.mxu0
    %v2056 = vadd.f32 %v1896, %v2055
    %2057 = vmatprep.mubr.f32.mxu0 0.0
    %v2058 = vand.u32 %v1533, 4294901760
    %v2059 = vsub.f32 %v1533, %v2058
    %2060 = vmatmul.mubr.f32.gmra.mxu0 %v2059
    %v2061 = vpop.f32.mrf.mxu0
    %v2062 = vadd.f32 %v1901, %v2061
    %v2063 = vpop.f32.mrf.mxu0
    %v2064 = vadd.f32 %v1903, %v2063
    %2065 = vdwg.mxu0
    %2066 = vmatprep.subr.mxu0 0.0
    %2067 = vmatpush1.msra.mxu0 0.0
    %2068 = vmatprep.subr.mxu0 0.0
    %2069 = vmatpush1.msra.mxu0 0.0
    %2070 = vmatprep.subr.mxu0 0.0
    %2071 = vmatpush1.msra.mxu0 0.0
    %2072 = vmatprep.subr.mxu0 0.0
    %2073 = vmatpush1.msra.mxu0 0.0
    %2074 = vmatprep.subr.mxu0 0.0
    %2075 = vmatpush1.msra.mxu0 0.0
    %2076 = vmatprep.subr.mxu0 0.0
    %2077 = vmatpush1.msra.mxu0 0.0
    %2078 = vmatprep.subr.mxu0 0.0
    %2079 = vmatpush1.msra.mxu0 0.0
    %2080 = vmatprep.subr.mxu0 0.0
    %2081 = vmatpush1.msra.mxu0 0.0
    %v2082 = vand.u32 %v1469, 4294901760
    %2083 = vmatprep.subr.mxu0 %v2082
    %v2084 = vand.u32 %v1468, 4294901760
    %2085 = vmatpush1.msra.mxu0 %v2084
    %v2086 = vand.u32 %v1467, 4294901760
    %2087 = vmatprep.subr.mxu0 %v2086
    %v2088 = vand.u32 %v1466, 4294901760
    %2089 = vmatpush1.msra.mxu0 %v2088
    %v2090 = vand.u32 %v1465, 4294901760
    %2091 = vmatprep.subr.mxu0 %v2090
    %v2092 = vand.u32 %v1464, 4294901760
    %2093 = vmatpush1.msra.mxu0 %v2092
    %v2094 = vand.u32 %v1463, 4294901760
    %2095 = vmatprep.subr.mxu0 %v2094
    %v2096 = vand.u32 %v1462, 4294901760
    %2097 = vmatpush1.msra.mxu0 %v2096
    %v2098 = vand.u32 %v1461, 4294901760
    %2099 = vmatprep.subr.mxu0 %v2098
    %v2100 = vand.u32 %v1460, 4294901760
    %2101 = vmatpush1.msra.mxu0 %v2100
    %v2102 = vand.u32 %v1459, 4294901760
    %2103 = vmatprep.subr.mxu0 %v2102
    %v2104 = vand.u32 %v1458, 4294901760
    %2105 = vmatpush1.msra.mxu0 %v2104
    %v2106 = vand.u32 %v1457, 4294901760
    %2107 = vmatprep.subr.mxu0 %v2106
    %v2108 = vand.u32 %v1456, 4294901760
    %2109 = vmatpush1.msra.mxu0 %v2108
    %v2110 = vand.u32 %v1455, 4294901760
    %2111 = vmatprep.subr.mxu0 %v2110
    %v2112 = vand.u32 %v1454, 4294901760
    %2113 = vmatpush1.msra.mxu0 %v2112
    %2114 = vmatprep.subr.mxu0 0.0
    %2115 = vmatpush2.msra.mxu0 0.0
    %2116 = vmatprep.subr.mxu0 0.0
    %2117 = vmatpush2.msra.mxu0 0.0
    %2118 = vmatprep.subr.mxu0 0.0
    %2119 = vmatpush2.msra.mxu0 0.0
    %2120 = vmatprep.subr.mxu0 0.0
    %2121 = vmatpush2.msra.mxu0 0.0
    %2122 = vmatprep.subr.mxu0 0.0
    %2123 = vmatpush2.msra.mxu0 0.0
    %2124 = vmatprep.subr.mxu0 0.0
    %2125 = vmatpush2.msra.mxu0 0.0
    %2126 = vmatprep.subr.mxu0 0.0
    %2127 = vmatpush2.msra.mxu0 0.0
    %2128 = vmatprep.subr.mxu0 0.0
    %2129 = vmatpush2.msra.mxu0 0.0
    %2130 = vmatprep.subr.mxu0 0.0
    %2131 = vmatpush2.msra.mxu0 0.0
    %2132 = vmatprep.subr.mxu0 0.0
    %2133 = vmatpush2.msra.mxu0 0.0
    %2134 = vmatprep.subr.mxu0 0.0
    %2135 = vmatpush2.msra.mxu0 0.0
    %2136 = vmatprep.subr.mxu0 0.0
    %2137 = vmatpush2.msra.mxu0 0.0
    %2138 = vmatprep.subr.mxu0 0.0
    %2139 = vmatpush2.msra.mxu0 0.0
    %2140 = vmatprep.subr.mxu0 0.0
    %2141 = vmatpush2.msra.mxu0 0.0
    %2142 = vmatprep.subr.mxu0 0.0
    %2143 = vmatpush2.msra.mxu0 0.0
    %2144 = vmatprep.subr.mxu0 0.0
    %2145 = vmatpush2.msra.mxu0 0.0
    %2146 = vmatprep.mubr.f32.mxu0 0.0
    %v2147 = vand.u32 %v1512, 4294901760
    %v2148 = vsub.f32 %v1512, %v2147
    %v2149 = vand.u32 %v2148, 4294901760
    %2150 = vmatmul.mubr.f32.gmra.mxu0 %v2149
    %v2151 = vpop.f32.mrf.mxu0
    %v2152 = vadd.f32 %v2006, %v2151
    %v2153 = vpop.f32.mrf.mxu0
    %v2154 = vadd.f32 %v2008, %v2153
    %2155 = vmatprep.mubr.f32.mxu0 0.0
    %v2156 = vand.u32 %v1515, 4294901760
    %v2157 = vsub.f32 %v1515, %v2156
    %v2158 = vand.u32 %v2157, 4294901760
    %2159 = vmatmul.mubr.f32.gmra.mxu0 %v2158
    %v2160 = vpop.f32.mrf.mxu0
    %v2161 = vadd.f32 %v2014, %v2160
    %v2162 = vpop.f32.mrf.mxu0
    %v2163 = vadd.f32 %v2016, %v2162
    %2164 = vmatprep.mubr.f32.mxu0 0.0
    %v2165 = vand.u32 %v1518, 4294901760
    %v2166 = vsub.f32 %v1518, %v2165
    %v2167 = vand.u32 %v2166, 4294901760
    %2168 = vmatmul.mubr.f32.gmra.mxu0 %v2167
    %v2169 = vpop.f32.mrf.mxu0
    %v2170 = vadd.f32 %v2022, %v2169
    %v2171 = vpop.f32.mrf.mxu0
    %v2172 = vadd.f32 %v2024, %v2171
    %2173 = vmatprep.mubr.f32.mxu0 0.0
    %v2174 = vand.u32 %v1521, 4294901760
    %v2175 = vsub.f32 %v1521, %v2174
    %v2176 = vand.u32 %v2175, 4294901760
    %2177 = vmatmul.mubr.f32.gmra.mxu0 %v2176
    %v2178 = vpop.f32.mrf.mxu0
    %v2179 = vadd.f32 %v2030, %v2178
    %v2180 = vpop.f32.mrf.mxu0
    %v2181 = vadd.f32 %v2032, %v2180
    %2182 = vmatprep.mubr.f32.mxu0 0.0
    %v2183 = vand.u32 %v1524, 4294901760
    %v2184 = vsub.f32 %v1524, %v2183
    %v2185 = vand.u32 %v2184, 4294901760
    %2186 = vmatmul.mubr.f32.gmra.mxu0 %v2185
    %v2187 = vpop.f32.mrf.mxu0
    %v2188 = vadd.f32 %v2038, %v2187
    %v2189 = vpop.f32.mrf.mxu0
    %v2190 = vadd.f32 %v2040, %v2189
    %2191 = vmatprep.mubr.f32.mxu0 0.0
    %v2192 = vand.u32 %v1527, 4294901760
    %v2193 = vsub.f32 %v1527, %v2192
    %v2194 = vand.u32 %v2193, 4294901760
    %2195 = vmatmul.mubr.f32.gmra.mxu0 %v2194
    %v2196 = vpop.f32.mrf.mxu0
    %v2197 = vadd.f32 %v2046, %v2196
    %v2198 = vpop.f32.mrf.mxu0
    %v2199 = vadd.f32 %v2048, %v2198
    %2200 = vmatprep.mubr.f32.mxu0 0.0
    %v2201 = vand.u32 %v1530, 4294901760
    %v2202 = vsub.f32 %v1530, %v2201
    %v2203 = vand.u32 %v2202, 4294901760
    %2204 = vmatmul.mubr.f32.gmra.mxu0 %v2203
    %v2205 = vpop.f32.mrf.mxu0
    %v2206 = vadd.f32 %v2054, %v2205
    %v2207 = vpop.f32.mrf.mxu0
    %v2208 = vadd.f32 %v2056, %v2207
    %2209 = vmatprep.mubr.f32.mxu0 0.0
    %v2210 = vand.u32 %v1533, 4294901760
    %v2211 = vsub.f32 %v1533, %v2210
    %v2212 = vand.u32 %v2211, 4294901760
    %2213 = vmatmul.mubr.f32.gmra.mxu0 %v2212
    %v2214 = vpop.f32.mrf.mxu0
    %v2215 = vadd.f32 %v2062, %v2214
    %v2216 = vpop.f32.mrf.mxu0
    %v2217 = vadd.f32 %v2064, %v2216
    %2218 = vdwg.mxu0
    %2219 = vmatprep.subr.mxu0 0.0
    %2220 = vmatpush1.msra.mxu0 0.0
    %2221 = vmatprep.subr.mxu0 0.0
    %2222 = vmatpush1.msra.mxu0 0.0
    %2223 = vmatprep.subr.mxu0 0.0
    %2224 = vmatpush1.msra.mxu0 0.0
    %2225 = vmatprep.subr.mxu0 0.0
    %2226 = vmatpush1.msra.mxu0 0.0
    %2227 = vmatprep.subr.mxu0 0.0
    %2228 = vmatpush1.msra.mxu0 0.0
    %2229 = vmatprep.subr.mxu0 0.0
    %2230 = vmatpush1.msra.mxu0 0.0
    %2231 = vmatprep.subr.mxu0 0.0
    %2232 = vmatpush1.msra.mxu0 0.0
    %2233 = vmatprep.subr.mxu0 0.0
    %2234 = vmatpush1.msra.mxu0 0.0
    %v2235 = vand.u32 %v1469, 4294901760
    %v2236 = vsub.f32 %v1469, %v2235
    %v2237 = vand.u32 %v2236, 4294901760
    %2238 = vmatprep.subr.mxu0 %v2237
    %v2239 = vand.u32 %v1468, 4294901760
    %v2240 = vsub.f32 %v1468, %v2239
    %v2241 = vand.u32 %v2240, 4294901760
    %2242 = vmatpush1.msra.mxu0 %v2241
    %v2243 = vand.u32 %v1467, 4294901760
    %v2244 = vsub.f32 %v1467, %v2243
    %v2245 = vand.u32 %v2244, 4294901760
    %2246 = vmatprep.subr.mxu0 %v2245
    %v2247 = vand.u32 %v1466, 4294901760
    %v2248 = vsub.f32 %v1466, %v2247
    %v2249 = vand.u32 %v2248, 4294901760
    %2250 = vmatpush1.msra.mxu0 %v2249
    %v2251 = vand.u32 %v1465, 4294901760
    %v2252 = vsub.f32 %v1465, %v2251
    %v2253 = vand.u32 %v2252, 4294901760
    %2254 = vmatprep.subr.mxu0 %v2253
    %v2255 = vand.u32 %v1464, 4294901760
    %v2256 = vsub.f32 %v1464, %v2255
    %v2257 = vand.u32 %v2256, 4294901760
    %2258 = vmatpush1.msra.mxu0 %v2257
    %v2259 = vand.u32 %v1463, 4294901760
    %v2260 = vsub.f32 %v1463, %v2259
    %v2261 = vand.u32 %v2260, 4294901760
    %2262 = vmatprep.subr.mxu0 %v2261
    %v2263 = vand.u32 %v1462, 4294901760
    %v2264 = vsub.f32 %v1462, %v2263
    %v2265 = vand.u32 %v2264, 4294901760
    %2266 = vmatpush1.msra.mxu0 %v2265
    %v2267 = vand.u32 %v1461, 4294901760
    %v2268 = vsub.f32 %v1461, %v2267
    %v2269 = vand.u32 %v2268, 4294901760
    %2270 = vmatprep.subr.mxu0 %v2269
    %v2271 = vand.u32 %v1460, 4294901760
    %v2272 = vsub.f32 %v1460, %v2271
    %v2273 = vand.u32 %v2272, 4294901760
    %2274 = vmatpush1.msra.mxu0 %v2273
    %v2275 = vand.u32 %v1459, 4294901760
    %v2276 = vsub.f32 %v1459, %v2275
    %v2277 = vand.u32 %v2276, 4294901760
    %2278 = vmatprep.subr.mxu0 %v2277
    %v2279 = vand.u32 %v1458, 4294901760
    %v2280 = vsub.f32 %v1458, %v2279
    %v2281 = vand.u32 %v2280, 4294901760
    %2282 = vmatpush1.msra.mxu0 %v2281
    %v2283 = vand.u32 %v1457, 4294901760
    %v2284 = vsub.f32 %v1457, %v2283
    %v2285 = vand.u32 %v2284, 4294901760
    %2286 = vmatprep.subr.mxu0 %v2285
    %v2287 = vand.u32 %v1456, 4294901760
    %v2288 = vsub.f32 %v1456, %v2287
    %v2289 = vand.u32 %v2288, 4294901760
    %2290 = vmatpush1.msra.mxu0 %v2289
    %v2291 = vand.u32 %v1455, 4294901760
    %v2292 = vsub.f32 %v1455, %v2291
    %v2293 = vand.u32 %v2292, 4294901760
    %2294 = vmatprep.subr.mxu0 %v2293
    %v2295 = vand.u32 %v1454, 4294901760
    %v2296 = vsub.f32 %v1454, %v2295
    %v2297 = vand.u32 %v2296, 4294901760
    %2298 = vmatpush1.msra.mxu0 %v2297
    %2299 = vmatprep.subr.mxu0 0.0
    %2300 = vmatpush2.msra.mxu0 0.0
    %2301 = vmatprep.subr.mxu0 0.0
    %2302 = vmatpush2.msra.mxu0 0.0
    %2303 = vmatprep.subr.mxu0 0.0
    %2304 = vmatpush2.msra.mxu0 0.0
    %2305 = vmatprep.subr.mxu0 0.0
    %2306 = vmatpush2.msra.mxu0 0.0
    %2307 = vmatprep.subr.mxu0 0.0
    %2308 = vmatpush2.msra.mxu0 0.0
    %2309 = vmatprep.subr.mxu0 0.0
    %2310 = vmatpush2.msra.mxu0 0.0
    %2311 = vmatprep.subr.mxu0 0.0
    %2312 = vmatpush2.msra.mxu0 0.0
    %2313 = vmatprep.subr.mxu0 0.0
    %2314 = vmatpush2.msra.mxu0 0.0
    %2315 = vmatprep.subr.mxu0 0.0
    %2316 = vmatpush2.msra.mxu0 0.0
    %2317 = vmatprep.subr.mxu0 0.0
    %2318 = vmatpush2.msra.mxu0 0.0
    %2319 = vmatprep.subr.mxu0 0.0
    %2320 = vmatpush2.msra.mxu0 0.0
    %2321 = vmatprep.subr.mxu0 0.0
    %2322 = vmatpush2.msra.mxu0 0.0
    %2323 = vmatprep.subr.mxu0 0.0
    %2324 = vmatpush2.msra.mxu0 0.0
    %2325 = vmatprep.subr.mxu0 0.0
    %2326 = vmatpush2.msra.mxu0 0.0
    %2327 = vmatprep.subr.mxu0 0.0
    %2328 = vmatpush2.msra.mxu0 0.0
    %2329 = vmatprep.subr.mxu0 0.0
    %2330 = vmatpush2.msra.mxu0 0.0
    %2331 = vmatprep.mubr.f32.mxu0 0.0
    %v2332 = vand.u32 %v1512, 4294901760
    %2333 = vmatmul.mubr.f32.gmra.mxu0 %v2332
    %v2334 = vpop.f32.mrf.mxu0
    %v2335 = vadd.f32 %v2152, %v2334
    %v2336 = vpop.f32.mrf.mxu0
    %v2337 = vadd.f32 %v2154, %v2336
    %2338 = vmatprep.mubr.f32.mxu0 0.0
    %v2339 = vand.u32 %v1515, 4294901760
    %2340 = vmatmul.mubr.f32.gmra.mxu0 %v2339
    %v2341 = vpop.f32.mrf.mxu0
    %v2342 = vadd.f32 %v2161, %v2341
    %v2343 = vpop.f32.mrf.mxu0
    %v2344 = vadd.f32 %v2163, %v2343
    %2345 = vmatprep.mubr.f32.mxu0 0.0
    %v2346 = vand.u32 %v1518, 4294901760
    %2347 = vmatmul.mubr.f32.gmra.mxu0 %v2346
    %v2348 = vpop.f32.mrf.mxu0
    %v2349 = vadd.f32 %v2170, %v2348
    %v2350 = vpop.f32.mrf.mxu0
    %v2351 = vadd.f32 %v2172, %v2350
    %2352 = vmatprep.mubr.f32.mxu0 0.0
    %v2353 = vand.u32 %v1521, 4294901760
    %2354 = vmatmul.mubr.f32.gmra.mxu0 %v2353
    %v2355 = vpop.f32.mrf.mxu0
    %v2356 = vadd.f32 %v2179, %v2355
    %v2357 = vpop.f32.mrf.mxu0
    %v2358 = vadd.f32 %v2181, %v2357
    %2359 = vmatprep.mubr.f32.mxu0 0.0
    %v2360 = vand.u32 %v1524, 4294901760
    %2361 = vmatmul.mubr.f32.gmra.mxu0 %v2360
    %v2362 = vpop.f32.mrf.mxu0
    %v2363 = vadd.f32 %v2188, %v2362
    %v2364 = vpop.f32.mrf.mxu0
    %v2365 = vadd.f32 %v2190, %v2364
    %2366 = vmatprep.mubr.f32.mxu0 0.0
    %v2367 = vand.u32 %v1527, 4294901760
    %2368 = vmatmul.mubr.f32.gmra.mxu0 %v2367
    %v2369 = vpop.f32.mrf.mxu0
    %v2370 = vadd.f32 %v2197, %v2369
    %v2371 = vpop.f32.mrf.mxu0
    %v2372 = vadd.f32 %v2199, %v2371
    %2373 = vmatprep.mubr.f32.mxu0 0.0
    %v2374 = vand.u32 %v1530, 4294901760
    %2375 = vmatmul.mubr.f32.gmra.mxu0 %v2374
    %v2376 = vpop.f32.mrf.mxu0
    %v2377 = vadd.f32 %v2206, %v2376
    %v2378 = vpop.f32.mrf.mxu0
    %v2379 = vadd.f32 %v2208, %v2378
    %2380 = vmatprep.mubr.f32.mxu0 0.0
    %v2381 = vand.u32 %v1533, 4294901760
    %2382 = vmatmul.mubr.f32.gmra.mxu0 %v2381
    %v2383 = vpop.f32.mrf.mxu0
    %v2384 = vadd.f32 %v2215, %v2383
    %v2385 = vpop.f32.mrf.mxu0
    %v2386 = vadd.f32 %v2217, %v2385
    %2387 = vdwg.mxu0
    %2388 = vmatprep.subr.mxu0 0.0
    %2389 = vmatpush1.msra.mxu0 0.0
    %2390 = vmatprep.subr.mxu0 0.0
    %2391 = vmatpush1.msra.mxu0 0.0
    %2392 = vmatprep.subr.mxu0 0.0
    %2393 = vmatpush1.msra.mxu0 0.0
    %2394 = vmatprep.subr.mxu0 0.0
    %2395 = vmatpush1.msra.mxu0 0.0
    %2396 = vmatprep.subr.mxu0 0.0
    %2397 = vmatpush1.msra.mxu0 0.0
    %2398 = vmatprep.subr.mxu0 0.0
    %2399 = vmatpush1.msra.mxu0 0.0
    %2400 = vmatprep.subr.mxu0 0.0
    %2401 = vmatpush1.msra.mxu0 0.0
    %2402 = vmatprep.subr.mxu0 0.0
    %2403 = vmatpush1.msra.mxu0 0.0
    %v2404 = vand.u32 %v1469, 4294901760
    %2405 = vmatprep.subr.mxu0 %v2404
    %v2406 = vand.u32 %v1468, 4294901760
    %2407 = vmatpush1.msra.mxu0 %v2406
    %v2408 = vand.u32 %v1467, 4294901760
    %2409 = vmatprep.subr.mxu0 %v2408
    %v2410 = vand.u32 %v1466, 4294901760
    %2411 = vmatpush1.msra.mxu0 %v2410
    %v2412 = vand.u32 %v1465, 4294901760
    %2413 = vmatprep.subr.mxu0 %v2412
    %v2414 = vand.u32 %v1464, 4294901760
    %2415 = vmatpush1.msra.mxu0 %v2414
    %v2416 = vand.u32 %v1463, 4294901760
    %2417 = vmatprep.subr.mxu0 %v2416
    %v2418 = vand.u32 %v1462, 4294901760
    %2419 = vmatpush1.msra.mxu0 %v2418
    %v2420 = vand.u32 %v1461, 4294901760
    %2421 = vmatprep.subr.mxu0 %v2420
    %v2422 = vand.u32 %v1460, 4294901760
    %2423 = vmatpush1.msra.mxu0 %v2422
    %v2424 = vand.u32 %v1459, 4294901760
    %2425 = vmatprep.subr.mxu0 %v2424
    %v2426 = vand.u32 %v1458, 4294901760
    %2427 = vmatpush1.msra.mxu0 %v2426
    %v2428 = vand.u32 %v1457, 4294901760
    %2429 = vmatprep.subr.mxu0 %v2428
    %v2430 = vand.u32 %v1456, 4294901760
    %2431 = vmatpush1.msra.mxu0 %v2430
    %v2432 = vand.u32 %v1455, 4294901760
    %2433 = vmatprep.subr.mxu0 %v2432
    %v2434 = vand.u32 %v1454, 4294901760
    %2435 = vmatpush1.msra.mxu0 %v2434
    %2436 = vmatprep.subr.mxu0 0.0
    %2437 = vmatpush2.msra.mxu0 0.0
    %2438 = vmatprep.subr.mxu0 0.0
    %2439 = vmatpush2.msra.mxu0 0.0
    %2440 = vmatprep.subr.mxu0 0.0
    %2441 = vmatpush2.msra.mxu0 0.0
    %2442 = vmatprep.subr.mxu0 0.0
    %2443 = vmatpush2.msra.mxu0 0.0
    %2444 = vmatprep.subr.mxu0 0.0
    %2445 = vmatpush2.msra.mxu0 0.0
    %2446 = vmatprep.subr.mxu0 0.0
    %2447 = vmatpush2.msra.mxu0 0.0
    %2448 = vmatprep.subr.mxu0 0.0
    %2449 = vmatpush2.msra.mxu0 0.0
    %2450 = vmatprep.subr.mxu0 0.0
    %2451 = vmatpush2.msra.mxu0 0.0
    %2452 = vmatprep.subr.mxu0 0.0
    %2453 = vmatpush2.msra.mxu0 0.0
    %2454 = vmatprep.subr.mxu0 0.0
    %2455 = vmatpush2.msra.mxu0 0.0
    %2456 = vmatprep.subr.mxu0 0.0
    %2457 = vmatpush2.msra.mxu0 0.0
    %2458 = vmatprep.subr.mxu0 0.0
    %2459 = vmatpush2.msra.mxu0 0.0
    %2460 = vmatprep.subr.mxu0 0.0
    %2461 = vmatpush2.msra.mxu0 0.0
    %2462 = vmatprep.subr.mxu0 0.0
    %2463 = vmatpush2.msra.mxu0 0.0
    %2464 = vmatprep.subr.mxu0 0.0
    %2465 = vmatpush2.msra.mxu0 0.0
    %2466 = vmatprep.subr.mxu0 0.0
    %2467 = vmatpush2.msra.mxu0 0.0
    %2468 = vmatprep.mubr.f32.mxu0 0.0
    %v2469 = vand.u32 %v1512, 4294901760
    %2470 = vmatmul.mubr.f32.gmra.mxu0 %v2469
    %v2471 = vpop.f32.mrf.mxu0
    %v2472 = vadd.f32 %v2335, %v2471
    %v2473 = vpop.f32.mrf.mxu0
    %v2474 = vadd.f32 %v2337, %v2473
    %2475 = vmatprep.mubr.f32.mxu0 0.0
    %v2476 = vand.u32 %v1515, 4294901760
    %2477 = vmatmul.mubr.f32.gmra.mxu0 %v2476
    %v2478 = vpop.f32.mrf.mxu0
    %v2479 = vadd.f32 %v2342, %v2478
    %v2480 = vpop.f32.mrf.mxu0
    %v2481 = vadd.f32 %v2344, %v2480
    %2482 = vmatprep.mubr.f32.mxu0 0.0
    %v2483 = vand.u32 %v1518, 4294901760
    %2484 = vmatmul.mubr.f32.gmra.mxu0 %v2483
    %v2485 = vpop.f32.mrf.mxu0
    %v2486 = vadd.f32 %v2349, %v2485
    %v2487 = vpop.f32.mrf.mxu0
    %v2488 = vadd.f32 %v2351, %v2487
    %2489 = vmatprep.mubr.f32.mxu0 0.0
    %v2490 = vand.u32 %v1521, 4294901760
    %2491 = vmatmul.mubr.f32.gmra.mxu0 %v2490
    %v2492 = vpop.f32.mrf.mxu0
    %v2493 = vadd.f32 %v2356, %v2492
    %v2494 = vpop.f32.mrf.mxu0
    %v2495 = vadd.f32 %v2358, %v2494
    %2496 = vmatprep.mubr.f32.mxu0 0.0
    %v2497 = vand.u32 %v1524, 4294901760
    %2498 = vmatmul.mubr.f32.gmra.mxu0 %v2497
    %v2499 = vpop.f32.mrf.mxu0
    %v2500 = vadd.f32 %v2363, %v2499
    %v2501 = vpop.f32.mrf.mxu0
    %v2502 = vadd.f32 %v2365, %v2501
    %2503 = vmatprep.mubr.f32.mxu0 0.0
    %v2504 = vand.u32 %v1527, 4294901760
    %2505 = vmatmul.mubr.f32.gmra.mxu0 %v2504
    %v2506 = vpop.f32.mrf.mxu0
    %v2507 = vadd.f32 %v2370, %v2506
    %v2508 = vpop.f32.mrf.mxu0
    %v2509 = vadd.f32 %v2372, %v2508
    %2510 = vmatprep.mubr.f32.mxu0 0.0
    %v2511 = vand.u32 %v1530, 4294901760
    %2512 = vmatmul.mubr.f32.gmra.mxu0 %v2511
    %v2513 = vpop.f32.mrf.mxu0
    %v2514 = vadd.f32 %v2377, %v2513
    %v2515 = vpop.f32.mrf.mxu0
    %v2516 = vadd.f32 %v2379, %v2515
    %2517 = vmatprep.mubr.f32.mxu0 0.0
    %v2518 = vand.u32 %v1533, 4294901760
    %2519 = vmatmul.mubr.f32.gmra.mxu0 %v2518
    %v2520 = vpop.f32.mrf.mxu0
    %v2521 = vadd.f32 %v2384, %v2520
    %v2522 = vpop.f32.mrf.mxu0
    %v2523 = vadd.f32 %v2386, %v2522
    %2524 = vdwg.mxu0
    %v2525 = vmax.f32 %v2472, 0.0
    %v2526 = vmax.f32 %v2474, 0.0
    %v2527 = vmax.f32 %v2479, 0.0
    %v2528 = vmax.f32 %v2481, 0.0
    %v2529 = vmax.f32 %v2486, 0.0
    %v2530 = vmax.f32 %v2488, 0.0
    %v2531 = vmax.f32 %v2493, 0.0
    %v2532 = vmax.f32 %v2495, 0.0
    %v2533 = vmax.f32 %v2500, 0.0
    %v2534 = vmax.f32 %v2502, 0.0
    %v2535 = vmax.f32 %v2507, 0.0
    %v2536 = vmax.f32 %v2509, 0.0
    %v2537 = vmax.f32 %v2514, 0.0
    %v2538 = vmax.f32 %v2516, 0.0
    %v2539 = vmax.f32 %v2521, 0.0
    %v2540 = vmax.f32 %v2523, 0.0
    %2542 = vset.pattern.permute.xlu0 0
    %2543 = vperm.xlu0 %2542, %v61
    %v2544 = vpop.permute.xlu0 %2543
    %2547 = vset.pattern.permute.xlu0 0
    %2548 = vperm.xlu0 %2547, %v62
    %v2549 = vpop.permute.xlu0 %2548
    %v2552 = vsel %vm1510, %v43, 0
    %v2555 = vsel %vm1510, %v44, 0
    %2557 = vmatprep.subr.mxu0 0.0
    %2558 = vmatpush1.msra.mxu0 0.0
    %2559 = vmatprep.subr.mxu0 0.0
    %2560 = vmatpush1.msra.mxu0 0.0
    %2561 = vmatprep.subr.mxu0 0.0
    %2562 = vmatpush1.msra.mxu0 0.0
    %2563 = vmatprep.subr.mxu0 0.0
    %2564 = vmatpush1.msra.mxu0 0.0
    %2565 = vmatprep.subr.mxu0 0.0
    %2566 = vmatpush1.msra.mxu0 0.0
    %2567 = vmatprep.subr.mxu0 0.0
    %2568 = vmatpush1.msra.mxu0 0.0
    %2569 = vmatprep.subr.mxu0 0.0
    %2570 = vmatpush1.msra.mxu0 0.0
    %2571 = vmatprep.subr.mxu0 0.0
    %2572 = vmatpush1.msra.mxu0 0.0
    %v2573 = vand.u32 %v2540, 4294901760
    %2574 = vmatprep.subr.mxu0 %v2573
    %v2575 = vand.u32 %v2539, 4294901760
    %2576 = vmatpush1.msra.mxu0 %v2575
    %v2577 = vand.u32 %v2538, 4294901760
    %2578 = vmatprep.subr.mxu0 %v2577
    %v2579 = vand.u32 %v2537, 4294901760
    %2580 = vmatpush1.msra.mxu0 %v2579
    %v2581 = vand.u32 %v2536, 4294901760
    %2582 = vmatprep.subr.mxu0 %v2581
    %v2583 = vand.u32 %v2535, 4294901760
    %2584 = vmatpush1.msra.mxu0 %v2583
    %v2585 = vand.u32 %v2534, 4294901760
    %2586 = vmatprep.subr.mxu0 %v2585
    %v2587 = vand.u32 %v2533, 4294901760
    %2588 = vmatpush1.msra.mxu0 %v2587
    %v2589 = vand.u32 %v2532, 4294901760
    %2590 = vmatprep.subr.mxu0 %v2589
    %v2591 = vand.u32 %v2531, 4294901760
    %2592 = vmatpush1.msra.mxu0 %v2591
    %v2593 = vand.u32 %v2530, 4294901760
    %2594 = vmatprep.subr.mxu0 %v2593
    %v2595 = vand.u32 %v2529, 4294901760
    %2596 = vmatpush1.msra.mxu0 %v2595
    %v2597 = vand.u32 %v2528, 4294901760
    %2598 = vmatprep.subr.mxu0 %v2597
    %v2599 = vand.u32 %v2527, 4294901760
    %2600 = vmatpush1.msra.mxu0 %v2599
    %v2601 = vand.u32 %v2526, 4294901760
    %2602 = vmatprep.subr.mxu0 %v2601
    %v2603 = vand.u32 %v2525, 4294901760
    %2604 = vmatpush1.msra.mxu0 %v2603
    %2605 = vmatprep.subr.mxu0 0.0
    %2606 = vmatpush2.msra.mxu0 0.0
    %2607 = vmatprep.subr.mxu0 0.0
    %2608 = vmatpush2.msra.mxu0 0.0
    %2609 = vmatprep.subr.mxu0 0.0
    %2610 = vmatpush2.msra.mxu0 0.0
    %2611 = vmatprep.subr.mxu0 0.0
    %2612 = vmatpush2.msra.mxu0 0.0
    %2613 = vmatprep.subr.mxu0 0.0
    %2614 = vmatpush2.msra.mxu0 0.0
    %2615 = vmatprep.subr.mxu0 0.0
    %2616 = vmatpush2.msra.mxu0 0.0
    %2617 = vmatprep.subr.mxu0 0.0
    %2618 = vmatpush2.msra.mxu0 0.0
    %2619 = vmatprep.subr.mxu0 0.0
    %2620 = vmatpush2.msra.mxu0 0.0
    %2621 = vmatprep.subr.mxu0 0.0
    %2622 = vmatpush2.msra.mxu0 0.0
    %2623 = vmatprep.subr.mxu0 0.0
    %2624 = vmatpush2.msra.mxu0 0.0
    %2625 = vmatprep.subr.mxu0 0.0
    %2626 = vmatpush2.msra.mxu0 0.0
    %2627 = vmatprep.subr.mxu0 0.0
    %2628 = vmatpush2.msra.mxu0 0.0
    %2629 = vmatprep.subr.mxu0 0.0
    %2630 = vmatpush2.msra.mxu0 0.0
    %2631 = vmatprep.subr.mxu0 0.0
    %2632 = vmatpush2.msra.mxu0 0.0
    %2633 = vmatprep.subr.mxu0 0.0
    %2634 = vmatpush2.msra.mxu0 0.0
    %2635 = vmatprep.subr.mxu0 0.0
    %2636 = vmatpush2.msra.mxu0 0.0
    %2637 = vmatprep.mubr.f32.mxu0 0.0
    %v2638 = vand.u32 %v2552, 4294901760
    %v2639 = vsub.f32 %v2552, %v2638
    %v2640 = vand.u32 %v2639, 4294901760
    %v2641 = vsub.f32 %v2639, %v2640
    %v2642 = vand.u32 %v2641, 4294901760
    %2643 = vmatmul.mubr.f32.gmra.mxu0 %v2642
    %v2644 = vpop.f32.mrf.mxu0
    %v2645 = vadd.f32 %v2544, %v2644
    %v2646 = vpop.f32.mrf.mxu0
    %v2647 = vadd.f32 %v2544, %v2646
    %2648 = vmatprep.mubr.f32.mxu0 0.0
    %v2649 = vand.u32 %v2555, 4294901760
    %v2650 = vsub.f32 %v2555, %v2649
    %v2651 = vand.u32 %v2650, 4294901760
    %v2652 = vsub.f32 %v2650, %v2651
    %v2653 = vand.u32 %v2652, 4294901760
    %2654 = vmatmul.mubr.f32.gmra.mxu0 %v2653
    %v2655 = vpop.f32.mrf.mxu0
    %v2656 = vadd.f32 %v2549, %v2655
    %v2657 = vpop.f32.mrf.mxu0
    %v2658 = vadd.f32 %v2549, %v2657
    %2659 = vdwg.mxu0
    %2660 = vmatprep.subr.mxu0 0.0
    %2661 = vmatpush1.msra.mxu0 0.0
    %2662 = vmatprep.subr.mxu0 0.0
    %2663 = vmatpush1.msra.mxu0 0.0
    %2664 = vmatprep.subr.mxu0 0.0
    %2665 = vmatpush1.msra.mxu0 0.0
    %2666 = vmatprep.subr.mxu0 0.0
    %2667 = vmatpush1.msra.mxu0 0.0
    %2668 = vmatprep.subr.mxu0 0.0
    %2669 = vmatpush1.msra.mxu0 0.0
    %2670 = vmatprep.subr.mxu0 0.0
    %2671 = vmatpush1.msra.mxu0 0.0
    %2672 = vmatprep.subr.mxu0 0.0
    %2673 = vmatpush1.msra.mxu0 0.0
    %2674 = vmatprep.subr.mxu0 0.0
    %2675 = vmatpush1.msra.mxu0 0.0
    %v2676 = vand.u32 %v2540, 4294901760
    %v2677 = vsub.f32 %v2540, %v2676
    %v2678 = vand.u32 %v2677, 4294901760
    %v2679 = vsub.f32 %v2677, %v2678
    %v2680 = vand.u32 %v2679, 4294901760
    %2681 = vmatprep.subr.mxu0 %v2680
    %v2682 = vand.u32 %v2539, 4294901760
    %v2683 = vsub.f32 %v2539, %v2682
    %v2684 = vand.u32 %v2683, 4294901760
    %v2685 = vsub.f32 %v2683, %v2684
    %v2686 = vand.u32 %v2685, 4294901760
    %2687 = vmatpush1.msra.mxu0 %v2686
    %v2688 = vand.u32 %v2538, 4294901760
    %v2689 = vsub.f32 %v2538, %v2688
    %v2690 = vand.u32 %v2689, 4294901760
    %v2691 = vsub.f32 %v2689, %v2690
    %v2692 = vand.u32 %v2691, 4294901760
    %2693 = vmatprep.subr.mxu0 %v2692
    %v2694 = vand.u32 %v2537, 4294901760
    %v2695 = vsub.f32 %v2537, %v2694
    %v2696 = vand.u32 %v2695, 4294901760
    %v2697 = vsub.f32 %v2695, %v2696
    %v2698 = vand.u32 %v2697, 4294901760
    %2699 = vmatpush1.msra.mxu0 %v2698
    %v2700 = vand.u32 %v2536, 4294901760
    %v2701 = vsub.f32 %v2536, %v2700
    %v2702 = vand.u32 %v2701, 4294901760
    %v2703 = vsub.f32 %v2701, %v2702
    %v2704 = vand.u32 %v2703, 4294901760
    %2705 = vmatprep.subr.mxu0 %v2704
    %v2706 = vand.u32 %v2535, 4294901760
    %v2707 = vsub.f32 %v2535, %v2706
    %v2708 = vand.u32 %v2707, 4294901760
    %v2709 = vsub.f32 %v2707, %v2708
    %v2710 = vand.u32 %v2709, 4294901760
    %2711 = vmatpush1.msra.mxu0 %v2710
    %v2712 = vand.u32 %v2534, 4294901760
    %v2713 = vsub.f32 %v2534, %v2712
    %v2714 = vand.u32 %v2713, 4294901760
    %v2715 = vsub.f32 %v2713, %v2714
    %v2716 = vand.u32 %v2715, 4294901760
    %2717 = vmatprep.subr.mxu0 %v2716
    %v2718 = vand.u32 %v2533, 4294901760
    %v2719 = vsub.f32 %v2533, %v2718
    %v2720 = vand.u32 %v2719, 4294901760
    %v2721 = vsub.f32 %v2719, %v2720
    %v2722 = vand.u32 %v2721, 4294901760
    %2723 = vmatpush1.msra.mxu0 %v2722
    %v2724 = vand.u32 %v2532, 4294901760
    %v2725 = vsub.f32 %v2532, %v2724
    %v2726 = vand.u32 %v2725, 4294901760
    %v2727 = vsub.f32 %v2725, %v2726
    %v2728 = vand.u32 %v2727, 4294901760
    %2729 = vmatprep.subr.mxu0 %v2728
    %v2730 = vand.u32 %v2531, 4294901760
    %v2731 = vsub.f32 %v2531, %v2730
    %v2732 = vand.u32 %v2731, 4294901760
    %v2733 = vsub.f32 %v2731, %v2732
    %v2734 = vand.u32 %v2733, 4294901760
    %2735 = vmatpush1.msra.mxu0 %v2734
    %v2736 = vand.u32 %v2530, 4294901760
    %v2737 = vsub.f32 %v2530, %v2736
    %v2738 = vand.u32 %v2737, 4294901760
    %v2739 = vsub.f32 %v2737, %v2738
    %v2740 = vand.u32 %v2739, 4294901760
    %2741 = vmatprep.subr.mxu0 %v2740
    %v2742 = vand.u32 %v2529, 4294901760
    %v2743 = vsub.f32 %v2529, %v2742
    %v2744 = vand.u32 %v2743, 4294901760
    %v2745 = vsub.f32 %v2743, %v2744
    %v2746 = vand.u32 %v2745, 4294901760
    %2747 = vmatpush1.msra.mxu0 %v2746
    %v2748 = vand.u32 %v2528, 4294901760
    %v2749 = vsub.f32 %v2528, %v2748
    %v2750 = vand.u32 %v2749, 4294901760
    %v2751 = vsub.f32 %v2749, %v2750
    %v2752 = vand.u32 %v2751, 4294901760
    %2753 = vmatprep.subr.mxu0 %v2752
    %v2754 = vand.u32 %v2527, 4294901760
    %v2755 = vsub.f32 %v2527, %v2754
    %v2756 = vand.u32 %v2755, 4294901760
    %v2757 = vsub.f32 %v2755, %v2756
    %v2758 = vand.u32 %v2757, 4294901760
    %2759 = vmatpush1.msra.mxu0 %v2758
    %v2760 = vand.u32 %v2526, 4294901760
    %v2761 = vsub.f32 %v2526, %v2760
    %v2762 = vand.u32 %v2761, 4294901760
    %v2763 = vsub.f32 %v2761, %v2762
    %v2764 = vand.u32 %v2763, 4294901760
    %2765 = vmatprep.subr.mxu0 %v2764
    %v2766 = vand.u32 %v2525, 4294901760
    %v2767 = vsub.f32 %v2525, %v2766
    %v2768 = vand.u32 %v2767, 4294901760
    %v2769 = vsub.f32 %v2767, %v2768
    %v2770 = vand.u32 %v2769, 4294901760
    %2771 = vmatpush1.msra.mxu0 %v2770
    %2772 = vmatprep.subr.mxu0 0.0
    %2773 = vmatpush2.msra.mxu0 0.0
    %2774 = vmatprep.subr.mxu0 0.0
    %2775 = vmatpush2.msra.mxu0 0.0
    %2776 = vmatprep.subr.mxu0 0.0
    %2777 = vmatpush2.msra.mxu0 0.0
    %2778 = vmatprep.subr.mxu0 0.0
    %2779 = vmatpush2.msra.mxu0 0.0
    %2780 = vmatprep.subr.mxu0 0.0
    %2781 = vmatpush2.msra.mxu0 0.0
    %2782 = vmatprep.subr.mxu0 0.0
    %2783 = vmatpush2.msra.mxu0 0.0
    %2784 = vmatprep.subr.mxu0 0.0
    %2785 = vmatpush2.msra.mxu0 0.0
    %2786 = vmatprep.subr.mxu0 0.0
    %2787 = vmatpush2.msra.mxu0 0.0
    %2788 = vmatprep.subr.mxu0 0.0
    %2789 = vmatpush2.msra.mxu0 0.0
    %2790 = vmatprep.subr.mxu0 0.0
    %2791 = vmatpush2.msra.mxu0 0.0
    %2792 = vmatprep.subr.mxu0 0.0
    %2793 = vmatpush2.msra.mxu0 0.0
    %2794 = vmatprep.subr.mxu0 0.0
    %2795 = vmatpush2.msra.mxu0 0.0
    %2796 = vmatprep.subr.mxu0 0.0
    %2797 = vmatpush2.msra.mxu0 0.0
    %2798 = vmatprep.subr.mxu0 0.0
    %2799 = vmatpush2.msra.mxu0 0.0
    %2800 = vmatprep.subr.mxu0 0.0
    %2801 = vmatpush2.msra.mxu0 0.0
    %2802 = vmatprep.subr.mxu0 0.0
    %2803 = vmatpush2.msra.mxu0 0.0
    %2804 = vmatprep.mubr.f32.mxu0 0.0
    %v2805 = vand.u32 %v2552, 4294901760
    %2806 = vmatmul.mubr.f32.gmra.mxu0 %v2805
    %v2807 = vpop.f32.mrf.mxu0
    %v2808 = vadd.f32 %v2645, %v2807
    %v2809 = vpop.f32.mrf.mxu0
    %v2810 = vadd.f32 %v2647, %v2809
    %2811 = vmatprep.mubr.f32.mxu0 0.0
    %v2812 = vand.u32 %v2555, 4294901760
    %2813 = vmatmul.mubr.f32.gmra.mxu0 %v2812
    %v2814 = vpop.f32.mrf.mxu0
    %v2815 = vadd.f32 %v2656, %v2814
    %v2816 = vpop.f32.mrf.mxu0
    %v2817 = vadd.f32 %v2658, %v2816
    %2818 = vdwg.mxu0
    %2819 = vmatprep.subr.mxu0 0.0
    %2820 = vmatpush1.msra.mxu0 0.0
    %2821 = vmatprep.subr.mxu0 0.0
    %2822 = vmatpush1.msra.mxu0 0.0
    %2823 = vmatprep.subr.mxu0 0.0
    %2824 = vmatpush1.msra.mxu0 0.0
    %2825 = vmatprep.subr.mxu0 0.0
    %2826 = vmatpush1.msra.mxu0 0.0
    %2827 = vmatprep.subr.mxu0 0.0
    %2828 = vmatpush1.msra.mxu0 0.0
    %2829 = vmatprep.subr.mxu0 0.0
    %2830 = vmatpush1.msra.mxu0 0.0
    %2831 = vmatprep.subr.mxu0 0.0
    %2832 = vmatpush1.msra.mxu0 0.0
    %2833 = vmatprep.subr.mxu0 0.0
    %2834 = vmatpush1.msra.mxu0 0.0
    %v2835 = vand.u32 %v2540, 4294901760
    %v2836 = vsub.f32 %v2540, %v2835
    %2837 = vmatprep.subr.mxu0 %v2836
    %v2838 = vand.u32 %v2539, 4294901760
    %v2839 = vsub.f32 %v2539, %v2838
    %2840 = vmatpush1.msra.mxu0 %v2839
    %v2841 = vand.u32 %v2538, 4294901760
    %v2842 = vsub.f32 %v2538, %v2841
    %2843 = vmatprep.subr.mxu0 %v2842
    %v2844 = vand.u32 %v2537, 4294901760
    %v2845 = vsub.f32 %v2537, %v2844
    %2846 = vmatpush1.msra.mxu0 %v2845
    %v2847 = vand.u32 %v2536, 4294901760
    %v2848 = vsub.f32 %v2536, %v2847
    %2849 = vmatprep.subr.mxu0 %v2848
    %v2850 = vand.u32 %v2535, 4294901760
    %v2851 = vsub.f32 %v2535, %v2850
    %2852 = vmatpush1.msra.mxu0 %v2851
    %v2853 = vand.u32 %v2534, 4294901760
    %v2854 = vsub.f32 %v2534, %v2853
    %2855 = vmatprep.subr.mxu0 %v2854
    %v2856 = vand.u32 %v2533, 4294901760
    %v2857 = vsub.f32 %v2533, %v2856
    %2858 = vmatpush1.msra.mxu0 %v2857
    %v2859 = vand.u32 %v2532, 4294901760
    %v2860 = vsub.f32 %v2532, %v2859
    %2861 = vmatprep.subr.mxu0 %v2860
    %v2862 = vand.u32 %v2531, 4294901760
    %v2863 = vsub.f32 %v2531, %v2862
    %2864 = vmatpush1.msra.mxu0 %v2863
    %v2865 = vand.u32 %v2530, 4294901760
    %v2866 = vsub.f32 %v2530, %v2865
    %2867 = vmatprep.subr.mxu0 %v2866
    %v2868 = vand.u32 %v2529, 4294901760
    %v2869 = vsub.f32 %v2529, %v2868
    %2870 = vmatpush1.msra.mxu0 %v2869
    %v2871 = vand.u32 %v2528, 4294901760
    %v2872 = vsub.f32 %v2528, %v2871
    %2873 = vmatprep.subr.mxu0 %v2872
    %v2874 = vand.u32 %v2527, 4294901760
    %v2875 = vsub.f32 %v2527, %v2874
    %2876 = vmatpush1.msra.mxu0 %v2875
    %v2877 = vand.u32 %v2526, 4294901760
    %v2878 = vsub.f32 %v2526, %v2877
    %2879 = vmatprep.subr.mxu0 %v2878
    %v2880 = vand.u32 %v2525, 4294901760
    %v2881 = vsub.f32 %v2525, %v2880
    %2882 = vmatpush1.msra.mxu0 %v2881
    %2883 = vmatprep.subr.mxu0 0.0
    %2884 = vmatpush2.msra.mxu0 0.0
    %2885 = vmatprep.subr.mxu0 0.0
    %2886 = vmatpush2.msra.mxu0 0.0
    %2887 = vmatprep.subr.mxu0 0.0
    %2888 = vmatpush2.msra.mxu0 0.0
    %2889 = vmatprep.subr.mxu0 0.0
    %2890 = vmatpush2.msra.mxu0 0.0
    %2891 = vmatprep.subr.mxu0 0.0
    %2892 = vmatpush2.msra.mxu0 0.0
    %2893 = vmatprep.subr.mxu0 0.0
    %2894 = vmatpush2.msra.mxu0 0.0
    %2895 = vmatprep.subr.mxu0 0.0
    %2896 = vmatpush2.msra.mxu0 0.0
    %2897 = vmatprep.subr.mxu0 0.0
    %2898 = vmatpush2.msra.mxu0 0.0
    %2899 = vmatprep.subr.mxu0 0.0
    %2900 = vmatpush2.msra.mxu0 0.0
    %2901 = vmatprep.subr.mxu0 0.0
    %2902 = vmatpush2.msra.mxu0 0.0
    %2903 = vmatprep.subr.mxu0 0.0
    %2904 = vmatpush2.msra.mxu0 0.0
    %2905 = vmatprep.subr.mxu0 0.0
    %2906 = vmatpush2.msra.mxu0 0.0
    %2907 = vmatprep.subr.mxu0 0.0
    %2908 = vmatpush2.msra.mxu0 0.0
    %2909 = vmatprep.subr.mxu0 0.0
    %2910 = vmatpush2.msra.mxu0 0.0
    %2911 = vmatprep.subr.mxu0 0.0
    %2912 = vmatpush2.msra.mxu0 0.0
    %2913 = vmatprep.subr.mxu0 0.0
    %2914 = vmatpush2.msra.mxu0 0.0
    %2915 = vmatprep.mubr.f32.mxu0 0.0
    %v2916 = vand.u32 %v2552, 4294901760
    %v2917 = vsub.f32 %v2552, %v2916
    %2918 = vmatmul.mubr.f32.gmra.mxu0 %v2917
    %v2919 = vpop.f32.mrf.mxu0
    %v2920 = vadd.f32 %v2808, %v2919
    %v2921 = vpop.f32.mrf.mxu0
    %v2922 = vadd.f32 %v2810, %v2921
    %2923 = vmatprep.mubr.f32.mxu0 0.0
    %v2924 = vand.u32 %v2555, 4294901760
    %v2925 = vsub.f32 %v2555, %v2924
    %2926 = vmatmul.mubr.f32.gmra.mxu0 %v2925
    %v2927 = vpop.f32.mrf.mxu0
    %v2928 = vadd.f32 %v2815, %v2927
    %v2929 = vpop.f32.mrf.mxu0
    %v2930 = vadd.f32 %v2817, %v2929
    %2931 = vdwg.mxu0
    %2932 = vmatprep.subr.mxu0 0.0
    %2933 = vmatpush1.msra.mxu0 0.0
    %2934 = vmatprep.subr.mxu0 0.0
    %2935 = vmatpush1.msra.mxu0 0.0
    %2936 = vmatprep.subr.mxu0 0.0
    %2937 = vmatpush1.msra.mxu0 0.0
    %2938 = vmatprep.subr.mxu0 0.0
    %2939 = vmatpush1.msra.mxu0 0.0
    %2940 = vmatprep.subr.mxu0 0.0
    %2941 = vmatpush1.msra.mxu0 0.0
    %2942 = vmatprep.subr.mxu0 0.0
    %2943 = vmatpush1.msra.mxu0 0.0
    %2944 = vmatprep.subr.mxu0 0.0
    %2945 = vmatpush1.msra.mxu0 0.0
    %2946 = vmatprep.subr.mxu0 0.0
    %2947 = vmatpush1.msra.mxu0 0.0
    %v2948 = vand.u32 %v2540, 4294901760
    %2949 = vmatprep.subr.mxu0 %v2948
    %v2950 = vand.u32 %v2539, 4294901760
    %2951 = vmatpush1.msra.mxu0 %v2950
    %v2952 = vand.u32 %v2538, 4294901760
    %2953 = vmatprep.subr.mxu0 %v2952
    %v2954 = vand.u32 %v2537, 4294901760
    %2955 = vmatpush1.msra.mxu0 %v2954
    %v2956 = vand.u32 %v2536, 4294901760
    %2957 = vmatprep.subr.mxu0 %v2956
    %v2958 = vand.u32 %v2535, 4294901760
    %2959 = vmatpush1.msra.mxu0 %v2958
    %v2960 = vand.u32 %v2534, 4294901760
    %2961 = vmatprep.subr.mxu0 %v2960
    %v2962 = vand.u32 %v2533, 4294901760
    %2963 = vmatpush1.msra.mxu0 %v2962
    %v2964 = vand.u32 %v2532, 4294901760
    %2965 = vmatprep.subr.mxu0 %v2964
    %v2966 = vand.u32 %v2531, 4294901760
    %2967 = vmatpush1.msra.mxu0 %v2966
    %v2968 = vand.u32 %v2530, 4294901760
    %2969 = vmatprep.subr.mxu0 %v2968
    %v2970 = vand.u32 %v2529, 4294901760
    %2971 = vmatpush1.msra.mxu0 %v2970
    %v2972 = vand.u32 %v2528, 4294901760
    %2973 = vmatprep.subr.mxu0 %v2972
    %v2974 = vand.u32 %v2527, 4294901760
    %2975 = vmatpush1.msra.mxu0 %v2974
    %v2976 = vand.u32 %v2526, 4294901760
    %2977 = vmatprep.subr.mxu0 %v2976
    %v2978 = vand.u32 %v2525, 4294901760
    %2979 = vmatpush1.msra.mxu0 %v2978
    %2980 = vmatprep.subr.mxu0 0.0
    %2981 = vmatpush2.msra.mxu0 0.0
    %2982 = vmatprep.subr.mxu0 0.0
    %2983 = vmatpush2.msra.mxu0 0.0
    %2984 = vmatprep.subr.mxu0 0.0
    %2985 = vmatpush2.msra.mxu0 0.0
    %2986 = vmatprep.subr.mxu0 0.0
    %2987 = vmatpush2.msra.mxu0 0.0
    %2988 = vmatprep.subr.mxu0 0.0
    %2989 = vmatpush2.msra.mxu0 0.0
    %2990 = vmatprep.subr.mxu0 0.0
    %2991 = vmatpush2.msra.mxu0 0.0
    %2992 = vmatprep.subr.mxu0 0.0
    %2993 = vmatpush2.msra.mxu0 0.0
    %2994 = vmatprep.subr.mxu0 0.0
    %2995 = vmatpush2.msra.mxu0 0.0
    %2996 = vmatprep.subr.mxu0 0.0
    %2997 = vmatpush2.msra.mxu0 0.0
    %2998 = vmatprep.subr.mxu0 0.0
    %2999 = vmatpush2.msra.mxu0 0.0
    %3000 = vmatprep.subr.mxu0 0.0
    %3001 = vmatpush2.msra.mxu0 0.0
    %3002 = vmatprep.subr.mxu0 0.0
    %3003 = vmatpush2.msra.mxu0 0.0
    %3004 = vmatprep.subr.mxu0 0.0
    %3005 = vmatpush2.msra.mxu0 0.0
    %3006 = vmatprep.subr.mxu0 0.0
    %3007 = vmatpush2.msra.mxu0 0.0
    %3008 = vmatprep.subr.mxu0 0.0
    %3009 = vmatpush2.msra.mxu0 0.0
    %3010 = vmatprep.subr.mxu0 0.0
    %3011 = vmatpush2.msra.mxu0 0.0
    %3012 = vmatprep.mubr.f32.mxu0 0.0
    %v3013 = vand.u32 %v2552, 4294901760
    %v3014 = vsub.f32 %v2552, %v3013
    %v3015 = vand.u32 %v3014, 4294901760
    %3016 = vmatmul.mubr.f32.gmra.mxu0 %v3015
    %v3017 = vpop.f32.mrf.mxu0
    %v3018 = vadd.f32 %v2920, %v3017
    %v3019 = vpop.f32.mrf.mxu0
    %v3020 = vadd.f32 %v2922, %v3019
    %3021 = vmatprep.mubr.f32.mxu0 0.0
    %v3022 = vand.u32 %v2555, 4294901760
    %v3023 = vsub.f32 %v2555, %v3022
    %v3024 = vand.u32 %v3023, 4294901760
    %3025 = vmatmul.mubr.f32.gmra.mxu0 %v3024
    %v3026 = vpop.f32.mrf.mxu0
    %v3027 = vadd.f32 %v2928, %v3026
    %v3028 = vpop.f32.mrf.mxu0
    %v3029 = vadd.f32 %v2930, %v3028
    %3030 = vdwg.mxu0
    %3031 = vmatprep.subr.mxu0 0.0
    %3032 = vmatpush1.msra.mxu0 0.0
    %3033 = vmatprep.subr.mxu0 0.0
    %3034 = vmatpush1.msra.mxu0 0.0
    %3035 = vmatprep.subr.mxu0 0.0
    %3036 = vmatpush1.msra.mxu0 0.0
    %3037 = vmatprep.subr.mxu0 0.0
    %3038 = vmatpush1.msra.mxu0 0.0
    %3039 = vmatprep.subr.mxu0 0.0
    %3040 = vmatpush1.msra.mxu0 0.0
    %3041 = vmatprep.subr.mxu0 0.0
    %3042 = vmatpush1.msra.mxu0 0.0
    %3043 = vmatprep.subr.mxu0 0.0
    %3044 = vmatpush1.msra.mxu0 0.0
    %3045 = vmatprep.subr.mxu0 0.0
    %3046 = vmatpush1.msra.mxu0 0.0
    %v3047 = vand.u32 %v2540, 4294901760
    %v3048 = vsub.f32 %v2540, %v3047
    %v3049 = vand.u32 %v3048, 4294901760
    %3050 = vmatprep.subr.mxu0 %v3049
    %v3051 = vand.u32 %v2539, 4294901760
    %v3052 = vsub.f32 %v2539, %v3051
    %v3053 = vand.u32 %v3052, 4294901760
    %3054 = vmatpush1.msra.mxu0 %v3053
    %v3055 = vand.u32 %v2538, 4294901760
    %v3056 = vsub.f32 %v2538, %v3055
    %v3057 = vand.u32 %v3056, 4294901760
    %3058 = vmatprep.subr.mxu0 %v3057
    %v3059 = vand.u32 %v2537, 4294901760
    %v3060 = vsub.f32 %v2537, %v3059
    %v3061 = vand.u32 %v3060, 4294901760
    %3062 = vmatpush1.msra.mxu0 %v3061
    %v3063 = vand.u32 %v2536, 4294901760
    %v3064 = vsub.f32 %v2536, %v3063
    %v3065 = vand.u32 %v3064, 4294901760
    %3066 = vmatprep.subr.mxu0 %v3065
    %v3067 = vand.u32 %v2535, 4294901760
    %v3068 = vsub.f32 %v2535, %v3067
    %v3069 = vand.u32 %v3068, 4294901760
    %3070 = vmatpush1.msra.mxu0 %v3069
    %v3071 = vand.u32 %v2534, 4294901760
    %v3072 = vsub.f32 %v2534, %v3071
    %v3073 = vand.u32 %v3072, 4294901760
    %3074 = vmatprep.subr.mxu0 %v3073
    %v3075 = vand.u32 %v2533, 4294901760
    %v3076 = vsub.f32 %v2533, %v3075
    %v3077 = vand.u32 %v3076, 4294901760
    %3078 = vmatpush1.msra.mxu0 %v3077
    %v3079 = vand.u32 %v2532, 4294901760
    %v3080 = vsub.f32 %v2532, %v3079
    %v3081 = vand.u32 %v3080, 4294901760
    %3082 = vmatprep.subr.mxu0 %v3081
    %v3083 = vand.u32 %v2531, 4294901760
    %v3084 = vsub.f32 %v2531, %v3083
    %v3085 = vand.u32 %v3084, 4294901760
    %3086 = vmatpush1.msra.mxu0 %v3085
    %v3087 = vand.u32 %v2530, 4294901760
    %v3088 = vsub.f32 %v2530, %v3087
    %v3089 = vand.u32 %v3088, 4294901760
    %3090 = vmatprep.subr.mxu0 %v3089
    %v3091 = vand.u32 %v2529, 4294901760
    %v3092 = vsub.f32 %v2529, %v3091
    %v3093 = vand.u32 %v3092, 4294901760
    %3094 = vmatpush1.msra.mxu0 %v3093
    %v3095 = vand.u32 %v2528, 4294901760
    %v3096 = vsub.f32 %v2528, %v3095
    %v3097 = vand.u32 %v3096, 4294901760
    %3098 = vmatprep.subr.mxu0 %v3097
    %v3099 = vand.u32 %v2527, 4294901760
    %v3100 = vsub.f32 %v2527, %v3099
    %v3101 = vand.u32 %v3100, 4294901760
    %3102 = vmatpush1.msra.mxu0 %v3101
    %v3103 = vand.u32 %v2526, 4294901760
    %v3104 = vsub.f32 %v2526, %v3103
    %v3105 = vand.u32 %v3104, 4294901760
    %3106 = vmatprep.subr.mxu0 %v3105
    %v3107 = vand.u32 %v2525, 4294901760
    %v3108 = vsub.f32 %v2525, %v3107
    %v3109 = vand.u32 %v3108, 4294901760
    %3110 = vmatpush1.msra.mxu0 %v3109
    %3111 = vmatprep.subr.mxu0 0.0
    %3112 = vmatpush2.msra.mxu0 0.0
    %3113 = vmatprep.subr.mxu0 0.0
    %3114 = vmatpush2.msra.mxu0 0.0
    %3115 = vmatprep.subr.mxu0 0.0
    %3116 = vmatpush2.msra.mxu0 0.0
    %3117 = vmatprep.subr.mxu0 0.0
    %3118 = vmatpush2.msra.mxu0 0.0
    %3119 = vmatprep.subr.mxu0 0.0
    %3120 = vmatpush2.msra.mxu0 0.0
    %3121 = vmatprep.subr.mxu0 0.0
    %3122 = vmatpush2.msra.mxu0 0.0
    %3123 = vmatprep.subr.mxu0 0.0
    %3124 = vmatpush2.msra.mxu0 0.0
    %3125 = vmatprep.subr.mxu0 0.0
    %3126 = vmatpush2.msra.mxu0 0.0
    %3127 = vmatprep.subr.mxu0 0.0
    %3128 = vmatpush2.msra.mxu0 0.0
    %3129 = vmatprep.subr.mxu0 0.0
    %3130 = vmatpush2.msra.mxu0 0.0
    %3131 = vmatprep.subr.mxu0 0.0
    %3132 = vmatpush2.msra.mxu0 0.0
    %3133 = vmatprep.subr.mxu0 0.0
    %3134 = vmatpush2.msra.mxu0 0.0
    %3135 = vmatprep.subr.mxu0 0.0
    %3136 = vmatpush2.msra.mxu0 0.0
    %3137 = vmatprep.subr.mxu0 0.0
    %3138 = vmatpush2.msra.mxu0 0.0
    %3139 = vmatprep.subr.mxu0 0.0
    %3140 = vmatpush2.msra.mxu0 0.0
    %3141 = vmatprep.subr.mxu0 0.0
    %3142 = vmatpush2.msra.mxu0 0.0
    %3143 = vmatprep.mubr.f32.mxu0 0.0
    %v3144 = vand.u32 %v2552, 4294901760
    %3145 = vmatmul.mubr.f32.gmra.mxu0 %v3144
    %v3146 = vpop.f32.mrf.mxu0
    %v3147 = vadd.f32 %v3018, %v3146
    %v3148 = vpop.f32.mrf.mxu0
    %v3149 = vadd.f32 %v3020, %v3148
    %3150 = vmatprep.mubr.f32.mxu0 0.0
    %v3151 = vand.u32 %v2555, 4294901760
    %3152 = vmatmul.mubr.f32.gmra.mxu0 %v3151
    %v3153 = vpop.f32.mrf.mxu0
    %v3154 = vadd.f32 %v3027, %v3153
    %v3155 = vpop.f32.mrf.mxu0
    %v3156 = vadd.f32 %v3029, %v3155
    %3157 = vdwg.mxu0
    %3158 = vmatprep.subr.mxu0 0.0
    %3159 = vmatpush1.msra.mxu0 0.0
    %3160 = vmatprep.subr.mxu0 0.0
    %3161 = vmatpush1.msra.mxu0 0.0
    %3162 = vmatprep.subr.mxu0 0.0
    %3163 = vmatpush1.msra.mxu0 0.0
    %3164 = vmatprep.subr.mxu0 0.0
    %3165 = vmatpush1.msra.mxu0 0.0
    %3166 = vmatprep.subr.mxu0 0.0
    %3167 = vmatpush1.msra.mxu0 0.0
    %3168 = vmatprep.subr.mxu0 0.0
    %3169 = vmatpush1.msra.mxu0 0.0
    %3170 = vmatprep.subr.mxu0 0.0
    %3171 = vmatpush1.msra.mxu0 0.0
    %3172 = vmatprep.subr.mxu0 0.0
    %3173 = vmatpush1.msra.mxu0 0.0
    %v3174 = vand.u32 %v2540, 4294901760
    %3175 = vmatprep.subr.mxu0 %v3174
    %v3176 = vand.u32 %v2539, 4294901760
    %3177 = vmatpush1.msra.mxu0 %v3176
    %v3178 = vand.u32 %v2538, 4294901760
    %3179 = vmatprep.subr.mxu0 %v3178
    %v3180 = vand.u32 %v2537, 4294901760
    %3181 = vmatpush1.msra.mxu0 %v3180
    %v3182 = vand.u32 %v2536, 4294901760
    %3183 = vmatprep.subr.mxu0 %v3182
    %v3184 = vand.u32 %v2535, 4294901760
    %3185 = vmatpush1.msra.mxu0 %v3184
    %v3186 = vand.u32 %v2534, 4294901760
    %3187 = vmatprep.subr.mxu0 %v3186
    %v3188 = vand.u32 %v2533, 4294901760
    %3189 = vmatpush1.msra.mxu0 %v3188
    %v3190 = vand.u32 %v2532, 4294901760
    %3191 = vmatprep.subr.mxu0 %v3190
    %v3192 = vand.u32 %v2531, 4294901760
    %3193 = vmatpush1.msra.mxu0 %v3192
    %v3194 = vand.u32 %v2530, 4294901760
    %3195 = vmatprep.subr.mxu0 %v3194
    %v3196 = vand.u32 %v2529, 4294901760
    %3197 = vmatpush1.msra.mxu0 %v3196
    %v3198 = vand.u32 %v2528, 4294901760
    %3199 = vmatprep.subr.mxu0 %v3198
    %v3200 = vand.u32 %v2527, 4294901760
    %3201 = vmatpush1.msra.mxu0 %v3200
    %v3202 = vand.u32 %v2526, 4294901760
    %3203 = vmatprep.subr.mxu0 %v3202
    %v3204 = vand.u32 %v2525, 4294901760
    %3205 = vmatpush1.msra.mxu0 %v3204
    %3206 = vmatprep.subr.mxu0 0.0
    %3207 = vmatpush2.msra.mxu0 0.0
    %3208 = vmatprep.subr.mxu0 0.0
    %3209 = vmatpush2.msra.mxu0 0.0
    %3210 = vmatprep.subr.mxu0 0.0
    %3211 = vmatpush2.msra.mxu0 0.0
    %3212 = vmatprep.subr.mxu0 0.0
    %3213 = vmatpush2.msra.mxu0 0.0
    %3214 = vmatprep.subr.mxu0 0.0
    %3215 = vmatpush2.msra.mxu0 0.0
    %3216 = vmatprep.subr.mxu0 0.0
    %3217 = vmatpush2.msra.mxu0 0.0
    %3218 = vmatprep.subr.mxu0 0.0
    %3219 = vmatpush2.msra.mxu0 0.0
    %3220 = vmatprep.subr.mxu0 0.0
    %3221 = vmatpush2.msra.mxu0 0.0
    %3222 = vmatprep.subr.mxu0 0.0
    %3223 = vmatpush2.msra.mxu0 0.0
    %3224 = vmatprep.subr.mxu0 0.0
    %3225 = vmatpush2.msra.mxu0 0.0
    %3226 = vmatprep.subr.mxu0 0.0
    %3227 = vmatpush2.msra.mxu0 0.0
    %3228 = vmatprep.subr.mxu0 0.0
    %3229 = vmatpush2.msra.mxu0 0.0
    %3230 = vmatprep.subr.mxu0 0.0
    %3231 = vmatpush2.msra.mxu0 0.0
    %3232 = vmatprep.subr.mxu0 0.0
    %3233 = vmatpush2.msra.mxu0 0.0
    %3234 = vmatprep.subr.mxu0 0.0
    %3235 = vmatpush2.msra.mxu0 0.0
    %3236 = vmatprep.subr.mxu0 0.0
    %3237 = vmatpush2.msra.mxu0 0.0
    %3238 = vmatprep.mubr.f32.mxu0 0.0
    %v3239 = vand.u32 %v2552, 4294901760
    %3240 = vmatmul.mubr.f32.gmra.mxu0 %v3239
    %v3241 = vpop.f32.mrf.mxu0
    %v3242 = vadd.f32 %v3147, %v3241
    %v3243 = vpop.f32.mrf.mxu0
    %v3244 = vadd.f32 %v3149, %v3243
    %3245 = vmatprep.mubr.f32.mxu0 0.0
    %v3246 = vand.u32 %v2555, 4294901760
    %3247 = vmatmul.mubr.f32.gmra.mxu0 %v3246
    %v3248 = vpop.f32.mrf.mxu0
    %v3249 = vadd.f32 %v3154, %v3248
    %v3250 = vpop.f32.mrf.mxu0
    %v3251 = vadd.f32 %v3156, %v3250
    %3252 = vdwg.mxu0
    %v3253 = vlaneseq
    %v3254 = vshrl.u32 %v3253, 7
    %v3255 = vsub.s32 0, %v3254
    %v3256 = vrot.slane %v3249, %v3255
    %v3257 = vlaneseq
    %v3258 = vshrl.u32 %v3257, 7
    %v3259 = vsub.s32 0, %v3258
    %v3260 = vrot.slane %v3251, %v3259
    %v3261 = vadd.f32 %v3256, %v3242
    %v3262 = vadd.f32 %v3260, %v3244
    %v3263 = vrot.slane %v3242, 4
    %v3264 = vmax.f32 %v3242, %v3263
    %v3265 = vrot.slane %v3264, 2
    %v3266 = vmax.f32 %v3264, %v3265
    %v3267 = vrot.slane %v3266, 1
    %v3268 = vmax.f32 %v3266, %v3267
    %v3269 = vrot.slane %v3244, 4
    %v3270 = vmax.f32 %v3244, %v3269
    %v3271 = vrot.slane %v3270, 2
    %v3272 = vmax.f32 %v3270, %v3271
    %v3273 = vrot.slane %v3272, 1
    %v3274 = vmax.f32 %v3272, %v3273
    %v3275 = vsub.f32 %v3261, %v3268
    %v3276 = vsub.f32 %v3262, %v3274
    %3277 = vxpose.xlu0.b32.start [1/16] %v3275, 128
    %3278 = vxpose.xlu0.b32.cont [2/16] 0.0, 128
    %3279 = vxpose.xlu0.b32.cont [3/16] 0.0, 128
    %3280 = vxpose.xlu0.b32.cont [4/16] 0.0, 128
    %3281 = vxpose.xlu0.b32.cont [5/16] 0.0, 128
    %3282 = vxpose.xlu0.b32.cont [6/16] 0.0, 128
    %3283 = vxpose.xlu0.b32.cont [7/16] 0.0, 128
    %3284 = vxpose.xlu0.b32.cont [8/16] 0.0, 128
    %3285 = vxpose.xlu0.b32.cont [9/16] 0.0, 128
    %3286 = vxpose.xlu0.b32.cont [10/16] 0.0, 128
    %3287 = vxpose.xlu0.b32.cont [11/16] 0.0, 128
    %3288 = vxpose.xlu0.b32.cont [12/16] 0.0, 128
    %3289 = vxpose.xlu0.b32.cont [13/16] 0.0, 128
    %3290 = vxpose.xlu0.b32.cont [14/16] 0.0, 128
    %3291 = vxpose.xlu0.b32.cont [15/16] 0.0, 128
    %3292 = vxpose.xlu0.b32.end [16/16] 0.0, 128
    %v3293 = vpop.trf.xlu0
    %v3294 = vpop.trf.xlu0
    %v3295 = vpop.trf.xlu0
    %v3296 = vpop.trf.xlu0
    %v3297 = vpop.trf.xlu0
    %v3298 = vpop.trf.xlu0
    %v3299 = vpop.trf.xlu0
    %v3300 = vpop.trf.xlu0
    %v3301 = vpop.trf.xlu0
    %v3302 = vpop.trf.xlu0
    %v3303 = vpop.trf.xlu0
    %v3304 = vpop.trf.xlu0
    %v3305 = vpop.trf.xlu0
    %v3306 = vpop.trf.xlu0
    %v3307 = vpop.trf.xlu0
    %v3308 = vpop.trf.xlu0
    %3309 = vxpose.xlu0.b32.start [1/16] %v3276, 128
    %3310 = vxpose.xlu0.b32.cont [2/16] 0.0, 128
    %3311 = vxpose.xlu0.b32.cont [3/16] 0.0, 128
    %3312 = vxpose.xlu0.b32.cont [4/16] 0.0, 128
    %3313 = vxpose.xlu0.b32.cont [5/16] 0.0, 128
    %3314 = vxpose.xlu0.b32.cont [6/16] 0.0, 128
    %3315 = vxpose.xlu0.b32.cont [7/16] 0.0, 128
    %3316 = vxpose.xlu0.b32.cont [8/16] 0.0, 128
    %3317 = vxpose.xlu0.b32.cont [9/16] 0.0, 128
    %3318 = vxpose.xlu0.b32.cont [10/16] 0.0, 128
    %3319 = vxpose.xlu0.b32.cont [11/16] 0.0, 128
    %3320 = vxpose.xlu0.b32.cont [12/16] 0.0, 128
    %3321 = vxpose.xlu0.b32.cont [13/16] 0.0, 128
    %3322 = vxpose.xlu0.b32.cont [14/16] 0.0, 128
    %3323 = vxpose.xlu0.b32.cont [15/16] 0.0, 128
    %3324 = vxpose.xlu0.b32.end [16/16] 0.0, 128
    %v3325 = vpop.trf.xlu0
    %v3326 = vpop.trf.xlu0
    %v3327 = vpop.trf.xlu0
    %v3328 = vpop.trf.xlu0
    %v3329 = vpop.trf.xlu0
    %v3330 = vpop.trf.xlu0
    %v3331 = vpop.trf.xlu0
    %v3332 = vpop.trf.xlu0
    %v3333 = vpop.trf.xlu0
    %v3334 = vpop.trf.xlu0
    %v3335 = vpop.trf.xlu0
    %v3336 = vpop.trf.xlu0
    %v3337 = vpop.trf.xlu0
    %v3338 = vpop.trf.xlu0
    %v3339 = vpop.trf.xlu0
    %v3340 = vpop.trf.xlu0
    %vm3341 = vcmask 64512
    %3342 = vst.msk [vmem:[#allocation2] sm:$0xff] %vm3341, %v3293
    %3343 = vst.msk [vmem:[#allocation2 + $0x8] sm:$0xff] %vm3341, %v3294
    %3344 = vst.msk [vmem:[#allocation2 + $0x10] sm:$0xff] %vm3341, %v3295
    %3345 = vst.msk [vmem:[#allocation2 + $0x18] sm:$0xff] %vm3341, %v3296
    %3346 = vst.msk [vmem:[#allocation2 + $0x20] sm:$0xff] %vm3341, %v3297
    %3347 = vst.msk [vmem:[#allocation2 + $0x28] sm:$0xff] %vm3341, %v3298
    %3348 = vst.msk [vmem:[#allocation2 + $0x30] sm:$0xff] %vm3341, %v3299
    %3349 = vst.msk [vmem:[#allocation2 + $0x38] sm:$0xff] %vm3341, %v3300
    %3350 = vst.msk [vmem:[#allocation2 + $0x40] sm:$0xff] %vm3341, %v3301
    %3351 = vst.msk [vmem:[#allocation2 + $0x48] sm:$0xff] %vm3341, %v3302
    %3352 = vst.msk [vmem:[#allocation2 + $0x50] sm:$0xff] %vm3341, %v3303
    %3353 = vst.msk [vmem:[#allocation2 + $0x58] sm:$0xff] %vm3341, %v3304
    %3354 = vst.msk [vmem:[#allocation2 + $0x60] sm:$0xff] %vm3341, %v3305
    %3355 = vst.msk [vmem:[#allocation2 + $0x68] sm:$0xff] %vm3341, %v3306
    %3356 = vst.msk [vmem:[#allocation2 + $0x70] sm:$0xff] %vm3341, %v3307
    %3357 = vst.msk [vmem:[#allocation2 + $0x78] sm:$0xff] %vm3341, %v3308
    %3358 = vst.msk [vmem:[#allocation2 + $0x80] sm:$0xff] %vm3341, %v3325
    %3359 = vst.msk [vmem:[#allocation2 + $0x88] sm:$0xff] %vm3341, %v3326
    %3360 = vst.msk [vmem:[#allocation2 + $0x90] sm:$0xff] %vm3341, %v3327
    %3361 = vst.msk [vmem:[#allocation2 + $0x98] sm:$0xff] %vm3341, %v3328
    %3362 = vst.msk [vmem:[#allocation2 + $0xa0] sm:$0xff] %vm3341, %v3329
    %3363 = vst.msk [vmem:[#allocation2 + $0xa8] sm:$0xff] %vm3341, %v3330
    %3364 = vst.msk [vmem:[#allocation2 + $0xb0] sm:$0xff] %vm3341, %v3331
    %3365 = vst.msk [vmem:[#allocation2 + $0xb8] sm:$0xff] %vm3341, %v3332
    %3366 = vst.msk [vmem:[#allocation2 + $0xc0] sm:$0xff] %vm3341, %v3333
    %3367 = vst.msk [vmem:[#allocation2 + $0xc8] sm:$0xff] %vm3341, %v3334
    %3368 = vst.msk [vmem:[#allocation2 + $0xd0] sm:$0xff] %vm3341, %v3335
    %3369 = vst.msk [vmem:[#allocation2 + $0xd8] sm:$0xff] %vm3341, %v3336
    %3370 = vst.msk [vmem:[#allocation2 + $0xe0] sm:$0xff] %vm3341, %v3337
    %3371 = vst.msk [vmem:[#allocation2 + $0xe8] sm:$0xff] %vm3341, %v3338
    %3372 = vst.msk [vmem:[#allocation2 + $0xf0] sm:$0xff] %vm3341, %v3339
    %3373 = vst.msk [vmem:[#allocation2 + $0xf8] sm:$0xff] %vm3341, %v3340
    // Predicated region
    $region30: #{tpu_custom_call.1} parent=1 // pred_check
      _
    $region31: #{tpu_custom_call.1} parent=1 // pred_check_branch
      %3375 = sbr.rel (0) target = $region33
    $region32: #{tpu_custom_call.1} parent=1 // pred_region
      %s3377 = ssub.s32 4096, 32
      %3378 = vsyncadd [#allocation3], %s3377
      %s3379 = sshll.u32 [#allocation2], 4
      %s3380 = int_to_ptr.vmem [resolvable:$true] %s3379
      %3385 = dma.vmem_to_hbm [thread:$0]  %s3380, 32, %s7, [#allocation3], 32, 32, 2
    $region33: #{tpu_custom_call.1} parent=1 // pred_fallthru
      _
    // Predicated region
    $region34: #{tpu_custom_call.1} parent=1 // pred_check
      _
    $region35: #{tpu_custom_call.1} parent=1 // pred_check_branch
      %3387 = sbr.rel (0) target = $region37
    $region36: #{tpu_custom_call.1} parent=1 // pred_region
      %3388 = dma.done [#allocation3], 4096
    $region37: #{tpu_custom_call.1} parent=1 // pred_fallthru
      _
    %3389 = vsyncpa [#allocation3], 1

</llo_original>
